<compile_context>
chip_gen: v7x
topology: tpu7x:2x2x1
jax: 0.10.0
libtpu: 0.0.40
codegen_flags: <defaults>
</compile_context>

<pallas_src>
import functools

import jax
import jax.numpy as jnp
from jax.experimental import pallas as pl
from jax.experimental.pallas import tpu as pltpu


# ----------------------------------------------------------------------------
# Kernel 1: fused Q/K/V projection (three 1x1 convs as matmuls) + bias
# ----------------------------------------------------------------------------
def _qkv_proj_kernel(x_ref, wq_ref, wk_ref, wv_ref, bq_ref, bk_ref, bv_ref,
                     q_ref, k_ref, v_ref):
    x = x_ref[...]                                    # (TM, C)
    q_ref[...] = (jnp.dot(x, wq_ref[...], preferred_element_type=jnp.float32)
                  + bq_ref[...])
    k_ref[...] = (jnp.dot(x, wk_ref[...], preferred_element_type=jnp.float32)
                  + bk_ref[...])
    v_ref[...] = (jnp.dot(x, wv_ref[...], preferred_element_type=jnp.float32)
                  + bv_ref[...])


def qkv_projection(x2, wq, wk, wv, bq, bk, bv, *, tm=256):
    """x2: (M, C) channel-last activations.  Returns Q (M,Cq), K (M,Cq), V (M,C)."""
    M, C = x2.shape
    Cq = wq.shape[1]
    Mp = (-(-M // tm)) * tm                           # pad rows to a tile multiple
    if Mp != M:
        x2 = jnp.pad(x2, ((0, Mp - M), (0, 0)))

    row_spec = lambda last: pl.BlockSpec((tm, last), lambda i: (i, 0))
    full_spec = lambda shape: pl.BlockSpec(shape, lambda i: (0, 0))

    q, k, v = pl.pallas_call(
        _qkv_proj_kernel,
        out_shape=(jax.ShapeDtypeStruct((Mp, Cq), jnp.float32),
                   jax.ShapeDtypeStruct((Mp, Cq), jnp.float32),
                   jax.ShapeDtypeStruct((Mp, C), jnp.float32)),
        grid=(Mp // tm,),
        in_specs=[row_spec(C),
                  full_spec((C, Cq)), full_spec((C, Cq)), full_spec((C, C)),
                  full_spec((1, Cq)), full_spec((1, Cq)), full_spec((1, C))],
        out_specs=(row_spec(Cq), row_spec(Cq), row_spec(C)),
        compiler_params=pltpu.CompilerParams(dimension_semantics=("parallel",)),
    )(x2, wq, wk, wv,
      bq.reshape(1, Cq), bk.reshape(1, Cq), bv.reshape(1, C))
    return q[:M], k[:M], v[:M]


# ----------------------------------------------------------------------------
# Kernel 2: flash-style attention + fused (gamma * out + x) residual epilogue
# ----------------------------------------------------------------------------
def _attn_kernel(q_ref, k_ref, v_ref, x_ref, g_ref, o_ref, m_sc, l_sc, acc_sc):
    ki = pl.program_id(2)

    @pl.when(ki == 0)
    def _():
        m_sc[...] = jnp.full_like(m_sc, -jnp.inf)
        l_sc[...] = jnp.zeros_like(l_sc)
        acc_sc[...] = jnp.zeros_like(acc_sc)

    q = q_ref[...]                                    # (TQ, Cq)
    k = k_ref[...]                                    # (TK, Cq)
    # energy[i, j] = <q_i, k_j>   (SBA_Block has no 1/sqrt(d) scaling)
    s = jax.lax.dot_general(q, k, (((1,), (1,)), ((), ())),
                            preferred_element_type=jnp.float32)   # (TQ, TK)

    m_prev = m_sc[...]
    m_new = jnp.maximum(m_prev, s.max(axis=-1, keepdims=True))
    alpha = jnp.exp(m_prev - m_new)
    p = jnp.exp(s - m_new)
    l_sc[...] = alpha * l_sc[...] + p.sum(axis=-1, keepdims=True)
    acc_sc[...] = alpha * acc_sc[...] + jnp.dot(
        p, v_ref[...], preferred_element_type=jnp.float32)
    m_sc[...] = m_new

    @pl.when(ki == pl.num_programs(2) - 1)
    def _():
        out = acc_sc[...] / l_sc[...]                  # softmax normalisation
        g = g_ref[...]                                 # (1, 1) broadcast
        o_ref[...] = (g * out + x_ref[...]).astype(o_ref.dtype)


def _pick_tile(n, cap=512):
    for t in (512, 256, 128, 64, 32, 16, 8):
        if t <= cap and n % t == 0:
            return t
    return n


def attention_residual(q, k, v, x_cl, gamma):
    """q,k: (B,N,Cq)  v,x_cl: (B,N,C)  ->  gamma * softmax(qk^T) v + x_cl."""
    B, N, Cq = q.shape
    C = v.shape[-1]
    tq = _pick_tile(N)
    tk = _pick_tile(N)
    g2 = jnp.asarray(gamma, jnp.float32).reshape(1, 1)

    return pl.pallas_call(
        _attn_kernel,
        out_shape=jax.ShapeDtypeStruct((B, N, C), jnp.float32),
        grid=(B, N // tq, N // tk),
        in_specs=[
            pl.BlockSpec((None, tq, Cq), lambda b, qi, ki: (b, qi, 0)),  # Q
            pl.BlockSpec((None, tk, Cq), lambda b, qi, ki: (b, ki, 0)),  # K
            pl.BlockSpec((None, tk, C),  lambda b, qi, ki: (b, ki, 0)),  # V
            pl.BlockSpec((None, tq, C),  lambda b, qi, ki: (b, qi, 0)),  # x (residual)
            pl.BlockSpec((1, 1),         lambda b, qi, ki: (0, 0)),      # gamma
        ],
        out_specs=pl.BlockSpec((None, tq, C), lambda b, qi, ki: (b, qi, 0)),
        scratch_shapes=[
            pltpu.VMEM((tq, 1), jnp.float32),   # running max
            pltpu.VMEM((tq, 1), jnp.float32),   # running denom
            pltpu.VMEM((tq, C), jnp.float32),   # output accumulator
        ],
        compiler_params=pltpu.CompilerParams(
            dimension_semantics=("parallel", "parallel", "arbitrary")),
    )(q, k, v, x_cl, g2)


# ----------------------------------------------------------------------------
# SBA_Block forward (NCHW in / NCHW out, matching the PyTorch module)
# ----------------------------------------------------------------------------
def sba_block_forward(params, x_nchw):
    B, C, W, H = x_nchw.shape
    N = W * H
    x_cl = jnp.transpose(x_nchw, (0, 2, 3, 1)).reshape(B, N, C)   # channel-last
    Cq = params["wq"].shape[1]

    q, k, v = qkv_projection(x_cl.reshape(B * N, C),
                             params["wq"], params["wk"], params["wv"],
                             params["bq"], params["bk"], params["bv"])
    q = q.reshape(B, N, Cq)
    k = k.reshape(B, N, Cq)
    v = v.reshape(B, N, C)

    y_cl = attention_residual(q, k, v, x_cl, params["gamma"])
    return jnp.transpose(y_cl.reshape(B, W, H, C), (0, 3, 1, 2))


# ----------------------------------------------------------------------------
# Parameters (weights stored as (Cin, Cout) == PyTorch conv weight[:, :, 0, 0].T)
# ----------------------------------------------------------------------------
def build_sba_params(key, in_channel, r, gamma=0.5):
    Cq = in_channel // r
    kq, kk, kv, kbq, kbk, kbv = jax.random.split(key, 6)
    s = 0.1
    return {
        "wq": s * jax.random.normal(kq, (in_channel, Cq), jnp.float32),
        "wk": s * jax.random.normal(kk, (in_channel, Cq), jnp.float32),
        "wv": s * jax.random.normal(kv, (in_channel, in_channel), jnp.float32),
        "bq": s * jax.random.normal(kbq, (Cq,), jnp.float32),
        "bk": s * jax.random.normal(kbk, (Cq,), jnp.float32),
        "bv": s * jax.random.normal(kbv, (in_channel,), jnp.float32),
        # PyTorch initializes gamma = 0 (nn.Parameter(torch.zeros(1))).  We use
        # a non-zero value so the attention path actually affects the output.
        "gamma": jnp.float32(gamma),
    }


# ----------------------------------------------------------------------------
# Pure-JAX reference (mirrors the PyTorch forward exactly)
# ----------------------------------------------------------------------------
def sba_block_reference(params, x_nchw):
    B, C, W, H = x_nchw.shape
    N = W * H
    x_cl = jnp.transpose(x_nchw, (0, 2, 3, 1)).reshape(B, N, C)
    q = x_cl @ params["wq"] + params["bq"]
    k = x_cl @ params["wk"] + params["bk"]
    v = x_cl @ params["wv"] + params["bv"]
    energy = jnp.einsum("bnc,bmc->bnm", q, k)          # bmm(out_q, out_k)
    attn = jax.nn.softmax(energy, axis=-1)
    out = jnp.einsum("bnm,bmc->bnc", attn, v)          # bmm(V, attn^T) (chan-last)
    y_cl = params["gamma"] * out + x_cl
    return jnp.transpose(y_cl.reshape(B, W, H, C), (0, 3, 1, 2))


# ----------------------------------------------------------------------------
if __name__ == "__main__":
    key = jax.random.PRNGKey(0)
    kp, kx = jax.random.split(key)

    B, C, W, H, r = 2, 32, 16, 16, 4          # small shapes consistent with module
    params = build_sba_params(kp, C, r, gamma=0.5)
    x = jax.random.normal(kx, (B, C, W, H), jnp.float32)

    fwd = jax.jit(functools.partial(sba_block_forward, params))
    y = fwd(x)
    jax.block_until_ready(y)

    assert y.shape == (B, C, W, H), y.shape
    assert bool(jnp.all(jnp.isfinite(y)))

    y_ref = sba_block_reference(params, x)
    max_err = float(jnp.max(jnp.abs(y - y_ref)))
    assert bool(jnp.allclose(y, y_ref, atol=1e-3, rtol=1e-3)), max_err
    print("KERNEL_OK")
</pallas_src>

<mosaic_0001>
module attributes {stable_mosaic.version = 11 : i64} {
  func.func @_qkv_proj_kernel(%arg0: i32, %arg1: memref<256x32xf32, #tpu.memory_space<vmem>>, %arg2: memref<32x8xf32, #tpu.memory_space<vmem>>, %arg3: memref<32x8xf32, #tpu.memory_space<vmem>>, %arg4: memref<32x32xf32, #tpu.memory_space<vmem>>, %arg5: memref<1x8xf32, #tpu.memory_space<vmem>>, %arg6: memref<1x8xf32, #tpu.memory_space<vmem>>, %arg7: memref<1x32xf32, #tpu.memory_space<vmem>>, %arg8: memref<256x8xf32, #tpu.memory_space<vmem>>, %arg9: memref<256x8xf32, #tpu.memory_space<vmem>>, %arg10: memref<256x32xf32, #tpu.memory_space<vmem>>) attributes {dimension_semantics = [#tpu.dimension_semantics<parallel>], iteration_bounds = array<i64: 2>, scalar_prefetch = 0 : i64, scratch_operands = 0 : i64, tpu.core_type = #tpu.core_type<tc>, window_params = [{transform_indices = @transform_0, window_bounds = array<i64: 256, 32>}, {pipeline_mode = #tpu.pipeline_mode<synchronous>, transform_indices = @transform_1, window_bounds = array<i64: 32, 8>}, {pipeline_mode = #tpu.pipeline_mode<synchronous>, transform_indices = @transform_2, window_bounds = array<i64: 32, 8>}, {pipeline_mode = #tpu.pipeline_mode<synchronous>, transform_indices = @transform_3, window_bounds = array<i64: 32, 32>}, {pipeline_mode = #tpu.pipeline_mode<synchronous>, transform_indices = @transform_4, window_bounds = array<i64: 1, 8>}, {pipeline_mode = #tpu.pipeline_mode<synchronous>, transform_indices = @transform_5, window_bounds = array<i64: 1, 8>}, {pipeline_mode = #tpu.pipeline_mode<synchronous>, transform_indices = @transform_6, window_bounds = array<i64: 1, 32>}, {transform_indices = @transform_7, window_bounds = array<i64: 256, 8>}, {transform_indices = @transform_8, window_bounds = array<i64: 256, 8>}, {transform_indices = @transform_9, window_bounds = array<i64: 256, 32>}]} {
    %c0 = arith.constant 0 : index
    %c0_0 = arith.constant 0 : index
    %0 = vector.load %arg1[%c0, %c0_0] : memref<256x32xf32, #tpu.memory_space<vmem>>, vector<256x32xf32>
    %c0_1 = arith.constant 0 : index
    %c0_2 = arith.constant 0 : index
    %1 = vector.load %arg2[%c0_1, %c0_2] : memref<32x8xf32, #tpu.memory_space<vmem>>, vector<32x8xf32>
    %cst = arith.constant dense<0.000000e+00> : vector<256x8xf32>
    %2 = tpu.matmul %0, %1, %cst {dimension_numbers = #tpu.dot_dimension_numbers<[1], [0], [0], [1], [0, 0, 1, 1], [], []>} : vector<256x32xf32>, vector<32x8xf32>, vector<256x8xf32> -> vector<256x8xf32>
    %c0_3 = arith.constant 0 : index
    %c0_4 = arith.constant 0 : index
    %3 = vector.load %arg5[%c0_3, %c0_4] : memref<1x8xf32, #tpu.memory_space<vmem>>, vector<1x8xf32>
    %4 = vector.broadcast %3 : vector<1x8xf32> to vector<256x8xf32>
    %5 = arith.addf %2, %4 : vector<256x8xf32>
    %c0_5 = arith.constant 0 : index
    %c0_6 = arith.constant 0 : index
    %6 = vector.load %arg8[%c0_5, %c0_6] : memref<256x8xf32, #tpu.memory_space<vmem>>, vector<256x8xf32>
    tpu.vector_store %arg8[%c0_5, %c0_6], %5 {strides = array<i32>} : memref<256x8xf32, #tpu.memory_space<vmem>>, vector<256x8xf32>,
    %c0_7 = arith.constant 0 : index
    %c0_8 = arith.constant 0 : index
    %7 = vector.load %arg3[%c0_7, %c0_8] : memref<32x8xf32, #tpu.memory_space<vmem>>, vector<32x8xf32>
    %cst_9 = arith.constant dense<0.000000e+00> : vector<256x8xf32>
    %8 = tpu.matmul %0, %7, %cst_9 {dimension_numbers = #tpu.dot_dimension_numbers<[1], [0], [0], [1], [0, 0, 1, 1], [], []>} : vector<256x32xf32>, vector<32x8xf32>, vector<256x8xf32> -> vector<256x8xf32>
    %c0_10 = arith.constant 0 : index
    %c0_11 = arith.constant 0 : index
    %9 = vector.load %arg6[%c0_10, %c0_11] : memref<1x8xf32, #tpu.memory_space<vmem>>, vector<1x8xf32>
    %10 = vector.broadcast %9 : vector<1x8xf32> to vector<256x8xf32>
    %11 = arith.addf %8, %10 : vector<256x8xf32>
    %c0_12 = arith.constant 0 : index
    %c0_13 = arith.constant 0 : index
    %12 = vector.load %arg9[%c0_12, %c0_13] : memref<256x8xf32, #tpu.memory_space<vmem>>, vector<256x8xf32>
    tpu.vector_store %arg9[%c0_12, %c0_13], %11 {strides = array<i32>} : memref<256x8xf32, #tpu.memory_space<vmem>>, vector<256x8xf32>,
    %c0_14 = arith.constant 0 : index
    %c0_15 = arith.constant 0 : index
    %13 = vector.load %arg4[%c0_14, %c0_15] : memref<32x32xf32, #tpu.memory_space<vmem>>, vector<32x32xf32>
    %cst_16 = arith.constant dense<0.000000e+00> : vector<256x32xf32>
    %14 = tpu.matmul %0, %13, %cst_16 {dimension_numbers = #tpu.dot_dimension_numbers<[1], [0], [0], [1], [0, 0, 1, 1], [], []>} : vector<256x32xf32>, vector<32x32xf32>, vector<256x32xf32> -> vector<256x32xf32>
    %c0_17 = arith.constant 0 : index
    %c0_18 = arith.constant 0 : index
    %15 = vector.load %arg7[%c0_17, %c0_18] : memref<1x32xf32, #tpu.memory_space<vmem>>, vector<1x32xf32>
    %16 = vector.broadcast %15 : vector<1x32xf32> to vector<256x32xf32>
    %17 = arith.addf %14, %16 : vector<256x32xf32>
    %c0_19 = arith.constant 0 : index
    %c0_20 = arith.constant 0 : index
    %18 = vector.load %arg10[%c0_19, %c0_20] : memref<256x32xf32, #tpu.memory_space<vmem>>, vector<256x32xf32>
    tpu.vector_store %arg10[%c0_19, %c0_20], %17 {strides = array<i32>} : memref<256x32xf32, #tpu.memory_space<vmem>>, vector<256x32xf32>,
    return
  }
  func.func @transform_0(%arg0: i32) -> (i32, i32) {
    %c0_i32 = arith.constant 0 : i32
    %c0_i32_0 = arith.constant 0 : i32
    return %arg0, %c0_i32 : i32, i32
  }
  func.func @transform_1(%arg0: i32) -> (i32, i32) {
    %c0_i32 = arith.constant 0 : i32
    %c0_i32_0 = arith.constant 0 : i32
    %c0_i32_1 = arith.constant 0 : i32
    return %c0_i32, %c0_i32_0 : i32, i32
  }
  func.func @transform_2(%arg0: i32) -> (i32, i32) {
    %c0_i32 = arith.constant 0 : i32
    %c0_i32_0 = arith.constant 0 : i32
    %c0_i32_1 = arith.constant 0 : i32
    return %c0_i32, %c0_i32_0 : i32, i32
  }
  func.func @transform_3(%arg0: i32) -> (i32, i32) {
    %c0_i32 = arith.constant 0 : i32
    %c0_i32_0 = arith.constant 0 : i32
    %c0_i32_1 = arith.constant 0 : i32
    return %c0_i32, %c0_i32_0 : i32, i32
  }
  func.func @transform_4(%arg0: i32) -> (i32, i32) {
    %c0_i32 = arith.constant 0 : i32
    %c0_i32_0 = arith.constant 0 : i32
    %c0_i32_1 = arith.constant 0 : i32
    return %c0_i32, %c0_i32_0 : i32, i32
  }
  func.func @transform_5(%arg0: i32) -> (i32, i32) {
    %c0_i32 = arith.constant 0 : i32
    %c0_i32_0 = arith.constant 0 : i32
    %c0_i32_1 = arith.constant 0 : i32
    return %c0_i32, %c0_i32_0 : i32, i32
  }
  func.func @transform_6(%arg0: i32) -> (i32, i32) {
    %c0_i32 = arith.constant 0 : i32
    %c0_i32_0 = arith.constant 0 : i32
    %c0_i32_1 = arith.constant 0 : i32
    return %c0_i32, %c0_i32_0 : i32, i32
  }
  func.func @transform_7(%arg0: i32) -> (i32, i32) {
    %c0_i32 = arith.constant 0 : i32
    %c0_i32_0 = arith.constant 0 : i32
    return %arg0, %c0_i32 : i32, i32
  }
  func.func @transform_8(%arg0: i32) -> (i32, i32) {
    %c0_i32 = arith.constant 0 : i32
    %c0_i32_0 = arith.constant 0 : i32
    return %arg0, %c0_i32 : i32, i32
  }
  func.func @transform_9(%arg0: i32) -> (i32, i32) {
    %c0_i32 = arith.constant 0 : i32
    %c0_i32_0 = arith.constant 0 : i32
    return %arg0, %c0_i32 : i32, i32
  }
}

module attributes {stable_mosaic.version = 11 : i64} {
  func.func @_attn_kernel(%arg0: i32, %arg1: i32, %arg2: i32, %arg3: memref<1x256x8xf32, #tpu.memory_space<vmem>>, %arg4: memref<1x256x8xf32, #tpu.memory_space<vmem>>, %arg5: memref<1x256x32xf32, #tpu.memory_space<vmem>>, %arg6: memref<1x256x32xf32, #tpu.memory_space<vmem>>, %arg7: memref<1x1xf32, #tpu.memory_space<vmem>>, %arg8: memref<1x256x32xf32, #tpu.memory_space<vmem>>, %arg9: memref<256x1xf32, #tpu.memory_space<vmem>>, %arg10: memref<256x1xf32, #tpu.memory_space<vmem>>, %arg11: memref<256x32xf32, #tpu.memory_space<vmem>>) attributes {dimension_semantics = [#tpu.dimension_semantics<parallel>, #tpu.dimension_semantics<parallel>, #tpu.dimension_semantics<arbitrary>], iteration_bounds = array<i64: 2, 1, 1>, scalar_prefetch = 0 : i64, scratch_operands = 3 : i64, tpu.core_type = #tpu.core_type<tc>, window_params = [{transform_indices = @transform_0, window_bounds = array<i64: 1, 256, 8>}, {transform_indices = @transform_1, window_bounds = array<i64: 1, 256, 8>}, {transform_indices = @transform_2, window_bounds = array<i64: 1, 256, 32>}, {transform_indices = @transform_3, window_bounds = array<i64: 1, 256, 32>}, {pipeline_mode = #tpu.pipeline_mode<synchronous>, transform_indices = @transform_4, window_bounds = array<i64: 1, 1>}, {transform_indices = @transform_5, window_bounds = array<i64: 1, 256, 32>}]} {
    %c0_i32 = arith.constant 0 : i32
    %0 = arith.cmpi eq, %arg2, %c0_i32 : i32
    %1 = arith.extui %0 : i1 to i32
    %c0_i32_0 = arith.constant 0 : i32
    %2 = arith.cmpi ne, %1, %c0_i32_0 : i32
    scf.if %2 {
      %cst_26 = arith.constant 0xFF800000 : f32
      %35 = vector.broadcast %cst_26 : f32 to vector<256x1xf32>
      %c0_27 = arith.constant 0 : index
      %c0_28 = arith.constant 0 : index
      %36 = vector.load %arg9[%c0_27, %c0_28] : memref<256x1xf32, #tpu.memory_space<vmem>>, vector<256x1xf32>
      tpu.vector_store %arg9[%c0_27, %c0_28], %35 {strides = array<i32>} : memref<256x1xf32, #tpu.memory_space<vmem>>, vector<256x1xf32>,
      %cst_29 = arith.constant 0.000000e+00 : f32
      %37 = vector.broadcast %cst_29 : f32 to vector<256x1xf32>
      %c0_30 = arith.constant 0 : index
      %c0_31 = arith.constant 0 : index
      %38 = vector.load %arg10[%c0_30, %c0_31] : memref<256x1xf32, #tpu.memory_space<vmem>>, vector<256x1xf32>
      tpu.vector_store %arg10[%c0_30, %c0_31], %37 {strides = array<i32>} : memref<256x1xf32, #tpu.memory_space<vmem>>, vector<256x1xf32>,
      %cst_32 = arith.constant 0.000000e+00 : f32
      %39 = vector.broadcast %cst_32 : f32 to vector<256x32xf32>
      %c0_33 = arith.constant 0 : index
      %c0_34 = arith.constant 0 : index
      %40 = vector.load %arg11[%c0_33, %c0_34] : memref<256x32xf32, #tpu.memory_space<vmem>>, vector<256x32xf32>
      tpu.vector_store %arg11[%c0_33, %c0_34], %39 {strides = array<i32>} : memref<256x32xf32, #tpu.memory_space<vmem>>, vector<256x32xf32>,
    } else {
    }
    %c0 = arith.constant 0 : index
    %c0_1 = arith.constant 0 : index
    %c0_2 = arith.constant 0 : index
    %3 = vector.load %arg3[%c0, %c0_1, %c0_2] : memref<1x256x8xf32, #tpu.memory_space<vmem>>, vector<1x256x8xf32>
    %4 = vector.shape_cast %3 : vector<1x256x8xf32> to vector<256x8xf32>
    %c0_3 = arith.constant 0 : index
    %c0_4 = arith.constant 0 : index
    %c0_5 = arith.constant 0 : index
    %5 = vector.load %arg4[%c0_3, %c0_4, %c0_5] : memref<1x256x8xf32, #tpu.memory_space<vmem>>, vector<1x256x8xf32>
    %6 = vector.shape_cast %5 : vector<1x256x8xf32> to vector<256x8xf32>
    %cst = arith.constant dense<0.000000e+00> : vector<256x256xf32>
    %7 = tpu.matmul %4, %6, %cst {dimension_numbers = #tpu.dot_dimension_numbers<[1], [1], [0], [0], [0, 0, 1, 0], [], []>} : vector<256x8xf32>, vector<256x8xf32>, vector<256x256xf32> -> vector<256x256xf32>
    %c0_6 = arith.constant 0 : index
    %c0_7 = arith.constant 0 : index
    %8 = vector.load %arg9[%c0_6, %c0_7] : memref<256x1xf32, #tpu.memory_space<vmem>>, vector<256x1xf32>
    %cst_8 = arith.constant dense<0xFF800000> : vector<256xf32>
    %9 = vector.multi_reduction <maximumf>, %7, %cst_8 [1] : vector<256x256xf32> to vector<256xf32>
    %10 = vector.shape_cast %9 : vector<256xf32> to vector<256x1xf32>
    %11 = arith.maximumf %8, %10 : vector<256x1xf32>
    %12 = arith.subf %8, %11 : vector<256x1xf32>
    %13 = math.exp %12 : vector<256x1xf32>
    %14 = vector.broadcast %11 : vector<256x1xf32> to vector<256x256xf32>
    %15 = arith.subf %7, %14 : vector<256x256xf32>
    %16 = math.exp %15 : vector<256x256xf32>
    %c0_9 = arith.constant 0 : index
    %c0_10 = arith.constant 0 : index
    %17 = vector.load %arg10[%c0_9, %c0_10] : memref<256x1xf32, #tpu.memory_space<vmem>>, vector<256x1xf32>
    %18 = arith.mulf %13, %17 : vector<256x1xf32>
    %cst_11 = arith.constant dense<0.000000e+00> : vector<256xf32>
    %19 = vector.multi_reduction <add>, %16, %cst_11 [1] : vector<256x256xf32> to vector<256xf32>
    %20 = vector.shape_cast %19 : vector<256xf32> to vector<256x1xf32>
    %21 = arith.addf %18, %20 : vector<256x1xf32>
    %c0_12 = arith.constant 0 : index
    %c0_13 = arith.constant 0 : index
    %22 = vector.load %arg10[%c0_12, %c0_13] : memref<256x1xf32, #tpu.memory_space<vmem>>, vector<256x1xf32>
    tpu.vector_store %arg10[%c0_12, %c0_13], %21 {strides = array<i32>} : memref<256x1xf32, #tpu.memory_space<vmem>>, vector<256x1xf32>,
    %c0_14 = arith.constant 0 : index
    %c0_15 = arith.constant 0 : index
    %23 = vector.load %arg11[%c0_14, %c0_15] : memref<256x32xf32, #tpu.memory_space<vmem>>, vector<256x32xf32>
    %24 = vector.broadcast %13 : vector<256x1xf32> to vector<256x32xf32>
    %25 = arith.mulf %24, %23 : vector<256x32xf32>
    %c0_16 = arith.constant 0 : index
    %c0_17 = arith.constant 0 : index
    %c0_18 = arith.constant 0 : index
    %26 = vector.load %arg5[%c0_16, %c0_17, %c0_18] : memref<1x256x32xf32, #tpu.memory_space<vmem>>, vector<1x256x32xf32>
    %27 = vector.shape_cast %26 : vector<1x256x32xf32> to vector<256x32xf32>
    %cst_19 = arith.constant dense<0.000000e+00> : vector<256x32xf32>
    %28 = tpu.matmul %16, %27, %cst_19 {dimension_numbers = #tpu.dot_dimension_numbers<[1], [0], [0], [1], [0, 0, 1, 1], [], []>} : vector<256x256xf32>, vector<256x32xf32>, vector<256x32xf32> -> vector<256x32xf32>
    %29 = arith.addf %25, %28 : vector<256x32xf32>
    %c0_20 = arith.constant 0 : index
    %c0_21 = arith.constant 0 : index
    %30 = vector.load %arg11[%c0_20, %c0_21] : memref<256x32xf32, #tpu.memory_space<vmem>>, vector<256x32xf32>
    tpu.vector_store %arg11[%c0_20, %c0_21], %29 {strides = array<i32>} : memref<256x32xf32, #tpu.memory_space<vmem>>, vector<256x32xf32>,
    %c0_22 = arith.constant 0 : index
    %c0_23 = arith.constant 0 : index
    %31 = vector.load %arg9[%c0_22, %c0_23] : memref<256x1xf32, #tpu.memory_space<vmem>>, vector<256x1xf32>
    tpu.vector_store %arg9[%c0_22, %c0_23], %11 {strides = array<i32>} : memref<256x1xf32, #tpu.memory_space<vmem>>, vector<256x1xf32>,
    %c0_i32_24 = arith.constant 0 : i32
    %32 = arith.cmpi eq, %arg2, %c0_i32_24 : i32
    %33 = arith.extui %32 : i1 to i32
    %c0_i32_25 = arith.constant 0 : i32
    %34 = arith.cmpi ne, %33, %c0_i32_25 : i32
    scf.if %34 {
      %c0_26 = arith.constant 0 : index
      %c0_27 = arith.constant 0 : index
      %35 = vector.load %arg11[%c0_26, %c0_27] : memref<256x32xf32, #tpu.memory_space<vmem>>, vector<256x32xf32>
      %c0_28 = arith.constant 0 : index
      %c0_29 = arith.constant 0 : index
      %36 = vector.load %arg10[%c0_28, %c0_29] : memref<256x1xf32, #tpu.memory_space<vmem>>, vector<256x1xf32>
      %37 = vector.broadcast %36 : vector<256x1xf32> to vector<256x32xf32>
      %38 = arith.divf %35, %37 : vector<256x32xf32>
      %c0_30 = arith.constant 0 : index
      %c0_31 = arith.constant 0 : index
      %39 = vector.load %arg7[%c0_30, %c0_31] : memref<1x1xf32, #tpu.memory_space<vmem>>, vector<1x1xf32>
      %40 = vector.broadcast %39 : vector<1x1xf32> to vector<256x32xf32>
      %41 = arith.mulf %40, %38 : vector<256x32xf32>
      %c0_32 = arith.constant 0 : index
      %c0_33 = arith.constant 0 : index
      %c0_34 = arith.constant 0 : index
      %42 = vector.load %arg6[%c0_32, %c0_33, %c0_34] : memref<1x256x32xf32, #tpu.memory_space<vmem>>, vector<1x256x32xf32>
      %43 = vector.shape_cast %42 : vector<1x256x32xf32> to vector<256x32xf32>
      %44 = arith.addf %41, %43 : vector<256x32xf32>
      %c0_35 = arith.constant 0 : index
      %c0_36 = arith.constant 0 : index
      %c0_37 = arith.constant 0 : index
      %45 = vector.load %arg8[%c0_35, %c0_36, %c0_37] : memref<1x256x32xf32, #tpu.memory_space<vmem>>, vector<1x256x32xf32>
      %46 = vector.shape_cast %45 : vector<1x256x32xf32> to vector<256x32xf32>
      %47 = vector.shape_cast %44 : vector<256x32xf32> to vector<1x256x32xf32>
      tpu.vector_store %arg8[%c0_35, %c0_36, %c0_37], %47 {strides = array<i32>} : memref<1x256x32xf32, #tpu.memory_space<vmem>>, vector<1x256x32xf32>,
    } else {
    }
    return
  }
  func.func @transform_0(%arg0: i32, %arg1: i32, %arg2: i32) -> (i32, i32, i32) {
    %c0_i32 = arith.constant 0 : i32
    %c0_i32_0 = arith.constant 0 : i32
    return %arg0, %arg1, %c0_i32 : i32, i32, i32
  }
  func.func @transform_1(%arg0: i32, %arg1: i32, %arg2: i32) -> (i32, i32, i32) {
    %c0_i32 = arith.constant 0 : i32
    %c0_i32_0 = arith.constant 0 : i32
    return %arg0, %arg2, %c0_i32 : i32, i32, i32
  }
  func.func @transform_2(%arg0: i32, %arg1: i32, %arg2: i32) -> (i32, i32, i32) {
    %c0_i32 = arith.constant 0 : i32
    %c0_i32_0 = arith.constant 0 : i32
    return %arg0, %arg2, %c0_i32 : i32, i32, i32
  }
  func.func @transform_3(%arg0: i32, %arg1: i32, %arg2: i32) -> (i32, i32, i32) {
    %c0_i32 = arith.constant 0 : i32
    %c0_i32_0 = arith.constant 0 : i32
    return %arg0, %arg1, %c0_i32 : i32, i32, i32
  }
  func.func @transform_4(%arg0: i32, %arg1: i32, %arg2: i32) -> (i32, i32) {
    %c0_i32 = arith.constant 0 : i32
    %c0_i32_0 = arith.constant 0 : i32
    %c0_i32_1 = arith.constant 0 : i32
    return %c0_i32, %c0_i32_0 : i32, i32
  }
  func.func @transform_5(%arg0: i32, %arg1: i32, %arg2: i32) -> (i32, i32, i32) {
    %c0_i32 = arith.constant 0 : i32
    %c0_i32_0 = arith.constant 0 : i32
    return %arg0, %arg1, %c0_i32 : i32, i32, i32
  }
}

</mosaic_0001>

<llo_original>
// kernel: sba_block_forward.2
$region0: #{sba_block_forward.2}
  #allocation0 [shape = 'u32[]', space=smem, size = 0x4, offset = 0x4, fixed_abs, tag = 'smem constant byte address 0x4 - core index']
  #allocation1 [shape = 'u32[144,128]{1,0:T(1,128)}', space=vmem, size = 0x12000, scoped, tag = 'internal scratch']
  %s0 = inlined_call_operand.hbm [shape: f32[512,32], index: 0, kind: input, shape index: {}]
  %s1 = inlined_call_operand.hbm [shape: f32[32,8], index: 1, kind: input, shape index: {}]
  %s2 = inlined_call_operand.hbm [shape: f32[32,8], index: 2, kind: input, shape index: {}]
  %s3 = inlined_call_operand.vmem [shape: f32[32,32], index: 3, kind: input, shape index: {}]
  %s4 = inlined_call_operand.vmem [shape: f32[1,8], index: 4, kind: input, shape index: {}]
  %s5 = inlined_call_operand.vmem [shape: f32[1,8], index: 5, kind: input, shape index: {}]
  %s6 = inlined_call_operand.hbm [shape: f32[1,32], index: 6, kind: input, shape index: {}]
  %s7 = inlined_call_operand.vmem [shape: f32[512,8], index: 7, kind: output, shape index: {0}]
  %s8 = inlined_call_operand.vmem [shape: f32[512,8], index: 8, kind: output, shape index: {1}]
  %s9 = inlined_call_operand.vmem [shape: f32[512,32], index: 9, kind: output, shape index: {2}]
  %10 = xla_tuple %s7, %s8, %s9
  %s11 = sld [smem:[#allocation0]]
  $region93: #{sba_block_forward.2} parent=0
    _
  %s13 = ssub.s32 1, %s11
  %s14 = scalar_select 0, %s13, %s11
  $region1: #{sba_block_forward.2} parent=0
    #allocation2 [shape = 'u8[262144]{0}', space=vmem, size = 0x40000, scoped, tag = 'input window, operand 0']
    #allocation3 [shape = 's32[2]{0}', space=sflag, size = 0x8, scoped, tag = 'scoped memory for sba_block_forward.2']
    #allocation4 [shape = 'u8[16384]{0}', space=vmem, size = 0x4000, scoped, tag = 'input window, operand 1, single buffered']
    #allocation5 [shape = 's32[1]{0}', space=sflag, size = 0x4, scoped, tag = 'scoped memory for sba_block_forward.2']
    #allocation6 [shape = 'u8[16384]{0}', space=vmem, size = 0x4000, scoped, tag = 'input window, operand 2, single buffered']
    #allocation7 [shape = 'u8[512]{0}', space=vmem, size = 0x400, scoped, tag = 'input window, operand 6, single buffered']
    #allocation8 [shape = 's32[1]{0}', space=sflag, size = 0x4, scoped, tag = 'scoped memory for sba_block_forward.2']
    %15 = vsyncpa [#allocation3], 0
    %s16 = scalar_lea.sflag [#allocation3], 1
    %17 = vsyncpa %s16, 0
    %18 = vsyncpa [#allocation5], 0
    %19 = vsyncpa [#allocation8], 0
    loop: start=0, step=1, limit=4
    $region2: #{sba_block_forward.2} parent=1 // loop_pre_header
      _
    $region3: #{sba_block_forward.2} parent=1 // loop_header
      %s21 = sphi 0, %s25
      %p22 = scmp.ge.s32.totalorder %s21, 4
      %s31 = sphi 0, %s33
      %s34 = sphi 0, %s31
      %s35 = sphi 0, %s34
      %s51 = sphi 0, %s35
      %s55 = sphi 0, %s55
      %s57 = sphi 0, %s55
      %s58 = sphi 0, %s57
      %s72 = sphi 0, %s58
      %s76 = sphi 0, %s76
      %s78 = sphi 0, %s76
      %s79 = sphi 0, %s78
      %s93 = sphi 0, %s79
      %s97 = sphi 0, %s97
      %s99 = sphi 0, %s97
      %s100 = sphi 0, %s99
      %s114 = sphi 0, %s100
      %s118 = sphi 0, %s118
      %s120 = sphi 0, %s118
      %s121 = sphi 0, %s120
      %s135 = sphi 0, %s121
      %s139 = sphi 0, %s139
      %s141 = sphi 0, %s139
      %s142 = sphi 0, %s141
      %s156 = sphi 0, %s142
      %s160 = sphi 0, %s160
      %s162 = sphi 0, %s160
      %s163 = sphi 0, %s162
      %s177 = sphi 0, %s163
      %s183 = sphi 0, %s185
      %s186 = sphi 0, %s183
      %s187 = sphi 0, %s186
      %s203 = sphi 0, %s187
      %s209 = sphi 0, %s211
      %s212 = sphi 0, %s209
      %s213 = sphi 0, %s212
      %s229 = sphi 0, %s213
      %s235 = sphi 0, %s237
      %s238 = sphi 0, %s235
      %s239 = sphi 0, %s238
      %s255 = sphi 0, %s239
    $region4: #{sba_block_forward.2} parent=1 // loop_header_branch
      %24 = sbr.rel (%p22) target = $region8
    $region5: #{sba_block_forward.2} parent=1 // loop_body
      %s26 = ssub.s32 %s21, 1
      %s27 = ssub.s32 %s21, 2
      %s28 = sadd.s32 %s21, 1
      %s29 = ssub.s32 %s21, %s28
      %p30 = scmp.eq.s32.totalorder %s29, 0
      %s32 = sadd.s32 %s31, 1
      %s33 = scalar_select %p30, %s31, %s32
      %p36 = pneg %p30
      %p37 = scmp.eq.s32.totalorder %s21, 1
      %p38 = por %p36, %p37
      %p39 = scmp.ne.s32.totalorder %s31, %s34
      %p40 = scmp.eq.s32.totalorder %s21, 0
      %p41 = por %p39, %p40
      %p42 = scmp.ne.s32.totalorder %s31, %s34
      %p43 = scmp.eq.s32.totalorder %s26, 1
      %p44 = por %p42, %p43
      %p45 = scmp.ne.s32.totalorder %s34, %s35
      %p46 = scmp.eq.s32.totalorder %s26, 0
      %p47 = por %p45, %p46
      %p48 = scmp.ne.s32.totalorder %s34, %s35
      %p49 = scmp.eq.s32.totalorder %s27, 1
      %p50 = por %p48, %p49
      %p52 = scmp.ne.s32.totalorder %s35, %s51
      %p53 = scmp.eq.s32.totalorder %s27, 0
      %p54 = por %p52, %p53
      %s56 = sadd.s32 %s55, 1
      %p59 = scmp.eq.s32.totalorder %s21, 1
      %p60 = scmp.ne.s32.totalorder %s55, %s57
      %p61 = scmp.eq.s32.totalorder %s21, 0
      %p62 = por %p60, %p61
      %p63 = scmp.ne.s32.totalorder %s55, %s57
      %p64 = scmp.eq.s32.totalorder %s26, 1
      %p65 = por %p63, %p64
      %p66 = scmp.ne.s32.totalorder %s57, %s58
      %p67 = scmp.eq.s32.totalorder %s26, 0
      %p68 = por %p66, %p67
      %p69 = scmp.ne.s32.totalorder %s57, %s58
      %p70 = scmp.eq.s32.totalorder %s27, 1
      %p71 = por %p69, %p70
      %p73 = scmp.ne.s32.totalorder %s58, %s72
      %p74 = scmp.eq.s32.totalorder %s27, 0
      %p75 = por %p73, %p74
      %s77 = sadd.s32 %s76, 1
      %p80 = scmp.eq.s32.totalorder %s21, 1
      %p81 = scmp.ne.s32.totalorder %s76, %s78
      %p82 = scmp.eq.s32.totalorder %s21, 0
      %p83 = por %p81, %p82
      %p84 = scmp.ne.s32.totalorder %s76, %s78
      %p85 = scmp.eq.s32.totalorder %s26, 1
      %p86 = por %p84, %p85
      %p87 = scmp.ne.s32.totalorder %s78, %s79
      %p88 = scmp.eq.s32.totalorder %s26, 0
      %p89 = por %p87, %p88
      %p90 = scmp.ne.s32.totalorder %s78, %s79
      %p91 = scmp.eq.s32.totalorder %s27, 1
      %p92 = por %p90, %p91
      %p94 = scmp.ne.s32.totalorder %s79, %s93
      %p95 = scmp.eq.s32.totalorder %s27, 0
      %p96 = por %p94, %p95
      %s98 = sadd.s32 %s97, 1
      %p101 = scmp.eq.s32.totalorder %s21, 1
      %p102 = scmp.ne.s32.totalorder %s97, %s99
      %p103 = scmp.eq.s32.totalorder %s21, 0
      %p104 = por %p102, %p103
      %p105 = scmp.ne.s32.totalorder %s97, %s99
      %p106 = scmp.eq.s32.totalorder %s26, 1
      %p107 = por %p105, %p106
      %p108 = scmp.ne.s32.totalorder %s99, %s100
      %p109 = scmp.eq.s32.totalorder %s26, 0
      %p110 = por %p108, %p109
      %p111 = scmp.ne.s32.totalorder %s99, %s100
      %p112 = scmp.eq.s32.totalorder %s27, 1
      %p113 = por %p111, %p112
      %p115 = scmp.ne.s32.totalorder %s100, %s114
      %p116 = scmp.eq.s32.totalorder %s27, 0
      %p117 = por %p115, %p116
      %s119 = sadd.s32 %s118, 1
      %p122 = scmp.eq.s32.totalorder %s21, 1
      %p123 = scmp.ne.s32.totalorder %s118, %s120
      %p124 = scmp.eq.s32.totalorder %s21, 0
      %p125 = por %p123, %p124
      %p126 = scmp.ne.s32.totalorder %s118, %s120
      %p127 = scmp.eq.s32.totalorder %s26, 1
      %p128 = por %p126, %p127
      %p129 = scmp.ne.s32.totalorder %s120, %s121
      %p130 = scmp.eq.s32.totalorder %s26, 0
      %p131 = por %p129, %p130
      %p132 = scmp.ne.s32.totalorder %s120, %s121
      %p133 = scmp.eq.s32.totalorder %s27, 1
      %p134 = por %p132, %p133
      %p136 = scmp.ne.s32.totalorder %s121, %s135
      %p137 = scmp.eq.s32.totalorder %s27, 0
      %p138 = por %p136, %p137
      %s140 = sadd.s32 %s139, 1
      %p143 = scmp.eq.s32.totalorder %s21, 1
      %p144 = scmp.ne.s32.totalorder %s139, %s141
      %p145 = scmp.eq.s32.totalorder %s21, 0
      %p146 = por %p144, %p145
      %p147 = scmp.ne.s32.totalorder %s139, %s141
      %p148 = scmp.eq.s32.totalorder %s26, 1
      %p149 = por %p147, %p148
      %p150 = scmp.ne.s32.totalorder %s141, %s142
      %p151 = scmp.eq.s32.totalorder %s26, 0
      %p152 = por %p150, %p151
      %p153 = scmp.ne.s32.totalorder %s141, %s142
      %p154 = scmp.eq.s32.totalorder %s27, 1
      %p155 = por %p153, %p154
      %p157 = scmp.ne.s32.totalorder %s142, %s156
      %p158 = scmp.eq.s32.totalorder %s27, 0
      %p159 = por %p157, %p158
      %s161 = sadd.s32 %s160, 1
      %p164 = scmp.eq.s32.totalorder %s21, 1
      %p165 = scmp.ne.s32.totalorder %s160, %s162
      %p166 = scmp.eq.s32.totalorder %s21, 0
      %p167 = por %p165, %p166
      %p168 = scmp.ne.s32.totalorder %s160, %s162
      %p169 = scmp.eq.s32.totalorder %s26, 1
      %p170 = por %p168, %p169
      %p171 = scmp.ne.s32.totalorder %s162, %s163
      %p172 = scmp.eq.s32.totalorder %s26, 0
      %p173 = por %p171, %p172
      %p174 = scmp.ne.s32.totalorder %s162, %s163
      %p175 = scmp.eq.s32.totalorder %s27, 1
      %p176 = por %p174, %p175
      %p178 = scmp.ne.s32.totalorder %s163, %s177
      %p179 = scmp.eq.s32.totalorder %s27, 0
      %p180 = por %p178, %p179
      %s181 = ssub.s32 %s21, %s28
      %p182 = scmp.eq.s32.totalorder %s181, 0
      %s184 = sadd.s32 %s183, 1
      %s185 = scalar_select %p182, %s183, %s184
      %p188 = pneg %p182
      %p189 = scmp.eq.s32.totalorder %s21, 1
      %p190 = por %p188, %p189
      %p191 = scmp.ne.s32.totalorder %s183, %s186
      %p192 = scmp.eq.s32.totalorder %s21, 0
      %p193 = por %p191, %p192
      %p194 = scmp.ne.s32.totalorder %s183, %s186
      %p195 = scmp.eq.s32.totalorder %s26, 1
      %p196 = por %p194, %p195
      %p197 = scmp.ne.s32.totalorder %s186, %s187
      %p198 = scmp.eq.s32.totalorder %s26, 0
      %p199 = por %p197, %p198
      %p200 = scmp.ne.s32.totalorder %s186, %s187
      %p201 = scmp.eq.s32.totalorder %s27, 1
      %p202 = por %p200, %p201
      %p204 = scmp.ne.s32.totalorder %s187, %s203
      %p205 = scmp.eq.s32.totalorder %s27, 0
      %p206 = por %p204, %p205
      %s207 = ssub.s32 %s21, %s28
      %p208 = scmp.eq.s32.totalorder %s207, 0
      %s210 = sadd.s32 %s209, 1
      %s211 = scalar_select %p208, %s209, %s210
      %p214 = pneg %p208
      %p215 = scmp.eq.s32.totalorder %s21, 1
      %p216 = por %p214, %p215
      %p217 = scmp.ne.s32.totalorder %s209, %s212
      %p218 = scmp.eq.s32.totalorder %s21, 0
      %p219 = por %p217, %p218
      %p220 = scmp.ne.s32.totalorder %s209, %s212
      %p221 = scmp.eq.s32.totalorder %s26, 1
      %p222 = por %p220, %p221
      %p223 = scmp.ne.s32.totalorder %s212, %s213
      %p224 = scmp.eq.s32.totalorder %s26, 0
      %p225 = por %p223, %p224
      %p226 = scmp.ne.s32.totalorder %s212, %s213
      %p227 = scmp.eq.s32.totalorder %s27, 1
      %p228 = por %p226, %p227
      %p230 = scmp.ne.s32.totalorder %s213, %s229
      %p231 = scmp.eq.s32.totalorder %s27, 0
      %p232 = por %p230, %p231
      %s233 = ssub.s32 %s21, %s28
      %p234 = scmp.eq.s32.totalorder %s233, 0
      %s236 = sadd.s32 %s235, 1
      %s237 = scalar_select %p234, %s235, %s236
      %p240 = pneg %p234
      %p241 = scmp.eq.s32.totalorder %s21, 1
      %p242 = por %p240, %p241
      %p243 = scmp.ne.s32.totalorder %s235, %s238
      %p244 = scmp.eq.s32.totalorder %s21, 0
      %p245 = por %p243, %p244
      %p246 = scmp.ne.s32.totalorder %s235, %s238
      %p247 = scmp.eq.s32.totalorder %s26, 1
      %p248 = por %p246, %p247
      %p249 = scmp.ne.s32.totalorder %s238, %s239
      %p250 = scmp.eq.s32.totalorder %s26, 0
      %p251 = por %p249, %p250
      %p252 = scmp.ne.s32.totalorder %s238, %s239
      %p253 = scmp.eq.s32.totalorder %s27, 1
      %p254 = por %p252, %p253
      %p256 = scmp.ne.s32.totalorder %s239, %s255
      %p257 = scmp.eq.s32.totalorder %s27, 0
      %p258 = por %p256, %p257
      %p259 = scmp.le.s32.totalorder 1, %s21
      %p260 = scmp.lt.s32.totalorder %s21, 3
      %p261 = pnand %p259, %p260
      %p262 = pneg %p261
      // Predicated region
      $region9: #{sba_block_forward.2} parent=5 // pred_check
        _
      $region10: #{sba_block_forward.2} parent=5 // pred_check_branch
        %264 = sbr.rel (%p261) target = $region12
      $region11: #{sba_block_forward.2} parent=5 // pred_region
        %s265 = ssub.s32 %s21, 1
        // Predicated region
        $region13: #{sba_block_forward.2} parent=11 // pred_check
          %p266 = pneg %p68
        $region14: #{sba_block_forward.2} parent=11 // pred_check_branch
          %268 = sbr.rel (%p266) target = $region16
        $region15: #{sba_block_forward.2} parent=11 // pred_region
          %s270 = ssub.s32 512, 512
          %271 = vsyncadd [#allocation5], %s270
          %s272 = sshll.u32 [#allocation4], 4
          %s273 = int_to_ptr.vmem [resolvable:$true] %s272
          %278 = dma.hbm_to_vmem [thread:$0]  %s1, 512, %s273, [#allocation5], 128, 128, 8
        $region16: #{sba_block_forward.2} parent=11 // pred_fallthru
          _
        // Predicated region
        $region17: #{sba_block_forward.2} parent=11 // pred_check
          %p279 = pneg %p89
        $region18: #{sba_block_forward.2} parent=11 // pred_check_branch
          %281 = sbr.rel (%p279) target = $region20
        $region19: #{sba_block_forward.2} parent=11 // pred_region
          %s283 = ssub.s32 512, 512
          %284 = vsyncadd [#allocation5], %s283
          %s285 = sshll.u32 [#allocation6], 4
          %s286 = int_to_ptr.vmem [resolvable:$true] %s285
          %291 = dma.hbm_to_vmem [thread:$0]  %s2, 512, %s286, [#allocation5], 128, 128, 8
        $region20: #{sba_block_forward.2} parent=11 // pred_fallthru
          _
        // Predicated region
        $region21: #{sba_block_forward.2} parent=11 // pred_check
          %p292 = pneg %p110
        $region22: #{sba_block_forward.2} parent=11 // pred_check_branch
          %294 = sbr.rel (%p292) target = $region24
        $region23: #{sba_block_forward.2} parent=11 // pred_region
          _
        $region24: #{sba_block_forward.2} parent=11 // pred_fallthru
          _
        // Predicated region
        $region25: #{sba_block_forward.2} parent=11 // pred_check
          %p295 = pneg %p131
        $region26: #{sba_block_forward.2} parent=11 // pred_check_branch
          %297 = sbr.rel (%p295) target = $region28
        $region27: #{sba_block_forward.2} parent=11 // pred_region
          _
        $region28: #{sba_block_forward.2} parent=11 // pred_fallthru
          _
        // Predicated region
        $region29: #{sba_block_forward.2} parent=11 // pred_check
          %p298 = pneg %p152
        $region30: #{sba_block_forward.2} parent=11 // pred_check_branch
          %300 = sbr.rel (%p298) target = $region32
        $region31: #{sba_block_forward.2} parent=11 // pred_region
          _
        $region32: #{sba_block_forward.2} parent=11 // pred_fallthru
          _
        // Predicated region
        $region33: #{sba_block_forward.2} parent=11 // pred_check
          %p301 = pneg %p173
        $region34: #{sba_block_forward.2} parent=11 // pred_check_branch
          %303 = sbr.rel (%p301) target = $region36
        $region35: #{sba_block_forward.2} parent=11 // pred_region
          %s305 = ssub.s32 16, 16
          %306 = vsyncadd [#allocation8], %s305
          %s308 = sshll.u32 [#allocation7], 4
          %s309 = int_to_ptr.vmem [resolvable:$true] %s308
          %311 = dma.hbm_to_vmem [thread:$0]  %s6, 16, %s309, [#allocation8]
        $region36: #{sba_block_forward.2} parent=11 // pred_fallthru
          _
      $region12: #{sba_block_forward.2} parent=5 // pred_fallthru
        _
      %p312 = scmp.lt.s32.totalorder %s21, 2
      // Predicated region
      $region37: #{sba_block_forward.2} parent=5 // pred_check
        %p313 = pneg %p312
      $region38: #{sba_block_forward.2} parent=5 // pred_check_branch
        %315 = sbr.rel (%p313) target = $region40
      $region39: #{sba_block_forward.2} parent=5 // pred_region
        // Predicated region
        $region41: #{sba_block_forward.2} parent=39 // pred_check
          %p316 = pneg %p41
        $region42: #{sba_block_forward.2} parent=39 // pred_check_branch
          %318 = sbr.rel (%p316) target = $region44
        $region43: #{sba_block_forward.2} parent=39 // pred_region
          %s319 = sand.u32 %s31, 1
          %s320 = scalar_lea.sflag [#allocation3], %s319
          %s321 = sand.u32 %s31, 1
          %s322 = smul.addr %s321, 256
          %s323 = scalar_lea.vmem [#allocation2], %s322
          %s324 = smul.u32 32, %s21
          %s326 = ssub.s32 4096, 4096
          %327 = vsyncadd %s320, %s326
          %s328 = smul.addr %s324, 128
          %s329 = scalar_lea.hbm %s0, %s328
          %s330 = sshll.u32 %s323, 4
          %s331 = int_to_ptr.vmem [resolvable:$true] %s330
          %336 = dma.hbm_to_vmem [thread:$0]  %s329, 4096, %s331, %s320, 128, 128, 8
        $region44: #{sba_block_forward.2} parent=39 // pred_fallthru
          _
      $region40: #{sba_block_forward.2} parent=5 // pred_fallthru
        _
      %p337 = scmp.le.s32.totalorder 1, %s21
      %p338 = scmp.lt.s32.totalorder %s21, 3
      %p339 = pnand %p337, %p338
      %p340 = pneg %p339
      // Predicated region
      $region45: #{sba_block_forward.2} parent=5 // pred_check
        _
      $region46: #{sba_block_forward.2} parent=5 // pred_check_branch
        %342 = sbr.rel (%p339) target = $region48
      $region47: #{sba_block_forward.2} parent=5 // pred_region
        %s343 = ssub.s32 %s21, 1
        %s344 = sand.u32 %s34, 1
        %s345 = scalar_lea.sflag [#allocation3], %s344
        %s346 = sand.u32 %s34, 1
        %s347 = smul.addr %s346, 256
        %s348 = scalar_lea.vmem [#allocation2], %s347
        // Predicated region
        $region49: #{sba_block_forward.2} parent=47 // pred_check
          %p349 = pneg %p47
        $region50: #{sba_block_forward.2} parent=47 // pred_check_branch
          %351 = sbr.rel (%p349) target = $region52
        $region51: #{sba_block_forward.2} parent=47 // pred_region
          %352 = dma.done %s345, 4096
        $region52: #{sba_block_forward.2} parent=47 // pred_fallthru
          _
        // Predicated region
        $region53: #{sba_block_forward.2} parent=47 // pred_check
          %p353 = pneg %p68
        $region54: #{sba_block_forward.2} parent=47 // pred_check_branch
          %355 = sbr.rel (%p353) target = $region56
        $region55: #{sba_block_forward.2} parent=47 // pred_region
          %356 = dma.done [#allocation5], 512
        $region56: #{sba_block_forward.2} parent=47 // pred_fallthru
          _
        // Predicated region
        $region57: #{sba_block_forward.2} parent=47 // pred_check
          %p357 = pneg %p89
        $region58: #{sba_block_forward.2} parent=47 // pred_check_branch
          %359 = sbr.rel (%p357) target = $region60
        $region59: #{sba_block_forward.2} parent=47 // pred_region
          %360 = dma.done [#allocation5], 512
        $region60: #{sba_block_forward.2} parent=47 // pred_fallthru
          _
        // Predicated region
        $region61: #{sba_block_forward.2} parent=47 // pred_check
          %p361 = pneg %p173
        $region62: #{sba_block_forward.2} parent=47 // pred_check_branch
          %363 = sbr.rel (%p361) target = $region64
        $region63: #{sba_block_forward.2} parent=47 // pred_region
          %364 = dma.done [#allocation8], 16
        $region64: #{sba_block_forward.2} parent=47 // pred_fallthru
          _
        %s365 = sand.u32 %s34, 1
        %s366 = scalar_lea.sflag [#allocation3], %s365
        %s367 = sand.u32 %s34, 1
        %s368 = smul.addr %s367, 256
        %s369 = scalar_lea.vmem [#allocation2], %s368
        %p370 = pneg %p47
        %p371 = pneg %p44
        %p372 = pneg %p68
        %p373 = pneg %p65
        %p374 = pneg %p89
        %p375 = pneg %p86
        %p376 = pneg %p110
        %p377 = pneg %p107
        %p378 = pneg %p131
        %p379 = pneg %p128
        %p380 = pneg %p152
        %p381 = pneg %p149
        %p382 = pneg %p173
        %p383 = pneg %p170
        %p384 = pneg %p199
        %p385 = pneg %p196
        %s386 = smul.u32 32, %s26
        %p387 = scmp.lt.s32.totalorder %s386, 63
        %s388 = scalar_select %p387, %s386, 63
        %s389 = smul.addr %s388, 8
        %s390 = scalar_lea.vmem %s7, %s389
        %p391 = pneg %p225
        %p392 = pneg %p222
        %s393 = smul.u32 32, %s26
        %p394 = scmp.lt.s32.totalorder %s393, 63
        %s395 = scalar_select %p394, %s393, 63
        %s396 = smul.addr %s395, 8
        %s397 = scalar_lea.vmem %s8, %s396
        %p398 = pneg %p251
        %p399 = pneg %p248
        %s400 = smul.u32 32, %s26
        %p401 = scmp.lt.s32.totalorder %s400, 63
        %s402 = scalar_select %p401, %s400, 63
        %s403 = smul.addr %s402, 8
        %s404 = scalar_lea.vmem %s9, %s403
        %s405 = smul.u32 32, %s26
        %s406 = smul.u32 32, %s26
        %p407 = scmp.lt.s32.totalorder %s406, 63
        %s408 = scalar_select %p407, %s406, 63
        %s409 = smul.addr %s408, 8
        %s410 = scalar_lea.vmem %s7, %s409
        %s411 = smul.u32 32, %s26
        %s412 = smul.u32 32, %s26
        %p413 = scmp.lt.s32.totalorder %s412, 63
        %s414 = scalar_select %p413, %s412, 63
        %s415 = smul.addr %s414, 8
        %s416 = scalar_lea.vmem %s8, %s415
        %s417 = smul.u32 32, %s26
        %s418 = smul.u32 32, %s26
        %p419 = scmp.lt.s32.totalorder %s418, 63
        %s420 = scalar_select %p419, %s418, 63
        %s421 = smul.addr %s420, 8
        %s422 = scalar_lea.vmem %s9, %s421
        %s423 = smul.u32 32, %s26
        %v424 = vld [vmem:[%s348] sm:$0xff]
        %v425 = vld [vmem:[%s348 + $0x8] sm:$0xff]
        %v426 = vld [vmem:[%s348 + $0x10] sm:$0xff]
        %v427 = vld [vmem:[%s348 + $0x18] sm:$0xff]
        %v428 = vld [vmem:[%s348 + $0x20] sm:$0xff]
        %v429 = vld [vmem:[%s348 + $0x28] sm:$0xff]
        %v430 = vld [vmem:[%s348 + $0x30] sm:$0xff]
        %v431 = vld [vmem:[%s348 + $0x38] sm:$0xff]
        %v432 = vld [vmem:[%s348 + $0x40] sm:$0xff]
        %v433 = vld [vmem:[%s348 + $0x48] sm:$0xff]
        %v434 = vld [vmem:[%s348 + $0x50] sm:$0xff]
        %v435 = vld [vmem:[%s348 + $0x58] sm:$0xff]
        %v436 = vld [vmem:[%s348 + $0x60] sm:$0xff]
        %v437 = vld [vmem:[%s348 + $0x68] sm:$0xff]
        %v438 = vld [vmem:[%s348 + $0x70] sm:$0xff]
        %v439 = vld [vmem:[%s348 + $0x78] sm:$0xff]
        %v440 = vld [vmem:[%s348 + $0x80] sm:$0xff]
        %v441 = vld [vmem:[%s348 + $0x88] sm:$0xff]
        %v442 = vld [vmem:[%s348 + $0x90] sm:$0xff]
        %v443 = vld [vmem:[%s348 + $0x98] sm:$0xff]
        %v444 = vld [vmem:[%s348 + $0xa0] sm:$0xff]
        %v445 = vld [vmem:[%s348 + $0xa8] sm:$0xff]
        %v446 = vld [vmem:[%s348 + $0xb0] sm:$0xff]
        %v447 = vld [vmem:[%s348 + $0xb8] sm:$0xff]
        %v448 = vld [vmem:[%s348 + $0xc0] sm:$0xff]
        %v449 = vld [vmem:[%s348 + $0xc8] sm:$0xff]
        %v450 = vld [vmem:[%s348 + $0xd0] sm:$0xff]
        %v451 = vld [vmem:[%s348 + $0xd8] sm:$0xff]
        %v452 = vld [vmem:[%s348 + $0xe0] sm:$0xff]
        %v453 = vld [vmem:[%s348 + $0xe8] sm:$0xff]
        %v454 = vld [vmem:[%s348 + $0xf0] sm:$0xff]
        %v455 = vld [vmem:[%s348 + $0xf8] sm:$0xff]
        %v456 = vld [vmem:[#allocation4] sm:$0xff]
        %v457 = vld [vmem:[#allocation4 + $0x8] sm:$0xff]
        %v458 = vld [vmem:[#allocation4 + $0x10] sm:$0xff]
        %v459 = vld [vmem:[#allocation4 + $0x18] sm:$0xff]
        %v460 = vld [vmem:[%s4] sm:$0x1]
        %v462 = vlaneseq
        %v463 = vshrl.u32 %v462, 7
        %v464 = vsub.s32 0, %v463
        %v465 = vrot.slane %v460, %v464
        %vm467 = vcmask 261120
        %v469 = vsel %vm467, %v424, 0
        %v472 = vsel %vm467, %v425, 0
        %v475 = vsel %vm467, %v426, 0
        %v478 = vsel %vm467, %v427, 0
        %v481 = vsel %vm467, %v428, 0
        %v484 = vsel %vm467, %v429, 0
        %v487 = vsel %vm467, %v430, 0
        %v490 = vsel %vm467, %v431, 0
        %v493 = vsel %vm467, %v432, 0
        %v496 = vsel %vm467, %v433, 0
        %v499 = vsel %vm467, %v434, 0
        %v502 = vsel %vm467, %v435, 0
        %v505 = vsel %vm467, %v436, 0
        %v508 = vsel %vm467, %v437, 0
        %v511 = vsel %vm467, %v438, 0
        %v514 = vsel %vm467, %v439, 0
        %v517 = vsel %vm467, %v440, 0
        %v520 = vsel %vm467, %v441, 0
        %v523 = vsel %vm467, %v442, 0
        %v526 = vsel %vm467, %v443, 0
        %v529 = vsel %vm467, %v444, 0
        %v532 = vsel %vm467, %v445, 0
        %v535 = vsel %vm467, %v446, 0
        %v538 = vsel %vm467, %v447, 0
        %v541 = vsel %vm467, %v448, 0
        %v544 = vsel %vm467, %v449, 0
        %v547 = vsel %vm467, %v450, 0
        %v550 = vsel %vm467, %v451, 0
        %v553 = vsel %vm467, %v452, 0
        %v556 = vsel %vm467, %v453, 0
        %v559 = vsel %vm467, %v454, 0
        %v562 = vsel %vm467, %v455, 0
        %564 = vmatprep.subr.mxu0 0.0
        %565 = vmatpush1.msra.mxu0 %v456
        %566 = vmatprep.subr.mxu0 0.0
        %567 = vmatpush1.msra.mxu0 %v457
        %568 = vmatprep.subr.mxu0 0.0
        %569 = vmatpush1.msra.mxu0 %v458
        %570 = vmatprep.subr.mxu0 0.0
        %571 = vmatpush1.msra.mxu0 %v459
        %572 = vmatprep.subr.mxu0 0.0
        %573 = vmatpush1.msra.mxu0 0.0
        %574 = vmatprep.subr.mxu0 0.0
        %575 = vmatpush1.msra.mxu0 0.0
        %576 = vmatprep.subr.mxu0 0.0
        %577 = vmatpush1.msra.mxu0 0.0
        %578 = vmatprep.subr.mxu0 0.0
        %579 = vmatpush1.msra.mxu0 0.0
        %580 = vmatprep.subr.mxu0 0.0
        %581 = vmatpush1.msra.mxu0 0.0
        %582 = vmatprep.subr.mxu0 0.0
        %583 = vmatpush1.msra.mxu0 0.0
        %584 = vmatprep.subr.mxu0 0.0
        %585 = vmatpush1.msra.mxu0 0.0
        %586 = vmatprep.subr.mxu0 0.0
        %587 = vmatpush1.msra.mxu0 0.0
        %588 = vmatprep.subr.mxu0 0.0
        %589 = vmatpush1.msra.mxu0 0.0
        %590 = vmatprep.subr.mxu0 0.0
        %591 = vmatpush1.msra.mxu0 0.0
        %592 = vmatprep.subr.mxu0 0.0
        %593 = vmatpush1.msra.mxu0 0.0
        %594 = vmatprep.subr.mxu0 0.0
        %595 = vmatpush1.msra.mxu0 0.0
        %596 = vmatprep.subr.mxu0 0.0
        %597 = vmatpush1.msra.mxu0 0.0
        %598 = vmatprep.subr.mxu0 0.0
        %599 = vmatpush1.msra.mxu0 0.0
        %600 = vmatprep.subr.mxu0 0.0
        %601 = vmatpush1.msra.mxu0 0.0
        %602 = vmatprep.subr.mxu0 0.0
        %603 = vmatpush1.msra.mxu0 0.0
        %604 = vmatprep.subr.mxu0 0.0
        %605 = vmatpush1.msra.mxu0 0.0
        %606 = vmatprep.subr.mxu0 0.0
        %607 = vmatpush1.msra.mxu0 0.0
        %608 = vmatprep.subr.mxu0 0.0
        %609 = vmatpush1.msra.mxu0 0.0
        %610 = vmatprep.subr.mxu0 0.0
        %611 = vmatpush1.msra.mxu0 0.0
        %612 = vmatprep.subr.mxu0 0.0
        %613 = vmatpush1.msra.mxu0 0.0
        %614 = vmatprep.subr.mxu0 0.0
        %615 = vmatpush1.msra.mxu0 0.0
        %616 = vmatprep.subr.mxu0 0.0
        %617 = vmatpush1.msra.mxu0 0.0
        %618 = vmatprep.subr.mxu0 0.0
        %619 = vmatpush1.msra.mxu0 0.0
        %620 = vmatprep.subr.mxu0 0.0
        %621 = vmatpush1.msra.mxu0 0.0
        %622 = vmatprep.subr.mxu0 0.0
        %623 = vmatpush1.msra.mxu0 0.0
        %624 = vmatprep.subr.mxu0 0.0
        %625 = vmatpush1.msra.mxu0 0.0
        %626 = vmatprep.subr.mxu0 0.0
        %627 = vmatpush1.msra.mxu0 0.0
        %628 = vmatprep.mubr.f32.mxu0 0.0
        %629 = vmatmul.mubr.f32.gmra.mrb[0].mxu0 %v469
        %v630 = vpop.f32.mrb[0].mxu0
        %v631 = vadd.f32 %v465, %v630
        %v632 = vpop.f32.mrb[0].mxu0
        %633 = vmatprep.mubr.f32.mxu0 0.0
        %634 = vmatmul.mubr.f32.gmra.mrb[0].mxu0 %v472
        %v635 = vpop.f32.mrb[0].mxu0
        %v636 = vadd.f32 %v465, %v635
        %v637 = vpop.f32.mrb[0].mxu0
        %638 = vmatprep.mubr.f32.mxu0 0.0
        %639 = vmatmul.mubr.f32.gmra.mrb[0].mxu0 %v475
        %v640 = vpop.f32.mrb[0].mxu0
        %v641 = vadd.f32 %v465, %v640
        %v642 = vpop.f32.mrb[0].mxu0
        %643 = vmatprep.mubr.f32.mxu0 0.0
        %644 = vmatmul.mubr.f32.gmra.mrb[0].mxu0 %v478
        %v645 = vpop.f32.mrb[0].mxu0
        %v646 = vadd.f32 %v465, %v645
        %v647 = vpop.f32.mrb[0].mxu0
        %648 = vmatprep.mubr.f32.mxu0 0.0
        %649 = vmatmul.mubr.f32.gmra.mrb[0].mxu0 %v481
        %v650 = vpop.f32.mrb[0].mxu0
        %v651 = vadd.f32 %v465, %v650
        %v652 = vpop.f32.mrb[0].mxu0
        %653 = vmatprep.mubr.f32.mxu0 0.0
        %654 = vmatmul.mubr.f32.gmra.mrb[0].mxu0 %v484
        %v655 = vpop.f32.mrb[0].mxu0
        %v656 = vadd.f32 %v465, %v655
        %v657 = vpop.f32.mrb[0].mxu0
        %658 = vmatprep.mubr.f32.mxu0 0.0
        %659 = vmatmul.mubr.f32.gmra.mrb[0].mxu0 %v487
        %v660 = vpop.f32.mrb[0].mxu0
        %v661 = vadd.f32 %v465, %v660
        %v662 = vpop.f32.mrb[0].mxu0
        %663 = vmatprep.mubr.f32.mxu0 0.0
        %664 = vmatmul.mubr.f32.gmra.mrb[0].mxu0 %v490
        %v665 = vpop.f32.mrb[0].mxu0
        %v666 = vadd.f32 %v465, %v665
        %v667 = vpop.f32.mrb[0].mxu0
        %668 = vmatprep.mubr.f32.mxu0 0.0
        %669 = vmatmul.mubr.f32.gmra.mrb[0].mxu0 %v493
        %v670 = vpop.f32.mrb[0].mxu0
        %v671 = vadd.f32 %v465, %v670
        %v672 = vpop.f32.mrb[0].mxu0
        %673 = vmatprep.mubr.f32.mxu0 0.0
        %674 = vmatmul.mubr.f32.gmra.mrb[0].mxu0 %v496
        %v675 = vpop.f32.mrb[0].mxu0
        %v676 = vadd.f32 %v465, %v675
        %v677 = vpop.f32.mrb[0].mxu0
        %678 = vmatprep.mubr.f32.mxu0 0.0
        %679 = vmatmul.mubr.f32.gmra.mrb[0].mxu0 %v499
        %v680 = vpop.f32.mrb[0].mxu0
        %v681 = vadd.f32 %v465, %v680
        %v682 = vpop.f32.mrb[0].mxu0
        %683 = vmatprep.mubr.f32.mxu0 0.0
        %684 = vmatmul.mubr.f32.gmra.mrb[0].mxu0 %v502
        %v685 = vpop.f32.mrb[0].mxu0
        %v686 = vadd.f32 %v465, %v685
        %v687 = vpop.f32.mrb[0].mxu0
        %688 = vmatprep.mubr.f32.mxu0 0.0
        %689 = vmatmul.mubr.f32.gmra.mrb[0].mxu0 %v505
        %v690 = vpop.f32.mrb[0].mxu0
        %v691 = vadd.f32 %v465, %v690
        %v692 = vpop.f32.mrb[0].mxu0
        %693 = vmatprep.mubr.f32.mxu0 0.0
        %694 = vmatmul.mubr.f32.gmra.mrb[0].mxu0 %v508
        %v695 = vpop.f32.mrb[0].mxu0
        %v696 = vadd.f32 %v465, %v695
        %v697 = vpop.f32.mrb[0].mxu0
        %698 = vmatprep.mubr.f32.mxu0 0.0
        %699 = vmatmul.mubr.f32.gmra.mrb[0].mxu0 %v511
        %v700 = vpop.f32.mrb[0].mxu0
        %v701 = vadd.f32 %v465, %v700
        %v702 = vpop.f32.mrb[0].mxu0
        %703 = vmatprep.mubr.f32.mxu0 0.0
        %704 = vmatmul.mubr.f32.gmra.mrb[0].mxu0 %v514
        %v705 = vpop.f32.mrb[0].mxu0
        %v706 = vadd.f32 %v465, %v705
        %v707 = vpop.f32.mrb[0].mxu0
        %708 = vmatprep.mubr.f32.mxu0 0.0
        %709 = vmatmul.mubr.f32.gmra.mrb[0].mxu0 %v517
        %v710 = vpop.f32.mrb[0].mxu0
        %v711 = vadd.f32 %v465, %v710
        %v712 = vpop.f32.mrb[0].mxu0
        %713 = vmatprep.mubr.f32.mxu0 0.0
        %714 = vmatmul.mubr.f32.gmra.mrb[0].mxu0 %v520
        %v715 = vpop.f32.mrb[0].mxu0
        %v716 = vadd.f32 %v465, %v715
        %v717 = vpop.f32.mrb[0].mxu0
        %718 = vmatprep.mubr.f32.mxu0 0.0
        %719 = vmatmul.mubr.f32.gmra.mrb[0].mxu0 %v523
        %v720 = vpop.f32.mrb[0].mxu0
        %v721 = vadd.f32 %v465, %v720
        %v722 = vpop.f32.mrb[0].mxu0
        %723 = vmatprep.mubr.f32.mxu0 0.0
        %724 = vmatmul.mubr.f32.gmra.mrb[0].mxu0 %v526
        %v725 = vpop.f32.mrb[0].mxu0
        %v726 = vadd.f32 %v465, %v725
        %v727 = vpop.f32.mrb[0].mxu0
        %728 = vmatprep.mubr.f32.mxu0 0.0
        %729 = vmatmul.mubr.f32.gmra.mrb[0].mxu0 %v529
        %v730 = vpop.f32.mrb[0].mxu0
        %v731 = vadd.f32 %v465, %v730
        %v732 = vpop.f32.mrb[0].mxu0
        %733 = vmatprep.mubr.f32.mxu0 0.0
        %734 = vmatmul.mubr.f32.gmra.mrb[0].mxu0 %v532
        %v735 = vpop.f32.mrb[0].mxu0
        %v736 = vadd.f32 %v465, %v735
        %v737 = vpop.f32.mrb[0].mxu0
        %738 = vmatprep.mubr.f32.mxu0 0.0
        %739 = vmatmul.mubr.f32.gmra.mrb[0].mxu0 %v535
        %v740 = vpop.f32.mrb[0].mxu0
        %v741 = vadd.f32 %v465, %v740
        %v742 = vpop.f32.mrb[0].mxu0
        %743 = vmatprep.mubr.f32.mxu0 0.0
        %744 = vmatmul.mubr.f32.gmra.mrb[0].mxu0 %v538
        %v745 = vpop.f32.mrb[0].mxu0
        %v746 = vadd.f32 %v465, %v745
        %v747 = vpop.f32.mrb[0].mxu0
        %748 = vmatprep.mubr.f32.mxu0 0.0
        %749 = vmatmul.mubr.f32.gmra.mrb[0].mxu0 %v541
        %v750 = vpop.f32.mrb[0].mxu0
        %v751 = vadd.f32 %v465, %v750
        %v752 = vpop.f32.mrb[0].mxu0
        %753 = vmatprep.mubr.f32.mxu0 0.0
        %754 = vmatmul.mubr.f32.gmra.mrb[0].mxu0 %v544
        %v755 = vpop.f32.mrb[0].mxu0
        %v756 = vadd.f32 %v465, %v755
        %v757 = vpop.f32.mrb[0].mxu0
        %758 = vmatprep.mubr.f32.mxu0 0.0
        %759 = vmatmul.mubr.f32.gmra.mrb[0].mxu0 %v547
        %v760 = vpop.f32.mrb[0].mxu0
        %v761 = vadd.f32 %v465, %v760
        %v762 = vpop.f32.mrb[0].mxu0
        %763 = vmatprep.mubr.f32.mxu0 0.0
        %764 = vmatmul.mubr.f32.gmra.mrb[0].mxu0 %v550
        %v765 = vpop.f32.mrb[0].mxu0
        %v766 = vadd.f32 %v465, %v765
        %v767 = vpop.f32.mrb[0].mxu0
        %768 = vmatprep.mubr.f32.mxu0 0.0
        %769 = vmatmul.mubr.f32.gmra.mrb[0].mxu0 %v553
        %v770 = vpop.f32.mrb[0].mxu0
        %v771 = vadd.f32 %v465, %v770
        %v772 = vpop.f32.mrb[0].mxu0
        %773 = vmatprep.mubr.f32.mxu0 0.0
        %774 = vmatmul.mubr.f32.gmra.mrb[0].mxu0 %v556
        %v775 = vpop.f32.mrb[0].mxu0
        %v776 = vadd.f32 %v465, %v775
        %v777 = vpop.f32.mrb[0].mxu0
        %778 = vmatprep.mubr.f32.mxu0 0.0
        %779 = vmatmul.mubr.f32.gmra.mrb[0].mxu0 %v559
        %v780 = vpop.f32.mrb[0].mxu0
        %v781 = vadd.f32 %v465, %v780
        %v782 = vpop.f32.mrb[0].mxu0
        %783 = vmatprep.mubr.f32.mxu0 0.0
        %784 = vmatmul.mubr.f32.gmra.mrb[0].mxu0 %v562
        %v785 = vpop.f32.mrb[0].mxu0
        %v786 = vadd.f32 %v465, %v785
        %v787 = vpop.f32.mrb[0].mxu0
        %788 = vdwg.mxu0
        %vm789 = vcmask 64512
        %790 = vst.msk [vmem:[%s410] sm:$0xff] %vm789, %v631
        %791 = vst.msk [vmem:[%s410 + $0x8] sm:$0xff] %vm789, %v636
        %792 = vst.msk [vmem:[%s410 + $0x10] sm:$0xff] %vm789, %v641
        %793 = vst.msk [vmem:[%s410 + $0x18] sm:$0xff] %vm789, %v646
        %794 = vst.msk [vmem:[%s410 + $0x20] sm:$0xff] %vm789, %v651
        %795 = vst.msk [vmem:[%s410 + $0x28] sm:$0xff] %vm789, %v656
        %796 = vst.msk [vmem:[%s410 + $0x30] sm:$0xff] %vm789, %v661
        %797 = vst.msk [vmem:[%s410 + $0x38] sm:$0xff] %vm789, %v666
        %798 = vst.msk [vmem:[%s410 + $0x40] sm:$0xff] %vm789, %v671
        %799 = vst.msk [vmem:[%s410 + $0x48] sm:$0xff] %vm789, %v676
        %800 = vst.msk [vmem:[%s410 + $0x50] sm:$0xff] %vm789, %v681
        %801 = vst.msk [vmem:[%s410 + $0x58] sm:$0xff] %vm789, %v686
        %802 = vst.msk [vmem:[%s410 + $0x60] sm:$0xff] %vm789, %v691
        %803 = vst.msk [vmem:[%s410 + $0x68] sm:$0xff] %vm789, %v696
        %804 = vst.msk [vmem:[%s410 + $0x70] sm:$0xff] %vm789, %v701
        %805 = vst.msk [vmem:[%s410 + $0x78] sm:$0xff] %vm789, %v706
        %806 = vst.msk [vmem:[%s410 + $0x80] sm:$0xff] %vm789, %v711
        %807 = vst.msk [vmem:[%s410 + $0x88] sm:$0xff] %vm789, %v716
        %808 = vst.msk [vmem:[%s410 + $0x90] sm:$0xff] %vm789, %v721
        %809 = vst.msk [vmem:[%s410 + $0x98] sm:$0xff] %vm789, %v726
        %810 = vst.msk [vmem:[%s410 + $0xa0] sm:$0xff] %vm789, %v731
        %811 = vst.msk [vmem:[%s410 + $0xa8] sm:$0xff] %vm789, %v736
        %812 = vst.msk [vmem:[%s410 + $0xb0] sm:$0xff] %vm789, %v741
        %813 = vst.msk [vmem:[%s410 + $0xb8] sm:$0xff] %vm789, %v746
        %814 = vst.msk [vmem:[%s410 + $0xc0] sm:$0xff] %vm789, %v751
        %815 = vst.msk [vmem:[%s410 + $0xc8] sm:$0xff] %vm789, %v756
        %816 = vst.msk [vmem:[%s410 + $0xd0] sm:$0xff] %vm789, %v761
        %817 = vst.msk [vmem:[%s410 + $0xd8] sm:$0xff] %vm789, %v766
        %818 = vst.msk [vmem:[%s410 + $0xe0] sm:$0xff] %vm789, %v771
        %819 = vst.msk [vmem:[%s410 + $0xe8] sm:$0xff] %vm789, %v776
        %820 = vst.msk [vmem:[%s410 + $0xf0] sm:$0xff] %vm789, %v781
        %821 = vst.msk [vmem:[%s410 + $0xf8] sm:$0xff] %vm789, %v786
        %v822 = vld [vmem:[#allocation6] sm:$0xff]
        %v823 = vld [vmem:[#allocation6 + $0x8] sm:$0xff]
        %v824 = vld [vmem:[#allocation6 + $0x10] sm:$0xff]
        %v825 = vld [vmem:[#allocation6 + $0x18] sm:$0xff]
        %v826 = vld [vmem:[%s5] sm:$0x1]
        %v828 = vlaneseq
        %v829 = vshrl.u32 %v828, 7
        %v830 = vsub.s32 0, %v829
        %v831 = vrot.slane %v826, %v830
        %833 = vmatprep.subr.mxu0 0.0
        %834 = vmatpush1.msra.mxu0 %v822
        %835 = vmatprep.subr.mxu0 0.0
        %836 = vmatpush1.msra.mxu0 %v823
        %837 = vmatprep.subr.mxu0 0.0
        %838 = vmatpush1.msra.mxu0 %v824
        %839 = vmatprep.subr.mxu0 0.0
        %840 = vmatpush1.msra.mxu0 %v825
        %841 = vmatprep.subr.mxu0 0.0
        %842 = vmatpush1.msra.mxu0 0.0
        %843 = vmatprep.subr.mxu0 0.0
        %844 = vmatpush1.msra.mxu0 0.0
        %845 = vmatprep.subr.mxu0 0.0
        %846 = vmatpush1.msra.mxu0 0.0
        %847 = vmatprep.subr.mxu0 0.0
        %848 = vmatpush1.msra.mxu0 0.0
        %849 = vmatprep.subr.mxu0 0.0
        %850 = vmatpush1.msra.mxu0 0.0
        %851 = vmatprep.subr.mxu0 0.0
        %852 = vmatpush1.msra.mxu0 0.0
        %853 = vmatprep.subr.mxu0 0.0
        %854 = vmatpush1.msra.mxu0 0.0
        %855 = vmatprep.subr.mxu0 0.0
        %856 = vmatpush1.msra.mxu0 0.0
        %857 = vmatprep.subr.mxu0 0.0
        %858 = vmatpush1.msra.mxu0 0.0
        %859 = vmatprep.subr.mxu0 0.0
        %860 = vmatpush1.msra.mxu0 0.0
        %861 = vmatprep.subr.mxu0 0.0
        %862 = vmatpush1.msra.mxu0 0.0
        %863 = vmatprep.subr.mxu0 0.0
        %864 = vmatpush1.msra.mxu0 0.0
        %865 = vmatprep.subr.mxu0 0.0
        %866 = vmatpush1.msra.mxu0 0.0
        %867 = vmatprep.subr.mxu0 0.0
        %868 = vmatpush1.msra.mxu0 0.0
        %869 = vmatprep.subr.mxu0 0.0
        %870 = vmatpush1.msra.mxu0 0.0
        %871 = vmatprep.subr.mxu0 0.0
        %872 = vmatpush1.msra.mxu0 0.0
        %873 = vmatprep.subr.mxu0 0.0
        %874 = vmatpush1.msra.mxu0 0.0
        %875 = vmatprep.subr.mxu0 0.0
        %876 = vmatpush1.msra.mxu0 0.0
        %877 = vmatprep.subr.mxu0 0.0
        %878 = vmatpush1.msra.mxu0 0.0
        %879 = vmatprep.subr.mxu0 0.0
        %880 = vmatpush1.msra.mxu0 0.0
        %881 = vmatprep.subr.mxu0 0.0
        %882 = vmatpush1.msra.mxu0 0.0
        %883 = vmatprep.subr.mxu0 0.0
        %884 = vmatpush1.msra.mxu0 0.0
        %885 = vmatprep.subr.mxu0 0.0
        %886 = vmatpush1.msra.mxu0 0.0
        %887 = vmatprep.subr.mxu0 0.0
        %888 = vmatpush1.msra.mxu0 0.0
        %889 = vmatprep.subr.mxu0 0.0
        %890 = vmatpush1.msra.mxu0 0.0
        %891 = vmatprep.subr.mxu0 0.0
        %892 = vmatpush1.msra.mxu0 0.0
        %893 = vmatprep.subr.mxu0 0.0
        %894 = vmatpush1.msra.mxu0 0.0
        %895 = vmatprep.subr.mxu0 0.0
        %896 = vmatpush1.msra.mxu0 0.0
        %897 = vmatprep.mubr.f32.mxu0 0.0
        %898 = vmatmul.mubr.f32.gmra.mrb[0].mxu0 %v469
        %v899 = vpop.f32.mrb[0].mxu0
        %v900 = vadd.f32 %v831, %v899
        %v901 = vpop.f32.mrb[0].mxu0
        %902 = vmatprep.mubr.f32.mxu0 0.0
        %903 = vmatmul.mubr.f32.gmra.mrb[0].mxu0 %v472
        %v904 = vpop.f32.mrb[0].mxu0
        %v905 = vadd.f32 %v831, %v904
        %v906 = vpop.f32.mrb[0].mxu0
        %907 = vmatprep.mubr.f32.mxu0 0.0
        %908 = vmatmul.mubr.f32.gmra.mrb[0].mxu0 %v475
        %v909 = vpop.f32.mrb[0].mxu0
        %v910 = vadd.f32 %v831, %v909
        %v911 = vpop.f32.mrb[0].mxu0
        %912 = vmatprep.mubr.f32.mxu0 0.0
        %913 = vmatmul.mubr.f32.gmra.mrb[0].mxu0 %v478
        %v914 = vpop.f32.mrb[0].mxu0
        %v915 = vadd.f32 %v831, %v914
        %v916 = vpop.f32.mrb[0].mxu0
        %917 = vmatprep.mubr.f32.mxu0 0.0
        %918 = vmatmul.mubr.f32.gmra.mrb[0].mxu0 %v481
        %v919 = vpop.f32.mrb[0].mxu0
        %v920 = vadd.f32 %v831, %v919
        %v921 = vpop.f32.mrb[0].mxu0
        %922 = vmatprep.mubr.f32.mxu0 0.0
        %923 = vmatmul.mubr.f32.gmra.mrb[0].mxu0 %v484
        %v924 = vpop.f32.mrb[0].mxu0
        %v925 = vadd.f32 %v831, %v924
        %v926 = vpop.f32.mrb[0].mxu0
        %927 = vmatprep.mubr.f32.mxu0 0.0
        %928 = vmatmul.mubr.f32.gmra.mrb[0].mxu0 %v487
        %v929 = vpop.f32.mrb[0].mxu0
        %v930 = vadd.f32 %v831, %v929
        %v931 = vpop.f32.mrb[0].mxu0
        %932 = vmatprep.mubr.f32.mxu0 0.0
        %933 = vmatmul.mubr.f32.gmra.mrb[0].mxu0 %v490
        %v934 = vpop.f32.mrb[0].mxu0
        %v935 = vadd.f32 %v831, %v934
        %v936 = vpop.f32.mrb[0].mxu0
        %937 = vmatprep.mubr.f32.mxu0 0.0
        %938 = vmatmul.mubr.f32.gmra.mrb[0].mxu0 %v493
        %v939 = vpop.f32.mrb[0].mxu0
        %v940 = vadd.f32 %v831, %v939
        %v941 = vpop.f32.mrb[0].mxu0
        %942 = vmatprep.mubr.f32.mxu0 0.0
        %943 = vmatmul.mubr.f32.gmra.mrb[0].mxu0 %v496
        %v944 = vpop.f32.mrb[0].mxu0
        %v945 = vadd.f32 %v831, %v944
        %v946 = vpop.f32.mrb[0].mxu0
        %947 = vmatprep.mubr.f32.mxu0 0.0
        %948 = vmatmul.mubr.f32.gmra.mrb[0].mxu0 %v499
        %v949 = vpop.f32.mrb[0].mxu0
        %v950 = vadd.f32 %v831, %v949
        %v951 = vpop.f32.mrb[0].mxu0
        %952 = vmatprep.mubr.f32.mxu0 0.0
        %953 = vmatmul.mubr.f32.gmra.mrb[0].mxu0 %v502
        %v954 = vpop.f32.mrb[0].mxu0
        %v955 = vadd.f32 %v831, %v954
        %v956 = vpop.f32.mrb[0].mxu0
        %957 = vmatprep.mubr.f32.mxu0 0.0
        %958 = vmatmul.mubr.f32.gmra.mrb[0].mxu0 %v505
        %v959 = vpop.f32.mrb[0].mxu0
        %v960 = vadd.f32 %v831, %v959
        %v961 = vpop.f32.mrb[0].mxu0
        %962 = vmatprep.mubr.f32.mxu0 0.0
        %963 = vmatmul.mubr.f32.gmra.mrb[0].mxu0 %v508
        %v964 = vpop.f32.mrb[0].mxu0
        %v965 = vadd.f32 %v831, %v964
        %v966 = vpop.f32.mrb[0].mxu0
        %967 = vmatprep.mubr.f32.mxu0 0.0
        %968 = vmatmul.mubr.f32.gmra.mrb[0].mxu0 %v511
        %v969 = vpop.f32.mrb[0].mxu0
        %v970 = vadd.f32 %v831, %v969
        %v971 = vpop.f32.mrb[0].mxu0
        %972 = vmatprep.mubr.f32.mxu0 0.0
        %973 = vmatmul.mubr.f32.gmra.mrb[0].mxu0 %v514
        %v974 = vpop.f32.mrb[0].mxu0
        %v975 = vadd.f32 %v831, %v974
        %v976 = vpop.f32.mrb[0].mxu0
        %977 = vmatprep.mubr.f32.mxu0 0.0
        %978 = vmatmul.mubr.f32.gmra.mrb[0].mxu0 %v517
        %v979 = vpop.f32.mrb[0].mxu0
        %v980 = vadd.f32 %v831, %v979
        %v981 = vpop.f32.mrb[0].mxu0
        %982 = vmatprep.mubr.f32.mxu0 0.0
        %983 = vmatmul.mubr.f32.gmra.mrb[0].mxu0 %v520
        %v984 = vpop.f32.mrb[0].mxu0
        %v985 = vadd.f32 %v831, %v984
        %v986 = vpop.f32.mrb[0].mxu0
        %987 = vmatprep.mubr.f32.mxu0 0.0
        %988 = vmatmul.mubr.f32.gmra.mrb[0].mxu0 %v523
        %v989 = vpop.f32.mrb[0].mxu0
        %v990 = vadd.f32 %v831, %v989
        %v991 = vpop.f32.mrb[0].mxu0
        %992 = vmatprep.mubr.f32.mxu0 0.0
        %993 = vmatmul.mubr.f32.gmra.mrb[0].mxu0 %v526
        %v994 = vpop.f32.mrb[0].mxu0
        %v995 = vadd.f32 %v831, %v994
        %v996 = vpop.f32.mrb[0].mxu0
        %997 = vmatprep.mubr.f32.mxu0 0.0
        %998 = vmatmul.mubr.f32.gmra.mrb[0].mxu0 %v529
        %v999 = vpop.f32.mrb[0].mxu0
        %v1000 = vadd.f32 %v831, %v999
        %v1001 = vpop.f32.mrb[0].mxu0
        %1002 = vmatprep.mubr.f32.mxu0 0.0
        %1003 = vmatmul.mubr.f32.gmra.mrb[0].mxu0 %v532
        %v1004 = vpop.f32.mrb[0].mxu0
        %v1005 = vadd.f32 %v831, %v1004
        %v1006 = vpop.f32.mrb[0].mxu0
        %1007 = vmatprep.mubr.f32.mxu0 0.0
        %1008 = vmatmul.mubr.f32.gmra.mrb[0].mxu0 %v535
        %v1009 = vpop.f32.mrb[0].mxu0
        %v1010 = vadd.f32 %v831, %v1009
        %v1011 = vpop.f32.mrb[0].mxu0
        %1012 = vmatprep.mubr.f32.mxu0 0.0
        %1013 = vmatmul.mubr.f32.gmra.mrb[0].mxu0 %v538
        %v1014 = vpop.f32.mrb[0].mxu0
        %v1015 = vadd.f32 %v831, %v1014
        %v1016 = vpop.f32.mrb[0].mxu0
        %1017 = vmatprep.mubr.f32.mxu0 0.0
        %1018 = vmatmul.mubr.f32.gmra.mrb[0].mxu0 %v541
        %v1019 = vpop.f32.mrb[0].mxu0
        %v1020 = vadd.f32 %v831, %v1019
        %v1021 = vpop.f32.mrb[0].mxu0
        %1022 = vmatprep.mubr.f32.mxu0 0.0
        %1023 = vmatmul.mubr.f32.gmra.mrb[0].mxu0 %v544
        %v1024 = vpop.f32.mrb[0].mxu0
        %v1025 = vadd.f32 %v831, %v1024
        %v1026 = vpop.f32.mrb[0].mxu0
        %1027 = vmatprep.mubr.f32.mxu0 0.0
        %1028 = vmatmul.mubr.f32.gmra.mrb[0].mxu0 %v547
        %v1029 = vpop.f32.mrb[0].mxu0
        %v1030 = vadd.f32 %v831, %v1029
        %v1031 = vpop.f32.mrb[0].mxu0
        %1032 = vmatprep.mubr.f32.mxu0 0.0
        %1033 = vmatmul.mubr.f32.gmra.mrb[0].mxu0 %v550
        %v1034 = vpop.f32.mrb[0].mxu0
        %v1035 = vadd.f32 %v831, %v1034
        %v1036 = vpop.f32.mrb[0].mxu0
        %1037 = vmatprep.mubr.f32.mxu0 0.0
        %1038 = vmatmul.mubr.f32.gmra.mrb[0].mxu0 %v553
        %v1039 = vpop.f32.mrb[0].mxu0
        %v1040 = vadd.f32 %v831, %v1039
        %v1041 = vpop.f32.mrb[0].mxu0
        %1042 = vmatprep.mubr.f32.mxu0 0.0
        %1043 = vmatmul.mubr.f32.gmra.mrb[0].mxu0 %v556
        %v1044 = vpop.f32.mrb[0].mxu0
        %v1045 = vadd.f32 %v831, %v1044
        %v1046 = vpop.f32.mrb[0].mxu0
        %1047 = vmatprep.mubr.f32.mxu0 0.0
        %1048 = vmatmul.mubr.f32.gmra.mrb[0].mxu0 %v559
        %v1049 = vpop.f32.mrb[0].mxu0
        %v1050 = vadd.f32 %v831, %v1049
        %v1051 = vpop.f32.mrb[0].mxu0
        %1052 = vmatprep.mubr.f32.mxu0 0.0
        %1053 = vmatmul.mubr.f32.gmra.mrb[0].mxu0 %v562
        %v1054 = vpop.f32.mrb[0].mxu0
        %v1055 = vadd.f32 %v831, %v1054
        %v1056 = vpop.f32.mrb[0].mxu0
        %1057 = vdwg.mxu0
        %1058 = vst.msk [vmem:[%s416] sm:$0xff] %vm789, %v900
        %1059 = vst.msk [vmem:[%s416 + $0x8] sm:$0xff] %vm789, %v905
        %1060 = vst.msk [vmem:[%s416 + $0x10] sm:$0xff] %vm789, %v910
        %1061 = vst.msk [vmem:[%s416 + $0x18] sm:$0xff] %vm789, %v915
        %1062 = vst.msk [vmem:[%s416 + $0x20] sm:$0xff] %vm789, %v920
        %1063 = vst.msk [vmem:[%s416 + $0x28] sm:$0xff] %vm789, %v925
        %1064 = vst.msk [vmem:[%s416 + $0x30] sm:$0xff] %vm789, %v930
        %1065 = vst.msk [vmem:[%s416 + $0x38] sm:$0xff] %vm789, %v935
        %1066 = vst.msk [vmem:[%s416 + $0x40] sm:$0xff] %vm789, %v940
        %1067 = vst.msk [vmem:[%s416 + $0x48] sm:$0xff] %vm789, %v945
        %1068 = vst.msk [vmem:[%s416 + $0x50] sm:$0xff] %vm789, %v950
        %1069 = vst.msk [vmem:[%s416 + $0x58] sm:$0xff] %vm789, %v955
        %1070 = vst.msk [vmem:[%s416 + $0x60] sm:$0xff] %vm789, %v960
        %1071 = vst.msk [vmem:[%s416 + $0x68] sm:$0xff] %vm789, %v965
        %1072 = vst.msk [vmem:[%s416 + $0x70] sm:$0xff] %vm789, %v970
        %1073 = vst.msk [vmem:[%s416 + $0x78] sm:$0xff] %vm789, %v975
        %1074 = vst.msk [vmem:[%s416 + $0x80] sm:$0xff] %vm789, %v980
        %1075 = vst.msk [vmem:[%s416 + $0x88] sm:$0xff] %vm789, %v985
        %1076 = vst.msk [vmem:[%s416 + $0x90] sm:$0xff] %vm789, %v990
        %1077 = vst.msk [vmem:[%s416 + $0x98] sm:$0xff] %vm789, %v995
        %1078 = vst.msk [vmem:[%s416 + $0xa0] sm:$0xff] %vm789, %v1000
        %1079 = vst.msk [vmem:[%s416 + $0xa8] sm:$0xff] %vm789, %v1005
        %1080 = vst.msk [vmem:[%s416 + $0xb0] sm:$0xff] %vm789, %v1010
        %1081 = vst.msk [vmem:[%s416 + $0xb8] sm:$0xff] %vm789, %v1015
        %1082 = vst.msk [vmem:[%s416 + $0xc0] sm:$0xff] %vm789, %v1020
        %1083 = vst.msk [vmem:[%s416 + $0xc8] sm:$0xff] %vm789, %v1025
        %1084 = vst.msk [vmem:[%s416 + $0xd0] sm:$0xff] %vm789, %v1030
        %1085 = vst.msk [vmem:[%s416 + $0xd8] sm:$0xff] %vm789, %v1035
        %1086 = vst.msk [vmem:[%s416 + $0xe0] sm:$0xff] %vm789, %v1040
        %1087 = vst.msk [vmem:[%s416 + $0xe8] sm:$0xff] %vm789, %v1045
        %1088 = vst.msk [vmem:[%s416 + $0xf0] sm:$0xff] %vm789, %v1050
        %1089 = vst.msk [vmem:[%s416 + $0xf8] sm:$0xff] %vm789, %v1055
        %v1090 = vld [vmem:[%s3] sm:$0xff]
        %v1091 = vld [vmem:[%s3 + $0x8] sm:$0xff]
        %v1092 = vld [vmem:[%s3 + $0x10] sm:$0xff]
        %v1093 = vld [vmem:[%s3 + $0x18] sm:$0xff]
        %v1094 = vld [vmem:[#allocation7] sm:$0x1]
        %v1096 = vlaneseq
        %v1097 = vshrl.u32 %v1096, 7
        %v1098 = vsub.s32 0, %v1097
        %v1099 = vrot.slane %v1094, %v1098
        %1101 = vmatprep.subr.mxu0 0.0
        %1102 = vmatpush1.msra.mxu0 %v1090
        %1103 = vmatprep.subr.mxu0 0.0
        %1104 = vmatpush1.msra.mxu0 %v1091
        %1105 = vmatprep.subr.mxu0 0.0
        %1106 = vmatpush1.msra.mxu0 %v1092
        %1107 = vmatprep.subr.mxu0 0.0
        %1108 = vmatpush1.msra.mxu0 %v1093
        %1109 = vmatprep.subr.mxu0 0.0
        %1110 = vmatpush1.msra.mxu0 0.0
        %1111 = vmatprep.subr.mxu0 0.0
        %1112 = vmatpush1.msra.mxu0 0.0
        %1113 = vmatprep.subr.mxu0 0.0
        %1114 = vmatpush1.msra.mxu0 0.0
        %1115 = vmatprep.subr.mxu0 0.0
        %1116 = vmatpush1.msra.mxu0 0.0
        %1117 = vmatprep.subr.mxu0 0.0
        %1118 = vmatpush1.msra.mxu0 0.0
        %1119 = vmatprep.subr.mxu0 0.0
        %1120 = vmatpush1.msra.mxu0 0.0
        %1121 = vmatprep.subr.mxu0 0.0
        %1122 = vmatpush1.msra.mxu0 0.0
        %1123 = vmatprep.subr.mxu0 0.0
        %1124 = vmatpush1.msra.mxu0 0.0
        %1125 = vmatprep.subr.mxu0 0.0
        %1126 = vmatpush1.msra.mxu0 0.0
        %1127 = vmatprep.subr.mxu0 0.0
        %1128 = vmatpush1.msra.mxu0 0.0
        %1129 = vmatprep.subr.mxu0 0.0
        %1130 = vmatpush1.msra.mxu0 0.0
        %1131 = vmatprep.subr.mxu0 0.0
        %1132 = vmatpush1.msra.mxu0 0.0
        %1133 = vmatprep.subr.mxu0 0.0
        %1134 = vmatpush1.msra.mxu0 0.0
        %1135 = vmatprep.subr.mxu0 0.0
        %1136 = vmatpush1.msra.mxu0 0.0
        %1137 = vmatprep.subr.mxu0 0.0
        %1138 = vmatpush1.msra.mxu0 0.0
        %1139 = vmatprep.subr.mxu0 0.0
        %1140 = vmatpush1.msra.mxu0 0.0
        %1141 = vmatprep.subr.mxu0 0.0
        %1142 = vmatpush1.msra.mxu0 0.0
        %1143 = vmatprep.subr.mxu0 0.0
        %1144 = vmatpush1.msra.mxu0 0.0
        %1145 = vmatprep.subr.mxu0 0.0
        %1146 = vmatpush1.msra.mxu0 0.0
        %1147 = vmatprep.subr.mxu0 0.0
        %1148 = vmatpush1.msra.mxu0 0.0
        %1149 = vmatprep.subr.mxu0 0.0
        %1150 = vmatpush1.msra.mxu0 0.0
        %1151 = vmatprep.subr.mxu0 0.0
        %1152 = vmatpush1.msra.mxu0 0.0
        %1153 = vmatprep.subr.mxu0 0.0
        %1154 = vmatpush1.msra.mxu0 0.0
        %1155 = vmatprep.subr.mxu0 0.0
        %1156 = vmatpush1.msra.mxu0 0.0
        %1157 = vmatprep.subr.mxu0 0.0
        %1158 = vmatpush1.msra.mxu0 0.0
        %1159 = vmatprep.subr.mxu0 0.0
        %1160 = vmatpush1.msra.mxu0 0.0
        %1161 = vmatprep.subr.mxu0 0.0
        %1162 = vmatpush1.msra.mxu0 0.0
        %1163 = vmatprep.subr.mxu0 0.0
        %1164 = vmatpush1.msra.mxu0 0.0
        %1165 = vmatprep.mubr.f32.mxu0 0.0
        %1166 = vmatmul.mubr.f32.gmra.mrb[0].mxu0 %v469
        %v1167 = vpop.f32.mrb[0].mxu0
        %v1168 = vadd.f32 %v1099, %v1167
        %v1169 = vpop.f32.mrb[0].mxu0
        %1170 = vmatprep.mubr.f32.mxu0 0.0
        %1171 = vmatmul.mubr.f32.gmra.mrb[0].mxu0 %v472
        %v1172 = vpop.f32.mrb[0].mxu0
        %v1173 = vadd.f32 %v1099, %v1172
        %v1174 = vpop.f32.mrb[0].mxu0
        %1175 = vmatprep.mubr.f32.mxu0 0.0
        %1176 = vmatmul.mubr.f32.gmra.mrb[0].mxu0 %v475
        %v1177 = vpop.f32.mrb[0].mxu0
        %v1178 = vadd.f32 %v1099, %v1177
        %v1179 = vpop.f32.mrb[0].mxu0
        %1180 = vmatprep.mubr.f32.mxu0 0.0
        %1181 = vmatmul.mubr.f32.gmra.mrb[0].mxu0 %v478
        %v1182 = vpop.f32.mrb[0].mxu0
        %v1183 = vadd.f32 %v1099, %v1182
        %v1184 = vpop.f32.mrb[0].mxu0
        %1185 = vmatprep.mubr.f32.mxu0 0.0
        %1186 = vmatmul.mubr.f32.gmra.mrb[0].mxu0 %v481
        %v1187 = vpop.f32.mrb[0].mxu0
        %v1188 = vadd.f32 %v1099, %v1187
        %v1189 = vpop.f32.mrb[0].mxu0
        %1190 = vmatprep.mubr.f32.mxu0 0.0
        %1191 = vmatmul.mubr.f32.gmra.mrb[0].mxu0 %v484
        %v1192 = vpop.f32.mrb[0].mxu0
        %v1193 = vadd.f32 %v1099, %v1192
        %v1194 = vpop.f32.mrb[0].mxu0
        %1195 = vmatprep.mubr.f32.mxu0 0.0
        %1196 = vmatmul.mubr.f32.gmra.mrb[0].mxu0 %v487
        %v1197 = vpop.f32.mrb[0].mxu0
        %v1198 = vadd.f32 %v1099, %v1197
        %v1199 = vpop.f32.mrb[0].mxu0
        %1200 = vmatprep.mubr.f32.mxu0 0.0
        %1201 = vmatmul.mubr.f32.gmra.mrb[0].mxu0 %v490
        %v1202 = vpop.f32.mrb[0].mxu0
        %v1203 = vadd.f32 %v1099, %v1202
        %v1204 = vpop.f32.mrb[0].mxu0
        %1205 = vmatprep.mubr.f32.mxu0 0.0
        %1206 = vmatmul.mubr.f32.gmra.mrb[0].mxu0 %v493
        %v1207 = vpop.f32.mrb[0].mxu0
        %v1208 = vadd.f32 %v1099, %v1207
        %v1209 = vpop.f32.mrb[0].mxu0
        %1210 = vmatprep.mubr.f32.mxu0 0.0
        %1211 = vmatmul.mubr.f32.gmra.mrb[0].mxu0 %v496
        %v1212 = vpop.f32.mrb[0].mxu0
        %v1213 = vadd.f32 %v1099, %v1212
        %v1214 = vpop.f32.mrb[0].mxu0
        %1215 = vmatprep.mubr.f32.mxu0 0.0
        %1216 = vmatmul.mubr.f32.gmra.mrb[0].mxu0 %v499
        %v1217 = vpop.f32.mrb[0].mxu0
        %v1218 = vadd.f32 %v1099, %v1217
        %v1219 = vpop.f32.mrb[0].mxu0
        %1220 = vmatprep.mubr.f32.mxu0 0.0
        %1221 = vmatmul.mubr.f32.gmra.mrb[0].mxu0 %v502
        %v1222 = vpop.f32.mrb[0].mxu0
        %v1223 = vadd.f32 %v1099, %v1222
        %v1224 = vpop.f32.mrb[0].mxu0
        %1225 = vmatprep.mubr.f32.mxu0 0.0
        %1226 = vmatmul.mubr.f32.gmra.mrb[0].mxu0 %v505
        %v1227 = vpop.f32.mrb[0].mxu0
        %v1228 = vadd.f32 %v1099, %v1227
        %v1229 = vpop.f32.mrb[0].mxu0
        %1230 = vmatprep.mubr.f32.mxu0 0.0
        %1231 = vmatmul.mubr.f32.gmra.mrb[0].mxu0 %v508
        %v1232 = vpop.f32.mrb[0].mxu0
        %v1233 = vadd.f32 %v1099, %v1232
        %v1234 = vpop.f32.mrb[0].mxu0
        %1235 = vmatprep.mubr.f32.mxu0 0.0
        %1236 = vmatmul.mubr.f32.gmra.mrb[0].mxu0 %v511
        %v1237 = vpop.f32.mrb[0].mxu0
        %v1238 = vadd.f32 %v1099, %v1237
        %v1239 = vpop.f32.mrb[0].mxu0
        %1240 = vmatprep.mubr.f32.mxu0 0.0
        %1241 = vmatmul.mubr.f32.gmra.mrb[0].mxu0 %v514
        %v1242 = vpop.f32.mrb[0].mxu0
        %v1243 = vadd.f32 %v1099, %v1242
        %v1244 = vpop.f32.mrb[0].mxu0
        %1245 = vmatprep.mubr.f32.mxu0 0.0
        %1246 = vmatmul.mubr.f32.gmra.mrb[0].mxu0 %v517
        %v1247 = vpop.f32.mrb[0].mxu0
        %v1248 = vadd.f32 %v1099, %v1247
        %v1249 = vpop.f32.mrb[0].mxu0
        %1250 = vmatprep.mubr.f32.mxu0 0.0
        %1251 = vmatmul.mubr.f32.gmra.mrb[0].mxu0 %v520
        %v1252 = vpop.f32.mrb[0].mxu0
        %v1253 = vadd.f32 %v1099, %v1252
        %v1254 = vpop.f32.mrb[0].mxu0
        %1255 = vmatprep.mubr.f32.mxu0 0.0
        %1256 = vmatmul.mubr.f32.gmra.mrb[0].mxu0 %v523
        %v1257 = vpop.f32.mrb[0].mxu0
        %v1258 = vadd.f32 %v1099, %v1257
        %v1259 = vpop.f32.mrb[0].mxu0
        %1260 = vmatprep.mubr.f32.mxu0 0.0
        %1261 = vmatmul.mubr.f32.gmra.mrb[0].mxu0 %v526
        %v1262 = vpop.f32.mrb[0].mxu0
        %v1263 = vadd.f32 %v1099, %v1262
        %v1264 = vpop.f32.mrb[0].mxu0
        %1265 = vmatprep.mubr.f32.mxu0 0.0
        %1266 = vmatmul.mubr.f32.gmra.mrb[0].mxu0 %v529
        %v1267 = vpop.f32.mrb[0].mxu0
        %v1268 = vadd.f32 %v1099, %v1267
        %v1269 = vpop.f32.mrb[0].mxu0
        %1270 = vmatprep.mubr.f32.mxu0 0.0
        %1271 = vmatmul.mubr.f32.gmra.mrb[0].mxu0 %v532
        %v1272 = vpop.f32.mrb[0].mxu0
        %v1273 = vadd.f32 %v1099, %v1272
        %v1274 = vpop.f32.mrb[0].mxu0
        %1275 = vmatprep.mubr.f32.mxu0 0.0
        %1276 = vmatmul.mubr.f32.gmra.mrb[0].mxu0 %v535
        %v1277 = vpop.f32.mrb[0].mxu0
        %v1278 = vadd.f32 %v1099, %v1277
        %v1279 = vpop.f32.mrb[0].mxu0
        %1280 = vmatprep.mubr.f32.mxu0 0.0
        %1281 = vmatmul.mubr.f32.gmra.mrb[0].mxu0 %v538
        %v1282 = vpop.f32.mrb[0].mxu0
        %v1283 = vadd.f32 %v1099, %v1282
        %v1284 = vpop.f32.mrb[0].mxu0
        %1285 = vmatprep.mubr.f32.mxu0 0.0
        %1286 = vmatmul.mubr.f32.gmra.mrb[0].mxu0 %v541
        %v1287 = vpop.f32.mrb[0].mxu0
        %v1288 = vadd.f32 %v1099, %v1287
        %v1289 = vpop.f32.mrb[0].mxu0
        %1290 = vmatprep.mubr.f32.mxu0 0.0
        %1291 = vmatmul.mubr.f32.gmra.mrb[0].mxu0 %v544
        %v1292 = vpop.f32.mrb[0].mxu0
        %v1293 = vadd.f32 %v1099, %v1292
        %v1294 = vpop.f32.mrb[0].mxu0
        %1295 = vmatprep.mubr.f32.mxu0 0.0
        %1296 = vmatmul.mubr.f32.gmra.mrb[0].mxu0 %v547
        %v1297 = vpop.f32.mrb[0].mxu0
        %v1298 = vadd.f32 %v1099, %v1297
        %v1299 = vpop.f32.mrb[0].mxu0
        %1300 = vmatprep.mubr.f32.mxu0 0.0
        %1301 = vmatmul.mubr.f32.gmra.mrb[0].mxu0 %v550
        %v1302 = vpop.f32.mrb[0].mxu0
        %v1303 = vadd.f32 %v1099, %v1302
        %v1304 = vpop.f32.mrb[0].mxu0
        %1305 = vmatprep.mubr.f32.mxu0 0.0
        %1306 = vmatmul.mubr.f32.gmra.mrb[0].mxu0 %v553
        %v1307 = vpop.f32.mrb[0].mxu0
        %v1308 = vadd.f32 %v1099, %v1307
        %v1309 = vpop.f32.mrb[0].mxu0
        %1310 = vmatprep.mubr.f32.mxu0 0.0
        %1311 = vmatmul.mubr.f32.gmra.mrb[0].mxu0 %v556
        %v1312 = vpop.f32.mrb[0].mxu0
        %v1313 = vadd.f32 %v1099, %v1312
        %v1314 = vpop.f32.mrb[0].mxu0
        %1315 = vmatprep.mubr.f32.mxu0 0.0
        %1316 = vmatmul.mubr.f32.gmra.mrb[0].mxu0 %v559
        %v1317 = vpop.f32.mrb[0].mxu0
        %v1318 = vadd.f32 %v1099, %v1317
        %v1319 = vpop.f32.mrb[0].mxu0
        %1320 = vmatprep.mubr.f32.mxu0 0.0
        %1321 = vmatmul.mubr.f32.gmra.mrb[0].mxu0 %v562
        %v1322 = vpop.f32.mrb[0].mxu0
        %v1323 = vadd.f32 %v1099, %v1322
        %v1324 = vpop.f32.mrb[0].mxu0
        %1325 = vdwg.mxu0
        %1326 = vst.msk [vmem:[%s422] sm:$0xff] %vm467, %v1168
        %1327 = vst.msk [vmem:[%s422 + $0x8] sm:$0xff] %vm467, %v1173
        %1328 = vst.msk [vmem:[%s422 + $0x10] sm:$0xff] %vm467, %v1178
        %1329 = vst.msk [vmem:[%s422 + $0x18] sm:$0xff] %vm467, %v1183
        %1330 = vst.msk [vmem:[%s422 + $0x20] sm:$0xff] %vm467, %v1188
        %1331 = vst.msk [vmem:[%s422 + $0x28] sm:$0xff] %vm467, %v1193
        %1332 = vst.msk [vmem:[%s422 + $0x30] sm:$0xff] %vm467, %v1198
        %1333 = vst.msk [vmem:[%s422 + $0x38] sm:$0xff] %vm467, %v1203
        %1334 = vst.msk [vmem:[%s422 + $0x40] sm:$0xff] %vm467, %v1208
        %1335 = vst.msk [vmem:[%s422 + $0x48] sm:$0xff] %vm467, %v1213
        %1336 = vst.msk [vmem:[%s422 + $0x50] sm:$0xff] %vm467, %v1218
        %1337 = vst.msk [vmem:[%s422 + $0x58] sm:$0xff] %vm467, %v1223
        %1338 = vst.msk [vmem:[%s422 + $0x60] sm:$0xff] %vm467, %v1228
        %1339 = vst.msk [vmem:[%s422 + $0x68] sm:$0xff] %vm467, %v1233
        %1340 = vst.msk [vmem:[%s422 + $0x70] sm:$0xff] %vm467, %v1238
        %1341 = vst.msk [vmem:[%s422 + $0x78] sm:$0xff] %vm467, %v1243
        %1342 = vst.msk [vmem:[%s422 + $0x80] sm:$0xff] %vm467, %v1248
        %1343 = vst.msk [vmem:[%s422 + $0x88] sm:$0xff] %vm467, %v1253
        %1344 = vst.msk [vmem:[%s422 + $0x90] sm:$0xff] %vm467, %v1258
        %1345 = vst.msk [vmem:[%s422 + $0x98] sm:$0xff] %vm467, %v1263
        %1346 = vst.msk [vmem:[%s422 + $0xa0] sm:$0xff] %vm467, %v1268
        %1347 = vst.msk [vmem:[%s422 + $0xa8] sm:$0xff] %vm467, %v1273
        %1348 = vst.msk [vmem:[%s422 + $0xb0] sm:$0xff] %vm467, %v1278
        %1349 = vst.msk [vmem:[%s422 + $0xb8] sm:$0xff] %vm467, %v1283
        %1350 = vst.msk [vmem:[%s422 + $0xc0] sm:$0xff] %vm467, %v1288
        %1351 = vst.msk [vmem:[%s422 + $0xc8] sm:$0xff] %vm467, %v1293
        %1352 = vst.msk [vmem:[%s422 + $0xd0] sm:$0xff] %vm467, %v1298
        %1353 = vst.msk [vmem:[%s422 + $0xd8] sm:$0xff] %vm467, %v1303
        %1354 = vst.msk [vmem:[%s422 + $0xe0] sm:$0xff] %vm467, %v1308
        %1355 = vst.msk [vmem:[%s422 + $0xe8] sm:$0xff] %vm467, %v1313
        %1356 = vst.msk [vmem:[%s422 + $0xf0] sm:$0xff] %vm467, %v1318
        %1357 = vst.msk [vmem:[%s422 + $0xf8] sm:$0xff] %vm467, %v1323
        %s1358 = smul.u32 32, %s26
        %p1359 = scmp.lt.s32.totalorder %s1358, 63
        %s1360 = scalar_select %p1359, %s1358, 63
        %s1361 = smul.addr %s1360, 8
        %s1362 = scalar_lea.vmem %s7, %s1361
        %s1363 = smul.u32 32, %s26
        %p1364 = scmp.lt.s32.totalorder %s1363, 63
        %s1365 = scalar_select %p1364, %s1363, 63
        %s1366 = smul.addr %s1365, 8
        %s1367 = scalar_lea.vmem %s8, %s1366
        %s1368 = smul.u32 32, %s26
        %p1369 = scmp.lt.s32.totalorder %s1368, 63
        %s1370 = scalar_select %p1369, %s1368, 63
        %s1371 = smul.addr %s1370, 8
        %s1372 = scalar_lea.vmem %s9, %s1371
        // Predicated region
        $region65: #{sba_block_forward.2} parent=47 // pred_check
          %p1373 = pneg %p196
        $region66: #{sba_block_forward.2} parent=47 // pred_check_branch
          %1375 = sbr.rel (%p1373) target = $region68
        $region67: #{sba_block_forward.2} parent=47 // pred_region
          %s1376 = smul.u32 32, %s26
        $region68: #{sba_block_forward.2} parent=47 // pred_fallthru
          _
        // Predicated region
        $region69: #{sba_block_forward.2} parent=47 // pred_check
          %p1377 = pneg %p222
        $region70: #{sba_block_forward.2} parent=47 // pred_check_branch
          %1379 = sbr.rel (%p1377) target = $region72
        $region71: #{sba_block_forward.2} parent=47 // pred_region
          %s1380 = smul.u32 32, %s26
        $region72: #{sba_block_forward.2} parent=47 // pred_fallthru
          _
        // Predicated region
        $region73: #{sba_block_forward.2} parent=47 // pred_check
          %p1381 = pneg %p248
        $region74: #{sba_block_forward.2} parent=47 // pred_check_branch
          %1383 = sbr.rel (%p1381) target = $region76
        $region75: #{sba_block_forward.2} parent=47 // pred_region
          %s1384 = smul.u32 32, %s26
        $region76: #{sba_block_forward.2} parent=47 // pred_fallthru
          _
      $region48: #{sba_block_forward.2} parent=5 // pred_fallthru
        _
      %p1385 = scmp.le.s32.totalorder 2, %s21
      // Predicated region
      $region77: #{sba_block_forward.2} parent=5 // pred_check
        %p1386 = pneg %p1385
      $region78: #{sba_block_forward.2} parent=5 // pred_check_branch
        %1388 = sbr.rel (%p1386) target = $region80
      $region79: #{sba_block_forward.2} parent=5 // pred_region
        %s1389 = ssub.s32 %s21, 2
        // Predicated region
        $region81: #{sba_block_forward.2} parent=79 // pred_check
          %p1390 = pneg %p202
        $region82: #{sba_block_forward.2} parent=79 // pred_check_branch
          %1392 = sbr.rel (%p1390) target = $region84
        $region83: #{sba_block_forward.2} parent=79 // pred_region
          %s1393 = smul.u32 32, %s27
          %p1394 = scmp.lt.s32.totalorder %s1393, 63
          %s1395 = scalar_select %p1394, %s1393, 63
          %s1396 = smul.addr %s1395, 8
          %s1397 = scalar_lea.vmem %s7, %s1396
        $region84: #{sba_block_forward.2} parent=79 // pred_fallthru
          _
        // Predicated region
        $region85: #{sba_block_forward.2} parent=79 // pred_check
          %p1398 = pneg %p228
        $region86: #{sba_block_forward.2} parent=79 // pred_check_branch
          %1400 = sbr.rel (%p1398) target = $region88
        $region87: #{sba_block_forward.2} parent=79 // pred_region
          %s1401 = smul.u32 32, %s27
          %p1402 = scmp.lt.s32.totalorder %s1401, 63
          %s1403 = scalar_select %p1402, %s1401, 63
          %s1404 = smul.addr %s1403, 8
          %s1405 = scalar_lea.vmem %s8, %s1404
        $region88: #{sba_block_forward.2} parent=79 // pred_fallthru
          _
        // Predicated region
        $region89: #{sba_block_forward.2} parent=79 // pred_check
          %p1406 = pneg %p254
        $region90: #{sba_block_forward.2} parent=79 // pred_check_branch
          %1408 = sbr.rel (%p1406) target = $region92
        $region91: #{sba_block_forward.2} parent=79 // pred_region
          %s1409 = smul.u32 32, %s27
          %p1410 = scmp.lt.s32.totalorder %s1409, 63
          %s1411 = scalar_select %p1410, %s1409, 63
          %s1412 = smul.addr %s1411, 8
          %s1413 = scalar_lea.vmem %s9, %s1412
        $region92: #{sba_block_forward.2} parent=79 // pred_fallthru
          _
      $region80: #{sba_block_forward.2} parent=5 // pred_fallthru
        _
    $region6: #{sba_block_forward.2} parent=1 // loop_footer
      %s25 = sadd.s32 1, %s21
    $region7: #{sba_block_forward.2} parent=1 // loop_footer_branch
      %20 = sbr.rel target = $region3
    $region8: #{sba_block_forward.2} parent=1 // loop_exit
      _
    %1414 = vsyncpa [#allocation3], 1
    %s1415 = scalar_lea.sflag [#allocation3], 1
    %1416 = vsyncpa %s1415, 1
    %1417 = vsyncpa [#allocation5], 1
    %1418 = vsyncpa [#allocation8], 1

// kernel: sba_block_forward.3
$region0: #{sba_block_forward.3}
  #allocation0 [shape = 'u32[]', space=smem, size = 0x4, offset = 0x4, fixed_abs, tag = 'smem constant byte address 0x4 - core index']
  #allocation1 [shape = 'u32[144,128]{1,0:T(1,128)}', space=vmem, size = 0x12000, scoped, tag = 'internal scratch']
  #allocation2 [shape = 'f32[256,1]{1,0:T(8,128)}', space=vmem, size = 0x20000, scoped, tag = 'scratch operand']
  #allocation3 [shape = 'f32[256,1]{1,0:T(8,128)}', space=vmem, size = 0x20000, scoped, tag = 'scratch operand']
  #allocation4 [shape = 'f32[256,32]{1,0:T(8,128)}', space=vmem, size = 0x20000, scoped, tag = 'scratch operand']
  #allocation5 [shape = 'f32[1,1]{1,0:T(1,128)S(1)}', space=vmem, size = 0x200, scoped, tag = 'scoped memory for sba_block_forward.3']
  %s0 = inlined_call_operand.vmem [shape: f32[2,256,8], index: 0, kind: input, shape index: {}]
  %s1 = inlined_call_operand.vmem [shape: f32[2,256,8], index: 1, kind: input, shape index: {}]
  %s2 = inlined_call_operand.vmem [shape: f32[2,256,32], index: 2, kind: input, shape index: {}]
  %s3 = inlined_call_operand.vmem [shape: f32[2,256,32], index: 3, kind: input, shape index: {}]
  %s4 = inlined_call_operand.<no memory space> [shape: f32[1,1], index: 4, kind: input, shape index: {}]
  %s5 = inlined_call_operand.hbm [shape: f32[2,256,32], index: 5, kind: output, shape index: {}]
  %s6 = sld [smem:[#allocation0]]
  $region61: #{sba_block_forward.3} parent=0
    _
  %s8 = ssub.s32 1, %s6
  %s9 = scalar_select 0, %s8, %s6
  %v10 = vstv %s4
  %11 = vst [vmem:[#allocation5] sm:$0x1] %v10
  $region1: #{sba_block_forward.3} parent=0
    #allocation6 [shape = 'u8[262144]{0}', space=vmem, size = 0x40000, scoped, tag = 'output window, operand 0']
    #allocation7 [shape = 's32[2]{0}', space=sflag, size = 0x8, scoped, tag = 'scoped memory for sba_block_forward.3']
    %12 = vsyncpa [#allocation7], 0
    %s13 = scalar_lea.sflag [#allocation7], 1
    %14 = vsyncpa %s13, 0
    loop: start=0, step=1, limit=4
    $region2: #{sba_block_forward.3} parent=1 // loop_pre_header
      _
    $region3: #{sba_block_forward.3} parent=1 // loop_header
      %s16 = sphi 0, %s20
      %p17 = scmp.ge.s32.totalorder %s16, 4
      %s23 = sphi 0, %s42
      %s24 = sphi 0, %s38
      %s25 = sphi 0, %s34
      %s26 = sphi 0, %s23
      %s27 = sphi 0, %s24
      %s28 = sphi 0, %s25
      %s29 = sphi 0, %s26
      %s30 = sphi 0, %s27
      %s31 = sphi 0, %s28
      %s47 = sphi 0, %s49
      %s50 = sphi 0, %s47
      %s51 = sphi 0, %s50
      %s67 = sphi 0, %s51
      %s75 = sphi 0, %s77
      %s78 = sphi 0, %s75
      %s79 = sphi 0, %s78
      %s95 = sphi 0, %s79
      %s103 = sphi 0, %s105
      %s106 = sphi 0, %s103
      %s107 = sphi 0, %s106
      %s123 = sphi 0, %s107
      %s131 = sphi 0, %s133
      %s134 = sphi 0, %s131
      %s135 = sphi 0, %s134
      %s151 = sphi 0, %s135
      %s155 = sphi 0, %s155
      %s157 = sphi 0, %s155
      %s158 = sphi 0, %s157
      %s172 = sphi 0, %s158
      %s180 = sphi 0, %s182
      %s183 = sphi 0, %s180
      %s184 = sphi 0, %s183
      %s200 = sphi 0, %s184
    $region4: #{sba_block_forward.3} parent=1 // loop_header_branch
      %19 = sbr.rel (%p17) target = $region8
    $region5: #{sba_block_forward.3} parent=1 // loop_body
      %s21 = ssub.s32 %s16, 1
      %s22 = ssub.s32 %s16, 2
      %s32 = sadd.s32 1, %s25
      %p33 = scmp.ge.s32.totalorder %s32, 1
      %s34 = scalar_select %p33, 0, %s32
      %s35 = sadd.s32 1, %s24
      %s36 = scalar_select %p33, %s35, %s24
      %p37 = scmp.ge.s32.totalorder %s36, 1
      %s38 = scalar_select %p37, 0, %s36
      %s39 = sadd.s32 1, %s23
      %s40 = scalar_select %p37, %s39, %s23
      %p41 = scmp.ge.s32.totalorder %s40, 2
      %s42 = scalar_select %p41, 0, %s40
      %s43 = ssub.s32 %s23, %s42
      %s44 = ssub.s32 %s24, %s38
      %s45 = sor.u32 %s43, %s44
      %p46 = scmp.eq.s32.totalorder %s45, 0
      %s48 = sadd.s32 %s47, 1
      %s49 = scalar_select %p46, %s47, %s48
      %p52 = pneg %p46
      %p53 = scmp.eq.s32.totalorder %s16, 1
      %p54 = por %p52, %p53
      %p55 = scmp.ne.s32.totalorder %s47, %s50
      %p56 = scmp.eq.s32.totalorder %s16, 0
      %p57 = por %p55, %p56
      %p58 = scmp.ne.s32.totalorder %s47, %s50
      %p59 = scmp.eq.s32.totalorder %s21, 1
      %p60 = por %p58, %p59
      %p61 = scmp.ne.s32.totalorder %s50, %s51
      %p62 = scmp.eq.s32.totalorder %s21, 0
      %p63 = por %p61, %p62
      %p64 = scmp.ne.s32.totalorder %s50, %s51
      %p65 = scmp.eq.s32.totalorder %s22, 1
      %p66 = por %p64, %p65
      %p68 = scmp.ne.s32.totalorder %s51, %s67
      %p69 = scmp.eq.s32.totalorder %s22, 0
      %p70 = por %p68, %p69
      %s71 = ssub.s32 %s23, %s42
      %s72 = ssub.s32 %s25, %s34
      %s73 = sor.u32 %s71, %s72
      %p74 = scmp.eq.s32.totalorder %s73, 0
      %s76 = sadd.s32 %s75, 1
      %s77 = scalar_select %p74, %s75, %s76
      %p80 = pneg %p74
      %p81 = scmp.eq.s32.totalorder %s16, 1
      %p82 = por %p80, %p81
      %p83 = scmp.ne.s32.totalorder %s75, %s78
      %p84 = scmp.eq.s32.totalorder %s16, 0
      %p85 = por %p83, %p84
      %p86 = scmp.ne.s32.totalorder %s75, %s78
      %p87 = scmp.eq.s32.totalorder %s21, 1
      %p88 = por %p86, %p87
      %p89 = scmp.ne.s32.totalorder %s78, %s79
      %p90 = scmp.eq.s32.totalorder %s21, 0
      %p91 = por %p89, %p90
      %p92 = scmp.ne.s32.totalorder %s78, %s79
      %p93 = scmp.eq.s32.totalorder %s22, 1
      %p94 = por %p92, %p93
      %p96 = scmp.ne.s32.totalorder %s79, %s95
      %p97 = scmp.eq.s32.totalorder %s22, 0
      %p98 = por %p96, %p97
      %s99 = ssub.s32 %s23, %s42
      %s100 = ssub.s32 %s25, %s34
      %s101 = sor.u32 %s99, %s100
      %p102 = scmp.eq.s32.totalorder %s101, 0
      %s104 = sadd.s32 %s103, 1
      %s105 = scalar_select %p102, %s103, %s104
      %p108 = pneg %p102
      %p109 = scmp.eq.s32.totalorder %s16, 1
      %p110 = por %p108, %p109
      %p111 = scmp.ne.s32.totalorder %s103, %s106
      %p112 = scmp.eq.s32.totalorder %s16, 0
      %p113 = por %p111, %p112
      %p114 = scmp.ne.s32.totalorder %s103, %s106
      %p115 = scmp.eq.s32.totalorder %s21, 1
      %p116 = por %p114, %p115
      %p117 = scmp.ne.s32.totalorder %s106, %s107
      %p118 = scmp.eq.s32.totalorder %s21, 0
      %p119 = por %p117, %p118
      %p120 = scmp.ne.s32.totalorder %s106, %s107
      %p121 = scmp.eq.s32.totalorder %s22, 1
      %p122 = por %p120, %p121
      %p124 = scmp.ne.s32.totalorder %s107, %s123
      %p125 = scmp.eq.s32.totalorder %s22, 0
      %p126 = por %p124, %p125
      %s127 = ssub.s32 %s23, %s42
      %s128 = ssub.s32 %s24, %s38
      %s129 = sor.u32 %s127, %s128
      %p130 = scmp.eq.s32.totalorder %s129, 0
      %s132 = sadd.s32 %s131, 1
      %s133 = scalar_select %p130, %s131, %s132
      %p136 = pneg %p130
      %p137 = scmp.eq.s32.totalorder %s16, 1
      %p138 = por %p136, %p137
      %p139 = scmp.ne.s32.totalorder %s131, %s134
      %p140 = scmp.eq.s32.totalorder %s16, 0
      %p141 = por %p139, %p140
      %p142 = scmp.ne.s32.totalorder %s131, %s134
      %p143 = scmp.eq.s32.totalorder %s21, 1
      %p144 = por %p142, %p143
      %p145 = scmp.ne.s32.totalorder %s134, %s135
      %p146 = scmp.eq.s32.totalorder %s21, 0
      %p147 = por %p145, %p146
      %p148 = scmp.ne.s32.totalorder %s134, %s135
      %p149 = scmp.eq.s32.totalorder %s22, 1
      %p150 = por %p148, %p149
      %p152 = scmp.ne.s32.totalorder %s135, %s151
      %p153 = scmp.eq.s32.totalorder %s22, 0
      %p154 = por %p152, %p153
      %s156 = sadd.s32 %s155, 1
      %p159 = scmp.eq.s32.totalorder %s16, 1
      %p160 = scmp.ne.s32.totalorder %s155, %s157
      %p161 = scmp.eq.s32.totalorder %s16, 0
      %p162 = por %p160, %p161
      %p163 = scmp.ne.s32.totalorder %s155, %s157
      %p164 = scmp.eq.s32.totalorder %s21, 1
      %p165 = por %p163, %p164
      %p166 = scmp.ne.s32.totalorder %s157, %s158
      %p167 = scmp.eq.s32.totalorder %s21, 0
      %p168 = por %p166, %p167
      %p169 = scmp.ne.s32.totalorder %s157, %s158
      %p170 = scmp.eq.s32.totalorder %s22, 1
      %p171 = por %p169, %p170
      %p173 = scmp.ne.s32.totalorder %s158, %s172
      %p174 = scmp.eq.s32.totalorder %s22, 0
      %p175 = por %p173, %p174
      %s176 = ssub.s32 %s23, %s42
      %s177 = ssub.s32 %s24, %s38
      %s178 = sor.u32 %s176, %s177
      %p179 = scmp.eq.s32.totalorder %s178, 0
      %s181 = sadd.s32 %s180, 1
      %s182 = scalar_select %p179, %s180, %s181
      %p185 = pneg %p179
      %p186 = scmp.eq.s32.totalorder %s16, 1
      %p187 = por %p185, %p186
      %p188 = scmp.ne.s32.totalorder %s180, %s183
      %p189 = scmp.eq.s32.totalorder %s16, 0
      %p190 = por %p188, %p189
      %p191 = scmp.ne.s32.totalorder %s180, %s183
      %p192 = scmp.eq.s32.totalorder %s21, 1
      %p193 = por %p191, %p192
      %p194 = scmp.ne.s32.totalorder %s183, %s184
      %p195 = scmp.eq.s32.totalorder %s21, 0
      %p196 = por %p194, %p195
      %p197 = scmp.ne.s32.totalorder %s183, %s184
      %p198 = scmp.eq.s32.totalorder %s22, 1
      %p199 = por %p197, %p198
      %p201 = scmp.ne.s32.totalorder %s184, %s200
      %p202 = scmp.eq.s32.totalorder %s22, 0
      %p203 = por %p201, %p202
      %p204 = scmp.le.s32.totalorder 1, %s16
      %p205 = scmp.lt.s32.totalorder %s16, 3
      %p206 = pnand %p204, %p205
      %p207 = pneg %p206
      // Predicated region
      $region9: #{sba_block_forward.3} parent=5 // pred_check
        _
      $region10: #{sba_block_forward.3} parent=5 // pred_check_branch
        %209 = sbr.rel (%p206) target = $region12
      $region11: #{sba_block_forward.3} parent=5 // pred_region
        %s210 = ssub.s32 %s16, 1
        // Predicated region
        $region13: #{sba_block_forward.3} parent=11 // pred_check
          %p211 = pneg %p168
        $region14: #{sba_block_forward.3} parent=11 // pred_check_branch
          %213 = sbr.rel (%p211) target = $region16
        $region15: #{sba_block_forward.3} parent=11 // pred_region
          _
        $region16: #{sba_block_forward.3} parent=11 // pred_fallthru
          _
      $region12: #{sba_block_forward.3} parent=5 // pred_fallthru
        _
      %p214 = scmp.lt.s32.totalorder %s16, 2
      // Predicated region
      $region17: #{sba_block_forward.3} parent=5 // pred_check
        %p215 = pneg %p214
      $region18: #{sba_block_forward.3} parent=5 // pred_check_branch
        %217 = sbr.rel (%p215) target = $region20
      $region19: #{sba_block_forward.3} parent=5 // pred_region
        // Predicated region
        $region21: #{sba_block_forward.3} parent=19 // pred_check
          %p218 = pneg %p57
        $region22: #{sba_block_forward.3} parent=19 // pred_check_branch
          %220 = sbr.rel (%p218) target = $region24
        $region23: #{sba_block_forward.3} parent=19 // pred_region
          %s221 = smul.u32 32, %s24
          %p222 = scmp.lt.s32.totalorder %s23, 1
          %s223 = scalar_select %p222, %s23, 1
          %p224 = scmp.lt.s32.totalorder %s221, 31
          %s225 = scalar_select %p224, %s221, 31
          %s226 = smul.addr %s223, 32
          %s227 = sadd.s32 %s225, %s226
          %s228 = smul.addr %s227, 8
          %s229 = scalar_lea.vmem %s0, %s228
          %s230 = smul.u32 32, %s24
        $region24: #{sba_block_forward.3} parent=19 // pred_fallthru
          _
        // Predicated region
        $region25: #{sba_block_forward.3} parent=19 // pred_check
          %p231 = pneg %p85
        $region26: #{sba_block_forward.3} parent=19 // pred_check_branch
          %233 = sbr.rel (%p231) target = $region28
        $region27: #{sba_block_forward.3} parent=19 // pred_region
          %s234 = smul.u32 32, %s25
          %p235 = scmp.lt.s32.totalorder %s23, 1
          %s236 = scalar_select %p235, %s23, 1
          %p237 = scmp.lt.s32.totalorder %s234, 31
          %s238 = scalar_select %p237, %s234, 31
          %s239 = smul.addr %s236, 32
          %s240 = sadd.s32 %s238, %s239
          %s241 = smul.addr %s240, 8
          %s242 = scalar_lea.vmem %s1, %s241
          %s243 = smul.u32 32, %s25
        $region28: #{sba_block_forward.3} parent=19 // pred_fallthru
          _
        // Predicated region
        $region29: #{sba_block_forward.3} parent=19 // pred_check
          %p244 = pneg %p113
        $region30: #{sba_block_forward.3} parent=19 // pred_check_branch
          %246 = sbr.rel (%p244) target = $region32
        $region31: #{sba_block_forward.3} parent=19 // pred_region
          %s247 = smul.u32 32, %s25
          %p248 = scmp.lt.s32.totalorder %s23, 1
          %s249 = scalar_select %p248, %s23, 1
          %p250 = scmp.lt.s32.totalorder %s247, 31
          %s251 = scalar_select %p250, %s247, 31
          %s252 = smul.addr %s249, 32
          %s253 = sadd.s32 %s251, %s252
          %s254 = smul.addr %s253, 8
          %s255 = scalar_lea.vmem %s2, %s254
          %s256 = smul.u32 32, %s25
        $region32: #{sba_block_forward.3} parent=19 // pred_fallthru
          _
        // Predicated region
        $region33: #{sba_block_forward.3} parent=19 // pred_check
          %p257 = pneg %p141
        $region34: #{sba_block_forward.3} parent=19 // pred_check_branch
          %259 = sbr.rel (%p257) target = $region36
        $region35: #{sba_block_forward.3} parent=19 // pred_region
          %s260 = smul.u32 32, %s24
          %p261 = scmp.lt.s32.totalorder %s23, 1
          %s262 = scalar_select %p261, %s23, 1
          %p263 = scmp.lt.s32.totalorder %s260, 31
          %s264 = scalar_select %p263, %s260, 31
          %s265 = smul.addr %s262, 32
          %s266 = sadd.s32 %s264, %s265
          %s267 = smul.addr %s266, 8
          %s268 = scalar_lea.vmem %s3, %s267
          %s269 = smul.u32 32, %s24
        $region36: #{sba_block_forward.3} parent=19 // pred_fallthru
          _
      $region20: #{sba_block_forward.3} parent=5 // pred_fallthru
        _
      %p270 = scmp.le.s32.totalorder 1, %s16
      %p271 = scmp.lt.s32.totalorder %s16, 3
      %p272 = pnand %p270, %p271
      %p273 = pneg %p272
      // Predicated region
      $region37: #{sba_block_forward.3} parent=5 // pred_check
        _
      $region38: #{sba_block_forward.3} parent=5 // pred_check_branch
        %275 = sbr.rel (%p272) target = $region40
      $region39: #{sba_block_forward.3} parent=5 // pred_region
        %s276 = ssub.s32 %s16, 1
        %s277 = smul.u32 32, %s27
        %p278 = scmp.lt.s32.totalorder %s26, 1
        %s279 = scalar_select %p278, %s26, 1
        %p280 = scmp.lt.s32.totalorder %s277, 31
        %s281 = scalar_select %p280, %s277, 31
        %s282 = smul.addr %s279, 32
        %s283 = sadd.s32 %s281, %s282
        %s284 = smul.addr %s283, 8
        %s285 = scalar_lea.vmem %s0, %s284
        %p286 = pneg %p63
        %p287 = pneg %p60
        %s288 = smul.u32 32, %s28
        %p289 = scmp.lt.s32.totalorder %s26, 1
        %s290 = scalar_select %p289, %s26, 1
        %p291 = scmp.lt.s32.totalorder %s288, 31
        %s292 = scalar_select %p291, %s288, 31
        %s293 = smul.addr %s290, 32
        %s294 = sadd.s32 %s292, %s293
        %s295 = smul.addr %s294, 8
        %s296 = scalar_lea.vmem %s1, %s295
        %p297 = pneg %p91
        %p298 = pneg %p88
        %s299 = smul.u32 32, %s28
        %p300 = scmp.lt.s32.totalorder %s26, 1
        %s301 = scalar_select %p300, %s26, 1
        %p302 = scmp.lt.s32.totalorder %s299, 31
        %s303 = scalar_select %p302, %s299, 31
        %s304 = smul.addr %s301, 32
        %s305 = sadd.s32 %s303, %s304
        %s306 = smul.addr %s305, 8
        %s307 = scalar_lea.vmem %s2, %s306
        %p308 = pneg %p119
        %p309 = pneg %p116
        %s310 = smul.u32 32, %s27
        %p311 = scmp.lt.s32.totalorder %s26, 1
        %s312 = scalar_select %p311, %s26, 1
        %p313 = scmp.lt.s32.totalorder %s310, 31
        %s314 = scalar_select %p313, %s310, 31
        %s315 = smul.addr %s312, 32
        %s316 = sadd.s32 %s314, %s315
        %s317 = smul.addr %s316, 8
        %s318 = scalar_lea.vmem %s3, %s317
        %p319 = pneg %p147
        %p320 = pneg %p144
        %p321 = pneg %p168
        %p322 = pneg %p165
        %p323 = pneg %p196
        %p324 = pneg %p193
        %s325 = sand.u32 %s183, 1
        %s326 = scalar_lea.sflag [#allocation7], %s325
        %s327 = sand.u32 %s183, 1
        %s328 = smul.addr %s327, 256
        %s329 = scalar_lea.vmem [#allocation6], %s328
        %s330 = smul.u32 32, %s27
        %p331 = scmp.lt.s32.totalorder %s26, 1
        %s332 = scalar_select %p331, %s26, 1
        %p333 = scmp.lt.s32.totalorder %s330, 31
        %s334 = scalar_select %p333, %s330, 31
        %s335 = smul.addr %s332, 32
        %s336 = sadd.s32 %s334, %s335
        %s337 = smul.addr %s336, 8
        %s338 = scalar_lea.vmem %s0, %s337
        %s339 = smul.u32 32, %s27
        %s340 = smul.u32 32, %s28
        %p341 = scmp.lt.s32.totalorder %s26, 1
        %s342 = scalar_select %p341, %s26, 1
        %p343 = scmp.lt.s32.totalorder %s340, 31
        %s344 = scalar_select %p343, %s340, 31
        %s345 = smul.addr %s342, 32
        %s346 = sadd.s32 %s344, %s345
        %s347 = smul.addr %s346, 8
        %s348 = scalar_lea.vmem %s1, %s347
        %s349 = smul.u32 32, %s28
        %s350 = smul.u32 32, %s28
        %p351 = scmp.lt.s32.totalorder %s26, 1
        %s352 = scalar_select %p351, %s26, 1
        %p353 = scmp.lt.s32.totalorder %s350, 31
        %s354 = scalar_select %p353, %s350, 31
        %s355 = smul.addr %s352, 32
        %s356 = sadd.s32 %s354, %s355
        %s357 = smul.addr %s356, 8
        %s358 = scalar_lea.vmem %s2, %s357
        %s359 = smul.u32 32, %s28
        %s360 = smul.u32 32, %s27
        %p361 = scmp.lt.s32.totalorder %s26, 1
        %s362 = scalar_select %p361, %s26, 1
        %p363 = scmp.lt.s32.totalorder %s360, 31
        %s364 = scalar_select %p363, %s360, 31
        %s365 = smul.addr %s362, 32
        %s366 = sadd.s32 %s364, %s365
        %s367 = smul.addr %s366, 8
        %s368 = scalar_lea.vmem %s3, %s367
        %s369 = smul.u32 32, %s27
        %s370 = smul.u32 32, %s27
        %p371 = scmp.eq.s32.totalorder %s28, 0
        // Predicated region
        $region41: #{sba_block_forward.3} parent=39 // pred_check
          %p372 = pneg %p371
        $region42: #{sba_block_forward.3} parent=39 // pred_check_branch
          %374 = sbr.rel (%p372) target = $region44
        $region43: #{sba_block_forward.3} parent=39 // pred_region
          %vm375 = vcmask 7168
          %376 = vst.msk [vmem:[#allocation2] sm:$0xff] %vm375, -inf
          %377 = vst.msk [vmem:[#allocation2 + $0x8] sm:$0xff] %vm375, -inf
          %378 = vst.msk [vmem:[#allocation2 + $0x10] sm:$0xff] %vm375, -inf
          %379 = vst.msk [vmem:[#allocation2 + $0x18] sm:$0xff] %vm375, -inf
          %380 = vst.msk [vmem:[#allocation2 + $0x20] sm:$0xff] %vm375, -inf
          %381 = vst.msk [vmem:[#allocation2 + $0x28] sm:$0xff] %vm375, -inf
          %382 = vst.msk [vmem:[#allocation2 + $0x30] sm:$0xff] %vm375, -inf
          %383 = vst.msk [vmem:[#allocation2 + $0x38] sm:$0xff] %vm375, -inf
          %384 = vst.msk [vmem:[#allocation2 + $0x40] sm:$0xff] %vm375, -inf
          %385 = vst.msk [vmem:[#allocation2 + $0x48] sm:$0xff] %vm375, -inf
          %386 = vst.msk [vmem:[#allocation2 + $0x50] sm:$0xff] %vm375, -inf
          %387 = vst.msk [vmem:[#allocation2 + $0x58] sm:$0xff] %vm375, -inf
          %388 = vst.msk [vmem:[#allocation2 + $0x60] sm:$0xff] %vm375, -inf
          %389 = vst.msk [vmem:[#allocation2 + $0x68] sm:$0xff] %vm375, -inf
          %390 = vst.msk [vmem:[#allocation2 + $0x70] sm:$0xff] %vm375, -inf
          %391 = vst.msk [vmem:[#allocation2 + $0x78] sm:$0xff] %vm375, -inf
          %392 = vst.msk [vmem:[#allocation2 + $0x80] sm:$0xff] %vm375, -inf
          %393 = vst.msk [vmem:[#allocation2 + $0x88] sm:$0xff] %vm375, -inf
          %394 = vst.msk [vmem:[#allocation2 + $0x90] sm:$0xff] %vm375, -inf
          %395 = vst.msk [vmem:[#allocation2 + $0x98] sm:$0xff] %vm375, -inf
          %396 = vst.msk [vmem:[#allocation2 + $0xa0] sm:$0xff] %vm375, -inf
          %397 = vst.msk [vmem:[#allocation2 + $0xa8] sm:$0xff] %vm375, -inf
          %398 = vst.msk [vmem:[#allocation2 + $0xb0] sm:$0xff] %vm375, -inf
          %399 = vst.msk [vmem:[#allocation2 + $0xb8] sm:$0xff] %vm375, -inf
          %400 = vst.msk [vmem:[#allocation2 + $0xc0] sm:$0xff] %vm375, -inf
          %401 = vst.msk [vmem:[#allocation2 + $0xc8] sm:$0xff] %vm375, -inf
          %402 = vst.msk [vmem:[#allocation2 + $0xd0] sm:$0xff] %vm375, -inf
          %403 = vst.msk [vmem:[#allocation2 + $0xd8] sm:$0xff] %vm375, -inf
          %404 = vst.msk [vmem:[#allocation2 + $0xe0] sm:$0xff] %vm375, -inf
          %405 = vst.msk [vmem:[#allocation2 + $0xe8] sm:$0xff] %vm375, -inf
          %406 = vst.msk [vmem:[#allocation2 + $0xf0] sm:$0xff] %vm375, -inf
          %407 = vst.msk [vmem:[#allocation2 + $0xf8] sm:$0xff] %vm375, -inf
          %408 = vst.msk [vmem:[#allocation3] sm:$0xff] %vm375, 0.0
          %409 = vst.msk [vmem:[#allocation3 + $0x8] sm:$0xff] %vm375, 0.0
          %410 = vst.msk [vmem:[#allocation3 + $0x10] sm:$0xff] %vm375, 0.0
          %411 = vst.msk [vmem:[#allocation3 + $0x18] sm:$0xff] %vm375, 0.0
          %412 = vst.msk [vmem:[#allocation3 + $0x20] sm:$0xff] %vm375, 0.0
          %413 = vst.msk [vmem:[#allocation3 + $0x28] sm:$0xff] %vm375, 0.0
          %414 = vst.msk [vmem:[#allocation3 + $0x30] sm:$0xff] %vm375, 0.0
          %415 = vst.msk [vmem:[#allocation3 + $0x38] sm:$0xff] %vm375, 0.0
          %416 = vst.msk [vmem:[#allocation3 + $0x40] sm:$0xff] %vm375, 0.0
          %417 = vst.msk [vmem:[#allocation3 + $0x48] sm:$0xff] %vm375, 0.0
          %418 = vst.msk [vmem:[#allocation3 + $0x50] sm:$0xff] %vm375, 0.0
          %419 = vst.msk [vmem:[#allocation3 + $0x58] sm:$0xff] %vm375, 0.0
          %420 = vst.msk [vmem:[#allocation3 + $0x60] sm:$0xff] %vm375, 0.0
          %421 = vst.msk [vmem:[#allocation3 + $0x68] sm:$0xff] %vm375, 0.0
          %422 = vst.msk [vmem:[#allocation3 + $0x70] sm:$0xff] %vm375, 0.0
          %423 = vst.msk [vmem:[#allocation3 + $0x78] sm:$0xff] %vm375, 0.0
          %424 = vst.msk [vmem:[#allocation3 + $0x80] sm:$0xff] %vm375, 0.0
          %425 = vst.msk [vmem:[#allocation3 + $0x88] sm:$0xff] %vm375, 0.0
          %426 = vst.msk [vmem:[#allocation3 + $0x90] sm:$0xff] %vm375, 0.0
          %427 = vst.msk [vmem:[#allocation3 + $0x98] sm:$0xff] %vm375, 0.0
          %428 = vst.msk [vmem:[#allocation3 + $0xa0] sm:$0xff] %vm375, 0.0
          %429 = vst.msk [vmem:[#allocation3 + $0xa8] sm:$0xff] %vm375, 0.0
          %430 = vst.msk [vmem:[#allocation3 + $0xb0] sm:$0xff] %vm375, 0.0
          %431 = vst.msk [vmem:[#allocation3 + $0xb8] sm:$0xff] %vm375, 0.0
          %432 = vst.msk [vmem:[#allocation3 + $0xc0] sm:$0xff] %vm375, 0.0
          %433 = vst.msk [vmem:[#allocation3 + $0xc8] sm:$0xff] %vm375, 0.0
          %434 = vst.msk [vmem:[#allocation3 + $0xd0] sm:$0xff] %vm375, 0.0
          %435 = vst.msk [vmem:[#allocation3 + $0xd8] sm:$0xff] %vm375, 0.0
          %436 = vst.msk [vmem:[#allocation3 + $0xe0] sm:$0xff] %vm375, 0.0
          %437 = vst.msk [vmem:[#allocation3 + $0xe8] sm:$0xff] %vm375, 0.0
          %438 = vst.msk [vmem:[#allocation3 + $0xf0] sm:$0xff] %vm375, 0.0
          %439 = vst.msk [vmem:[#allocation3 + $0xf8] sm:$0xff] %vm375, 0.0
          %vm440 = vcmask 261120
          %441 = vst.msk [vmem:[#allocation4] sm:$0xff] %vm440, 0.0
          %442 = vst.msk [vmem:[#allocation4 + $0x8] sm:$0xff] %vm440, 0.0
          %443 = vst.msk [vmem:[#allocation4 + $0x10] sm:$0xff] %vm440, 0.0
          %444 = vst.msk [vmem:[#allocation4 + $0x18] sm:$0xff] %vm440, 0.0
          %445 = vst.msk [vmem:[#allocation4 + $0x20] sm:$0xff] %vm440, 0.0
          %446 = vst.msk [vmem:[#allocation4 + $0x28] sm:$0xff] %vm440, 0.0
          %447 = vst.msk [vmem:[#allocation4 + $0x30] sm:$0xff] %vm440, 0.0
          %448 = vst.msk [vmem:[#allocation4 + $0x38] sm:$0xff] %vm440, 0.0
          %449 = vst.msk [vmem:[#allocation4 + $0x40] sm:$0xff] %vm440, 0.0
          %450 = vst.msk [vmem:[#allocation4 + $0x48] sm:$0xff] %vm440, 0.0
          %451 = vst.msk [vmem:[#allocation4 + $0x50] sm:$0xff] %vm440, 0.0
          %452 = vst.msk [vmem:[#allocation4 + $0x58] sm:$0xff] %vm440, 0.0
          %453 = vst.msk [vmem:[#allocation4 + $0x60] sm:$0xff] %vm440, 0.0
          %454 = vst.msk [vmem:[#allocation4 + $0x68] sm:$0xff] %vm440, 0.0
          %455 = vst.msk [vmem:[#allocation4 + $0x70] sm:$0xff] %vm440, 0.0
          %456 = vst.msk [vmem:[#allocation4 + $0x78] sm:$0xff] %vm440, 0.0
          %457 = vst.msk [vmem:[#allocation4 + $0x80] sm:$0xff] %vm440, 0.0
          %458 = vst.msk [vmem:[#allocation4 + $0x88] sm:$0xff] %vm440, 0.0
          %459 = vst.msk [vmem:[#allocation4 + $0x90] sm:$0xff] %vm440, 0.0
          %460 = vst.msk [vmem:[#allocation4 + $0x98] sm:$0xff] %vm440, 0.0
          %461 = vst.msk [vmem:[#allocation4 + $0xa0] sm:$0xff] %vm440, 0.0
          %462 = vst.msk [vmem:[#allocation4 + $0xa8] sm:$0xff] %vm440, 0.0
          %463 = vst.msk [vmem:[#allocation4 + $0xb0] sm:$0xff] %vm440, 0.0
          %464 = vst.msk [vmem:[#allocation4 + $0xb8] sm:$0xff] %vm440, 0.0
          %465 = vst.msk [vmem:[#allocation4 + $0xc0] sm:$0xff] %vm440, 0.0
          %466 = vst.msk [vmem:[#allocation4 + $0xc8] sm:$0xff] %vm440, 0.0
          %467 = vst.msk [vmem:[#allocation4 + $0xd0] sm:$0xff] %vm440, 0.0
          %468 = vst.msk [vmem:[#allocation4 + $0xd8] sm:$0xff] %vm440, 0.0
          %469 = vst.msk [vmem:[#allocation4 + $0xe0] sm:$0xff] %vm440, 0.0
          %470 = vst.msk [vmem:[#allocation4 + $0xe8] sm:$0xff] %vm440, 0.0
          %471 = vst.msk [vmem:[#allocation4 + $0xf0] sm:$0xff] %vm440, 0.0
          %472 = vst.msk [vmem:[#allocation4 + $0xf8] sm:$0xff] %vm440, 0.0
        $region44: #{sba_block_forward.3} parent=39 // pred_fallthru
          _
        %v473 = vld [vmem:[%s338] sm:$0xff]
        %v474 = vld [vmem:[%s338 + $0x8] sm:$0xff]
        %v475 = vld [vmem:[%s338 + $0x10] sm:$0xff]
        %v476 = vld [vmem:[%s338 + $0x18] sm:$0xff]
        %v477 = vld [vmem:[%s338 + $0x20] sm:$0xff]
        %v478 = vld [vmem:[%s338 + $0x28] sm:$0xff]
        %v479 = vld [vmem:[%s338 + $0x30] sm:$0xff]
        %v480 = vld [vmem:[%s338 + $0x38] sm:$0xff]
        %v481 = vld [vmem:[%s338 + $0x40] sm:$0xff]
        %v482 = vld [vmem:[%s338 + $0x48] sm:$0xff]
        %v483 = vld [vmem:[%s338 + $0x50] sm:$0xff]
        %v484 = vld [vmem:[%s338 + $0x58] sm:$0xff]
        %v485 = vld [vmem:[%s338 + $0x60] sm:$0xff]
        %v486 = vld [vmem:[%s338 + $0x68] sm:$0xff]
        %v487 = vld [vmem:[%s338 + $0x70] sm:$0xff]
        %v488 = vld [vmem:[%s338 + $0x78] sm:$0xff]
        %v489 = vld [vmem:[%s338 + $0x80] sm:$0xff]
        %v490 = vld [vmem:[%s338 + $0x88] sm:$0xff]
        %v491 = vld [vmem:[%s338 + $0x90] sm:$0xff]
        %v492 = vld [vmem:[%s338 + $0x98] sm:$0xff]
        %v493 = vld [vmem:[%s338 + $0xa0] sm:$0xff]
        %v494 = vld [vmem:[%s338 + $0xa8] sm:$0xff]
        %v495 = vld [vmem:[%s338 + $0xb0] sm:$0xff]
        %v496 = vld [vmem:[%s338 + $0xb8] sm:$0xff]
        %v497 = vld [vmem:[%s338 + $0xc0] sm:$0xff]
        %v498 = vld [vmem:[%s338 + $0xc8] sm:$0xff]
        %v499 = vld [vmem:[%s338 + $0xd0] sm:$0xff]
        %v500 = vld [vmem:[%s338 + $0xd8] sm:$0xff]
        %v501 = vld [vmem:[%s338 + $0xe0] sm:$0xff]
        %v502 = vld [vmem:[%s338 + $0xe8] sm:$0xff]
        %v503 = vld [vmem:[%s338 + $0xf0] sm:$0xff]
        %v504 = vld [vmem:[%s338 + $0xf8] sm:$0xff]
        %v505 = vld [vmem:[%s348] sm:$0xff]
        %v506 = vld [vmem:[%s348 + $0x8] sm:$0xff]
        %v507 = vld [vmem:[%s348 + $0x10] sm:$0xff]
        %v508 = vld [vmem:[%s348 + $0x18] sm:$0xff]
        %v509 = vld [vmem:[%s348 + $0x20] sm:$0xff]
        %v510 = vld [vmem:[%s348 + $0x28] sm:$0xff]
        %v511 = vld [vmem:[%s348 + $0x30] sm:$0xff]
        %v512 = vld [vmem:[%s348 + $0x38] sm:$0xff]
        %v513 = vld [vmem:[%s348 + $0x40] sm:$0xff]
        %v514 = vld [vmem:[%s348 + $0x48] sm:$0xff]
        %v515 = vld [vmem:[%s348 + $0x50] sm:$0xff]
        %v516 = vld [vmem:[%s348 + $0x58] sm:$0xff]
        %v517 = vld [vmem:[%s348 + $0x60] sm:$0xff]
        %v518 = vld [vmem:[%s348 + $0x68] sm:$0xff]
        %v519 = vld [vmem:[%s348 + $0x70] sm:$0xff]
        %v520 = vld [vmem:[%s348 + $0x78] sm:$0xff]
        %v521 = vld [vmem:[%s348 + $0x80] sm:$0xff]
        %v522 = vld [vmem:[%s348 + $0x88] sm:$0xff]
        %v523 = vld [vmem:[%s348 + $0x90] sm:$0xff]
        %v524 = vld [vmem:[%s348 + $0x98] sm:$0xff]
        %v525 = vld [vmem:[%s348 + $0xa0] sm:$0xff]
        %v526 = vld [vmem:[%s348 + $0xa8] sm:$0xff]
        %v527 = vld [vmem:[%s348 + $0xb0] sm:$0xff]
        %v528 = vld [vmem:[%s348 + $0xb8] sm:$0xff]
        %v529 = vld [vmem:[%s348 + $0xc0] sm:$0xff]
        %v530 = vld [vmem:[%s348 + $0xc8] sm:$0xff]
        %v531 = vld [vmem:[%s348 + $0xd0] sm:$0xff]
        %v532 = vld [vmem:[%s348 + $0xd8] sm:$0xff]
        %v533 = vld [vmem:[%s348 + $0xe0] sm:$0xff]
        %v534 = vld [vmem:[%s348 + $0xe8] sm:$0xff]
        %v535 = vld [vmem:[%s348 + $0xf0] sm:$0xff]
        %v536 = vld [vmem:[%s348 + $0xf8] sm:$0xff]
        %vm537 = vcmask 64512
        %v539 = vsel %vm537, %v473, 0
        %v542 = vsel %vm537, %v474, 0
        %v545 = vsel %vm537, %v475, 0
        %v548 = vsel %vm537, %v476, 0
        %v551 = vsel %vm537, %v477, 0
        %v554 = vsel %vm537, %v478, 0
        %v557 = vsel %vm537, %v479, 0
        %v560 = vsel %vm537, %v480, 0
        %v563 = vsel %vm537, %v481, 0
        %v566 = vsel %vm537, %v482, 0
        %v569 = vsel %vm537, %v483, 0
        %v572 = vsel %vm537, %v484, 0
        %v575 = vsel %vm537, %v485, 0
        %v578 = vsel %vm537, %v486, 0
        %v581 = vsel %vm537, %v487, 0
        %v584 = vsel %vm537, %v488, 0
        %v587 = vsel %vm537, %v489, 0
        %v590 = vsel %vm537, %v490, 0
        %v593 = vsel %vm537, %v491, 0
        %v596 = vsel %vm537, %v492, 0
        %v599 = vsel %vm537, %v493, 0
        %v602 = vsel %vm537, %v494, 0
        %v605 = vsel %vm537, %v495, 0
        %v608 = vsel %vm537, %v496, 0
        %v611 = vsel %vm537, %v497, 0
        %v614 = vsel %vm537, %v498, 0
        %v617 = vsel %vm537, %v499, 0
        %v620 = vsel %vm537, %v500, 0
        %v623 = vsel %vm537, %v501, 0
        %v626 = vsel %vm537, %v502, 0
        %v629 = vsel %vm537, %v503, 0
        %v632 = vsel %vm537, %v504, 0
        %v635 = vsel %vm537, %v505, 0
        %v638 = vsel %vm537, %v506, 0
        %v641 = vsel %vm537, %v507, 0
        %v644 = vsel %vm537, %v508, 0
        %v647 = vsel %vm537, %v509, 0
        %v650 = vsel %vm537, %v510, 0
        %v653 = vsel %vm537, %v511, 0
        %v656 = vsel %vm537, %v512, 0
        %v659 = vsel %vm537, %v513, 0
        %v662 = vsel %vm537, %v514, 0
        %v665 = vsel %vm537, %v515, 0
        %v668 = vsel %vm537, %v516, 0
        %v671 = vsel %vm537, %v517, 0
        %v674 = vsel %vm537, %v518, 0
        %v677 = vsel %vm537, %v519, 0
        %v680 = vsel %vm537, %v520, 0
        %v683 = vsel %vm537, %v521, 0
        %v686 = vsel %vm537, %v522, 0
        %v689 = vsel %vm537, %v523, 0
        %v692 = vsel %vm537, %v524, 0
        %v695 = vsel %vm537, %v525, 0
        %v698 = vsel %vm537, %v526, 0
        %v701 = vsel %vm537, %v527, 0
        %v704 = vsel %vm537, %v528, 0
        %v707 = vsel %vm537, %v529, 0
        %v710 = vsel %vm537, %v530, 0
        %v713 = vsel %vm537, %v531, 0
        %v716 = vsel %vm537, %v532, 0
        %v719 = vsel %vm537, %v533, 0
        %v722 = vsel %vm537, %v534, 0
        %v725 = vsel %vm537, %v535, 0
        %v728 = vsel %vm537, %v536, 0
        %730 = vmatprep.subr.mxu0 0.0
        %731 = vmatpush1.xpose.msra.mxu0 %v635
        %732 = vmatprep.subr.mxu0 0.0
        %733 = vmatpush1.xpose.msra.mxu0 %v638
        %734 = vmatprep.subr.mxu0 0.0
        %735 = vmatpush1.xpose.msra.mxu0 %v641
        %736 = vmatprep.subr.mxu0 0.0
        %737 = vmatpush1.xpose.msra.mxu0 %v644
        %738 = vmatprep.subr.mxu0 0.0
        %739 = vmatpush1.xpose.msra.mxu0 %v647
        %740 = vmatprep.subr.mxu0 0.0
        %741 = vmatpush1.xpose.msra.mxu0 %v650
        %742 = vmatprep.subr.mxu0 0.0
        %743 = vmatpush1.xpose.msra.mxu0 %v653
        %744 = vmatprep.subr.mxu0 0.0
        %745 = vmatpush1.xpose.msra.mxu0 %v656
        %746 = vmatprep.subr.mxu0 0.0
        %747 = vmatpush1.xpose.msra.mxu0 %v659
        %748 = vmatprep.subr.mxu0 0.0
        %749 = vmatpush1.xpose.msra.mxu0 %v662
        %750 = vmatprep.subr.mxu0 0.0
        %751 = vmatpush1.xpose.msra.mxu0 %v665
        %752 = vmatprep.subr.mxu0 0.0
        %753 = vmatpush1.xpose.msra.mxu0 %v668
        %754 = vmatprep.subr.mxu0 0.0
        %755 = vmatpush1.xpose.msra.mxu0 %v671
        %756 = vmatprep.subr.mxu0 0.0
        %757 = vmatpush1.xpose.msra.mxu0 %v674
        %758 = vmatprep.subr.mxu0 0.0
        %759 = vmatpush1.xpose.msra.mxu0 %v677
        %760 = vmatprep.subr.mxu0 0.0
        %761 = vmatpush1.xpose.msra.mxu0 %v680
        %762 = vmatprep.subr.mxu0 0.0
        %763 = vmatpush1.xpose.msra.mxu0 %v683
        %764 = vmatprep.subr.mxu0 0.0
        %765 = vmatpush1.xpose.msra.mxu0 %v686
        %766 = vmatprep.subr.mxu0 0.0
        %767 = vmatpush1.xpose.msra.mxu0 %v689
        %768 = vmatprep.subr.mxu0 0.0
        %769 = vmatpush1.xpose.msra.mxu0 %v692
        %770 = vmatprep.subr.mxu0 0.0
        %771 = vmatpush1.xpose.msra.mxu0 %v695
        %772 = vmatprep.subr.mxu0 0.0
        %773 = vmatpush1.xpose.msra.mxu0 %v698
        %774 = vmatprep.subr.mxu0 0.0
        %775 = vmatpush1.xpose.msra.mxu0 %v701
        %776 = vmatprep.subr.mxu0 0.0
        %777 = vmatpush1.xpose.msra.mxu0 %v704
        %778 = vmatprep.subr.mxu0 0.0
        %779 = vmatpush1.xpose.msra.mxu0 %v707
        %780 = vmatprep.subr.mxu0 0.0
        %781 = vmatpush1.xpose.msra.mxu0 %v710
        %782 = vmatprep.subr.mxu0 0.0
        %783 = vmatpush1.xpose.msra.mxu0 %v713
        %784 = vmatprep.subr.mxu0 0.0
        %785 = vmatpush1.xpose.msra.mxu0 %v716
        %786 = vmatprep.subr.mxu0 0.0
        %787 = vmatpush1.xpose.msra.mxu0 %v719
        %788 = vmatprep.subr.mxu0 0.0
        %789 = vmatpush1.xpose.msra.mxu0 %v722
        %790 = vmatprep.subr.mxu0 0.0
        %791 = vmatpush1.xpose.msra.mxu0 %v725
        %792 = vmatprep.subr.mxu0 0.0
        %793 = vmatpush1.xpose.msra.mxu0 %v728
        %794 = vmatprep.mubr.f32.mxu0 0.0
        %795 = vmatmul.mubr.f32.gmra.mrb[0].mxu0 %v539
        %v796 = vpop.f32.mrb[0].mxu0
        %v797 = vadd.f32 0.0, %v796
        %v798 = vpop.f32.mrb[0].mxu0
        %v799 = vadd.f32 0.0, %v798
        %800 = vmatprep.mubr.f32.mxu0 0.0
        %801 = vmatmul.mubr.f32.gmra.mrb[0].mxu0 %v542
        %v802 = vpop.f32.mrb[0].mxu0
        %v803 = vadd.f32 0.0, %v802
        %v804 = vpop.f32.mrb[0].mxu0
        %v805 = vadd.f32 0.0, %v804
        %806 = vmatprep.mubr.f32.mxu0 0.0
        %807 = vmatmul.mubr.f32.gmra.mrb[0].mxu0 %v545
        %v808 = vpop.f32.mrb[0].mxu0
        %v809 = vadd.f32 0.0, %v808
        %v810 = vpop.f32.mrb[0].mxu0
        %v811 = vadd.f32 0.0, %v810
        %812 = vmatprep.mubr.f32.mxu0 0.0
        %813 = vmatmul.mubr.f32.gmra.mrb[0].mxu0 %v548
        %v814 = vpop.f32.mrb[0].mxu0
        %v815 = vadd.f32 0.0, %v814
        %v816 = vpop.f32.mrb[0].mxu0
        %v817 = vadd.f32 0.0, %v816
        %818 = vmatprep.mubr.f32.mxu0 0.0
        %819 = vmatmul.mubr.f32.gmra.mrb[0].mxu0 %v551
        %v820 = vpop.f32.mrb[0].mxu0
        %v821 = vadd.f32 0.0, %v820
        %v822 = vpop.f32.mrb[0].mxu0
        %v823 = vadd.f32 0.0, %v822
        %824 = vmatprep.mubr.f32.mxu0 0.0
        %825 = vmatmul.mubr.f32.gmra.mrb[0].mxu0 %v554
        %v826 = vpop.f32.mrb[0].mxu0
        %v827 = vadd.f32 0.0, %v826
        %v828 = vpop.f32.mrb[0].mxu0
        %v829 = vadd.f32 0.0, %v828
        %830 = vmatprep.mubr.f32.mxu0 0.0
        %831 = vmatmul.mubr.f32.gmra.mrb[0].mxu0 %v557
        %v832 = vpop.f32.mrb[0].mxu0
        %v833 = vadd.f32 0.0, %v832
        %v834 = vpop.f32.mrb[0].mxu0
        %v835 = vadd.f32 0.0, %v834
        %836 = vmatprep.mubr.f32.mxu0 0.0
        %837 = vmatmul.mubr.f32.gmra.mrb[0].mxu0 %v560
        %v838 = vpop.f32.mrb[0].mxu0
        %v839 = vadd.f32 0.0, %v838
        %v840 = vpop.f32.mrb[0].mxu0
        %v841 = vadd.f32 0.0, %v840
        %842 = vmatprep.mubr.f32.mxu0 0.0
        %843 = vmatmul.mubr.f32.gmra.mrb[0].mxu0 %v563
        %v844 = vpop.f32.mrb[0].mxu0
        %v845 = vadd.f32 0.0, %v844
        %v846 = vpop.f32.mrb[0].mxu0
        %v847 = vadd.f32 0.0, %v846
        %848 = vmatprep.mubr.f32.mxu0 0.0
        %849 = vmatmul.mubr.f32.gmra.mrb[0].mxu0 %v566
        %v850 = vpop.f32.mrb[0].mxu0
        %v851 = vadd.f32 0.0, %v850
        %v852 = vpop.f32.mrb[0].mxu0
        %v853 = vadd.f32 0.0, %v852
        %854 = vmatprep.mubr.f32.mxu0 0.0
        %855 = vmatmul.mubr.f32.gmra.mrb[0].mxu0 %v569
        %v856 = vpop.f32.mrb[0].mxu0
        %v857 = vadd.f32 0.0, %v856
        %v858 = vpop.f32.mrb[0].mxu0
        %v859 = vadd.f32 0.0, %v858
        %860 = vmatprep.mubr.f32.mxu0 0.0
        %861 = vmatmul.mubr.f32.gmra.mrb[0].mxu0 %v572
        %v862 = vpop.f32.mrb[0].mxu0
        %v863 = vadd.f32 0.0, %v862
        %v864 = vpop.f32.mrb[0].mxu0
        %v865 = vadd.f32 0.0, %v864
        %866 = vmatprep.mubr.f32.mxu0 0.0
        %867 = vmatmul.mubr.f32.gmra.mrb[0].mxu0 %v575
        %v868 = vpop.f32.mrb[0].mxu0
        %v869 = vadd.f32 0.0, %v868
        %v870 = vpop.f32.mrb[0].mxu0
        %v871 = vadd.f32 0.0, %v870
        %872 = vmatprep.mubr.f32.mxu0 0.0
        %873 = vmatmul.mubr.f32.gmra.mrb[0].mxu0 %v578
        %v874 = vpop.f32.mrb[0].mxu0
        %v875 = vadd.f32 0.0, %v874
        %v876 = vpop.f32.mrb[0].mxu0
        %v877 = vadd.f32 0.0, %v876
        %878 = vmatprep.mubr.f32.mxu0 0.0
        %879 = vmatmul.mubr.f32.gmra.mrb[0].mxu0 %v581
        %v880 = vpop.f32.mrb[0].mxu0
        %v881 = vadd.f32 0.0, %v880
        %v882 = vpop.f32.mrb[0].mxu0
        %v883 = vadd.f32 0.0, %v882
        %884 = vmatprep.mubr.f32.mxu0 0.0
        %885 = vmatmul.mubr.f32.gmra.mrb[0].mxu0 %v584
        %v886 = vpop.f32.mrb[0].mxu0
        %v887 = vadd.f32 0.0, %v886
        %v888 = vpop.f32.mrb[0].mxu0
        %v889 = vadd.f32 0.0, %v888
        %890 = vmatprep.mubr.f32.mxu0 0.0
        %891 = vmatmul.mubr.f32.gmra.mrb[0].mxu0 %v587
        %v892 = vpop.f32.mrb[0].mxu0
        %v893 = vadd.f32 0.0, %v892
        %v894 = vpop.f32.mrb[0].mxu0
        %v895 = vadd.f32 0.0, %v894
        %896 = vmatprep.mubr.f32.mxu0 0.0
        %897 = vmatmul.mubr.f32.gmra.mrb[0].mxu0 %v590
        %v898 = vpop.f32.mrb[0].mxu0
        %v899 = vadd.f32 0.0, %v898
        %v900 = vpop.f32.mrb[0].mxu0
        %v901 = vadd.f32 0.0, %v900
        %902 = vmatprep.mubr.f32.mxu0 0.0
        %903 = vmatmul.mubr.f32.gmra.mrb[0].mxu0 %v593
        %v904 = vpop.f32.mrb[0].mxu0
        %v905 = vadd.f32 0.0, %v904
        %v906 = vpop.f32.mrb[0].mxu0
        %v907 = vadd.f32 0.0, %v906
        %908 = vmatprep.mubr.f32.mxu0 0.0
        %909 = vmatmul.mubr.f32.gmra.mrb[0].mxu0 %v596
        %v910 = vpop.f32.mrb[0].mxu0
        %v911 = vadd.f32 0.0, %v910
        %v912 = vpop.f32.mrb[0].mxu0
        %v913 = vadd.f32 0.0, %v912
        %914 = vmatprep.mubr.f32.mxu0 0.0
        %915 = vmatmul.mubr.f32.gmra.mrb[0].mxu0 %v599
        %v916 = vpop.f32.mrb[0].mxu0
        %v917 = vadd.f32 0.0, %v916
        %v918 = vpop.f32.mrb[0].mxu0
        %v919 = vadd.f32 0.0, %v918
        %920 = vmatprep.mubr.f32.mxu0 0.0
        %921 = vmatmul.mubr.f32.gmra.mrb[0].mxu0 %v602
        %v922 = vpop.f32.mrb[0].mxu0
        %v923 = vadd.f32 0.0, %v922
        %v924 = vpop.f32.mrb[0].mxu0
        %v925 = vadd.f32 0.0, %v924
        %926 = vmatprep.mubr.f32.mxu0 0.0
        %927 = vmatmul.mubr.f32.gmra.mrb[0].mxu0 %v605
        %v928 = vpop.f32.mrb[0].mxu0
        %v929 = vadd.f32 0.0, %v928
        %v930 = vpop.f32.mrb[0].mxu0
        %v931 = vadd.f32 0.0, %v930
        %932 = vmatprep.mubr.f32.mxu0 0.0
        %933 = vmatmul.mubr.f32.gmra.mrb[0].mxu0 %v608
        %v934 = vpop.f32.mrb[0].mxu0
        %v935 = vadd.f32 0.0, %v934
        %v936 = vpop.f32.mrb[0].mxu0
        %v937 = vadd.f32 0.0, %v936
        %938 = vmatprep.mubr.f32.mxu0 0.0
        %939 = vmatmul.mubr.f32.gmra.mrb[0].mxu0 %v611
        %v940 = vpop.f32.mrb[0].mxu0
        %v941 = vadd.f32 0.0, %v940
        %v942 = vpop.f32.mrb[0].mxu0
        %v943 = vadd.f32 0.0, %v942
        %944 = vmatprep.mubr.f32.mxu0 0.0
        %945 = vmatmul.mubr.f32.gmra.mrb[0].mxu0 %v614
        %v946 = vpop.f32.mrb[0].mxu0
        %v947 = vadd.f32 0.0, %v946
        %v948 = vpop.f32.mrb[0].mxu0
        %v949 = vadd.f32 0.0, %v948
        %950 = vmatprep.mubr.f32.mxu0 0.0
        %951 = vmatmul.mubr.f32.gmra.mrb[0].mxu0 %v617
        %v952 = vpop.f32.mrb[0].mxu0
        %v953 = vadd.f32 0.0, %v952
        %v954 = vpop.f32.mrb[0].mxu0
        %v955 = vadd.f32 0.0, %v954
        %956 = vmatprep.mubr.f32.mxu0 0.0
        %957 = vmatmul.mubr.f32.gmra.mrb[0].mxu0 %v620
        %v958 = vpop.f32.mrb[0].mxu0
        %v959 = vadd.f32 0.0, %v958
        %v960 = vpop.f32.mrb[0].mxu0
        %v961 = vadd.f32 0.0, %v960
        %962 = vmatprep.mubr.f32.mxu0 0.0
        %963 = vmatmul.mubr.f32.gmra.mrb[0].mxu0 %v623
        %v964 = vpop.f32.mrb[0].mxu0
        %v965 = vadd.f32 0.0, %v964
        %v966 = vpop.f32.mrb[0].mxu0
        %v967 = vadd.f32 0.0, %v966
        %968 = vmatprep.mubr.f32.mxu0 0.0
        %969 = vmatmul.mubr.f32.gmra.mrb[0].mxu0 %v626
        %v970 = vpop.f32.mrb[0].mxu0
        %v971 = vadd.f32 0.0, %v970
        %v972 = vpop.f32.mrb[0].mxu0
        %v973 = vadd.f32 0.0, %v972
        %974 = vmatprep.mubr.f32.mxu0 0.0
        %975 = vmatmul.mubr.f32.gmra.mrb[0].mxu0 %v629
        %v976 = vpop.f32.mrb[0].mxu0
        %v977 = vadd.f32 0.0, %v976
        %v978 = vpop.f32.mrb[0].mxu0
        %v979 = vadd.f32 0.0, %v978
        %980 = vmatprep.mubr.f32.mxu0 0.0
        %981 = vmatmul.mubr.f32.gmra.mrb[0].mxu0 %v632
        %v982 = vpop.f32.mrb[0].mxu0
        %v983 = vadd.f32 0.0, %v982
        %v984 = vpop.f32.mrb[0].mxu0
        %v985 = vadd.f32 0.0, %v984
        %986 = vdwg.mxu0
        %v987 = vld [vmem:[#allocation2] sm:$0xff]
        %v988 = vld [vmem:[#allocation2 + $0x8] sm:$0xff]
        %v989 = vld [vmem:[#allocation2 + $0x10] sm:$0xff]
        %v990 = vld [vmem:[#allocation2 + $0x18] sm:$0xff]
        %v991 = vld [vmem:[#allocation2 + $0x20] sm:$0xff]
        %v992 = vld [vmem:[#allocation2 + $0x28] sm:$0xff]
        %v993 = vld [vmem:[#allocation2 + $0x30] sm:$0xff]
        %v994 = vld [vmem:[#allocation2 + $0x38] sm:$0xff]
        %v995 = vld [vmem:[#allocation2 + $0x40] sm:$0xff]
        %v996 = vld [vmem:[#allocation2 + $0x48] sm:$0xff]
        %v997 = vld [vmem:[#allocation2 + $0x50] sm:$0xff]
        %v998 = vld [vmem:[#allocation2 + $0x58] sm:$0xff]
        %v999 = vld [vmem:[#allocation2 + $0x60] sm:$0xff]
        %v1000 = vld [vmem:[#allocation2 + $0x68] sm:$0xff]
        %v1001 = vld [vmem:[#allocation2 + $0x70] sm:$0xff]
        %v1002 = vld [vmem:[#allocation2 + $0x78] sm:$0xff]
        %v1003 = vld [vmem:[#allocation2 + $0x80] sm:$0xff]
        %v1004 = vld [vmem:[#allocation2 + $0x88] sm:$0xff]
        %v1005 = vld [vmem:[#allocation2 + $0x90] sm:$0xff]
        %v1006 = vld [vmem:[#allocation2 + $0x98] sm:$0xff]
        %v1007 = vld [vmem:[#allocation2 + $0xa0] sm:$0xff]
        %v1008 = vld [vmem:[#allocation2 + $0xa8] sm:$0xff]
        %v1009 = vld [vmem:[#allocation2 + $0xb0] sm:$0xff]
        %v1010 = vld [vmem:[#allocation2 + $0xb8] sm:$0xff]
        %v1011 = vld [vmem:[#allocation2 + $0xc0] sm:$0xff]
        %v1012 = vld [vmem:[#allocation2 + $0xc8] sm:$0xff]
        %v1013 = vld [vmem:[#allocation2 + $0xd0] sm:$0xff]
        %v1014 = vld [vmem:[#allocation2 + $0xd8] sm:$0xff]
        %v1015 = vld [vmem:[#allocation2 + $0xe0] sm:$0xff]
        %v1016 = vld [vmem:[#allocation2 + $0xe8] sm:$0xff]
        %v1017 = vld [vmem:[#allocation2 + $0xf0] sm:$0xff]
        %v1018 = vld [vmem:[#allocation2 + $0xf8] sm:$0xff]
        %v1019 = vmax.f32 %v797, %v799
        %1020 = vmax.xlane.f32.xlu0 %v1019
        %v1021 = vpop.xlane.xlu0 %1020
        %v1022 = vmax.f32 %v803, %v805
        %1023 = vmax.xlane.f32.xlu0 %v1022
        %v1024 = vpop.xlane.xlu0 %1023
        %v1025 = vmax.f32 %v809, %v811
        %1026 = vmax.xlane.f32.xlu0 %v1025
        %v1027 = vpop.xlane.xlu0 %1026
        %v1028 = vmax.f32 %v815, %v817
        %1029 = vmax.xlane.f32.xlu0 %v1028
        %v1030 = vpop.xlane.xlu0 %1029
        %v1031 = vmax.f32 %v821, %v823
        %1032 = vmax.xlane.f32.xlu0 %v1031
        %v1033 = vpop.xlane.xlu0 %1032
        %v1034 = vmax.f32 %v827, %v829
        %1035 = vmax.xlane.f32.xlu0 %v1034
        %v1036 = vpop.xlane.xlu0 %1035
        %v1037 = vmax.f32 %v833, %v835
        %1038 = vmax.xlane.f32.xlu0 %v1037
        %v1039 = vpop.xlane.xlu0 %1038
        %v1040 = vmax.f32 %v839, %v841
        %1041 = vmax.xlane.f32.xlu0 %v1040
        %v1042 = vpop.xlane.xlu0 %1041
        %v1043 = vmax.f32 %v845, %v847
        %1044 = vmax.xlane.f32.xlu0 %v1043
        %v1045 = vpop.xlane.xlu0 %1044
        %v1046 = vmax.f32 %v851, %v853
        %1047 = vmax.xlane.f32.xlu0 %v1046
        %v1048 = vpop.xlane.xlu0 %1047
        %v1049 = vmax.f32 %v857, %v859
        %1050 = vmax.xlane.f32.xlu0 %v1049
        %v1051 = vpop.xlane.xlu0 %1050
        %v1052 = vmax.f32 %v863, %v865
        %1053 = vmax.xlane.f32.xlu0 %v1052
        %v1054 = vpop.xlane.xlu0 %1053
        %v1055 = vmax.f32 %v869, %v871
        %1056 = vmax.xlane.f32.xlu0 %v1055
        %v1057 = vpop.xlane.xlu0 %1056
        %v1058 = vmax.f32 %v875, %v877
        %1059 = vmax.xlane.f32.xlu0 %v1058
        %v1060 = vpop.xlane.xlu0 %1059
        %v1061 = vmax.f32 %v881, %v883
        %1062 = vmax.xlane.f32.xlu0 %v1061
        %v1063 = vpop.xlane.xlu0 %1062
        %v1064 = vmax.f32 %v887, %v889
        %1065 = vmax.xlane.f32.xlu0 %v1064
        %v1066 = vpop.xlane.xlu0 %1065
        %v1067 = vmax.f32 %v893, %v895
        %1068 = vmax.xlane.f32.xlu0 %v1067
        %v1069 = vpop.xlane.xlu0 %1068
        %v1070 = vmax.f32 %v899, %v901
        %1071 = vmax.xlane.f32.xlu0 %v1070
        %v1072 = vpop.xlane.xlu0 %1071
        %v1073 = vmax.f32 %v905, %v907
        %1074 = vmax.xlane.f32.xlu0 %v1073
        %v1075 = vpop.xlane.xlu0 %1074
        %v1076 = vmax.f32 %v911, %v913
        %1077 = vmax.xlane.f32.xlu0 %v1076
        %v1078 = vpop.xlane.xlu0 %1077
        %v1079 = vmax.f32 %v917, %v919
        %1080 = vmax.xlane.f32.xlu0 %v1079
        %v1081 = vpop.xlane.xlu0 %1080
        %v1082 = vmax.f32 %v923, %v925
        %1083 = vmax.xlane.f32.xlu0 %v1082
        %v1084 = vpop.xlane.xlu0 %1083
        %v1085 = vmax.f32 %v929, %v931
        %1086 = vmax.xlane.f32.xlu0 %v1085
        %v1087 = vpop.xlane.xlu0 %1086
        %v1088 = vmax.f32 %v935, %v937
        %1089 = vmax.xlane.f32.xlu0 %v1088
        %v1090 = vpop.xlane.xlu0 %1089
        %v1091 = vmax.f32 %v941, %v943
        %1092 = vmax.xlane.f32.xlu0 %v1091
        %v1093 = vpop.xlane.xlu0 %1092
        %v1094 = vmax.f32 %v947, %v949
        %1095 = vmax.xlane.f32.xlu0 %v1094
        %v1096 = vpop.xlane.xlu0 %1095
        %v1097 = vmax.f32 %v953, %v955
        %1098 = vmax.xlane.f32.xlu0 %v1097
        %v1099 = vpop.xlane.xlu0 %1098
        %v1100 = vmax.f32 %v959, %v961
        %1101 = vmax.xlane.f32.xlu0 %v1100
        %v1102 = vpop.xlane.xlu0 %1101
        %v1103 = vmax.f32 %v965, %v967
        %1104 = vmax.xlane.f32.xlu0 %v1103
        %v1105 = vpop.xlane.xlu0 %1104
        %v1106 = vmax.f32 %v971, %v973
        %1107 = vmax.xlane.f32.xlu0 %v1106
        %v1108 = vpop.xlane.xlu0 %1107
        %v1109 = vmax.f32 %v977, %v979
        %1110 = vmax.xlane.f32.xlu0 %v1109
        %v1111 = vpop.xlane.xlu0 %1110
        %v1112 = vmax.f32 %v983, %v985
        %1113 = vmax.xlane.f32.xlu0 %v1112
        %v1114 = vpop.xlane.xlu0 %1113
        %v1115 = vmax.f32 %v987, %v1021
        %v1116 = vmax.f32 %v988, %v1024
        %v1117 = vmax.f32 %v989, %v1027
        %v1118 = vmax.f32 %v990, %v1030
        %v1119 = vmax.f32 %v991, %v1033
        %v1120 = vmax.f32 %v992, %v1036
        %v1121 = vmax.f32 %v993, %v1039
        %v1122 = vmax.f32 %v994, %v1042
        %v1123 = vmax.f32 %v995, %v1045
        %v1124 = vmax.f32 %v996, %v1048
        %v1125 = vmax.f32 %v997, %v1051
        %v1126 = vmax.f32 %v998, %v1054
        %v1127 = vmax.f32 %v999, %v1057
        %v1128 = vmax.f32 %v1000, %v1060
        %v1129 = vmax.f32 %v1001, %v1063
        %v1130 = vmax.f32 %v1002, %v1066
        %v1131 = vmax.f32 %v1003, %v1069
        %v1132 = vmax.f32 %v1004, %v1072
        %v1133 = vmax.f32 %v1005, %v1075
        %v1134 = vmax.f32 %v1006, %v1078
        %v1135 = vmax.f32 %v1007, %v1081
        %v1136 = vmax.f32 %v1008, %v1084
        %v1137 = vmax.f32 %v1009, %v1087
        %v1138 = vmax.f32 %v1010, %v1090
        %v1139 = vmax.f32 %v1011, %v1093
        %v1140 = vmax.f32 %v1012, %v1096
        %v1141 = vmax.f32 %v1013, %v1099
        %v1142 = vmax.f32 %v1014, %v1102
        %v1143 = vmax.f32 %v1015, %v1105
        %v1144 = vmax.f32 %v1016, %v1108
        %v1145 = vmax.f32 %v1017, %v1111
        %v1146 = vmax.f32 %v1018, %v1114
        %v1147 = vsub.f32 %v987, %v1115
        %v1148 = vsub.f32 %v988, %v1116
        %v1149 = vsub.f32 %v989, %v1117
        %v1150 = vsub.f32 %v990, %v1118
        %v1151 = vsub.f32 %v991, %v1119
        %v1152 = vsub.f32 %v992, %v1120
        %v1153 = vsub.f32 %v993, %v1121
        %v1154 = vsub.f32 %v994, %v1122
        %v1155 = vsub.f32 %v995, %v1123
        %v1156 = vsub.f32 %v996, %v1124
        %v1157 = vsub.f32 %v997, %v1125
        %v1158 = vsub.f32 %v998, %v1126
        %v1159 = vsub.f32 %v999, %v1127
        %v1160 = vsub.f32 %v1000, %v1128
        %v1161 = vsub.f32 %v1001, %v1129
        %v1162 = vsub.f32 %v1002, %v1130
        %v1163 = vsub.f32 %v1003, %v1131
        %v1164 = vsub.f32 %v1004, %v1132
        %v1165 = vsub.f32 %v1005, %v1133
        %v1166 = vsub.f32 %v1006, %v1134
        %v1167 = vsub.f32 %v1007, %v1135
        %v1168 = vsub.f32 %v1008, %v1136
        %v1169 = vsub.f32 %v1009, %v1137
        %v1170 = vsub.f32 %v1010, %v1138
        %v1171 = vsub.f32 %v1011, %v1139
        %v1172 = vsub.f32 %v1012, %v1140
        %v1173 = vsub.f32 %v1013, %v1141
        %v1174 = vsub.f32 %v1014, %v1142
        %v1175 = vsub.f32 %v1015, %v1143
        %v1176 = vsub.f32 %v1016, %v1144
        %v1177 = vsub.f32 %v1017, %v1145
        %v1178 = vsub.f32 %v1018, %v1146
        %v1179 = vmul.f32 %v1147, 1.442695
        %v1180 = vpow.pop %v1179
        %v1181 = vmul.f32 %v1148, 1.442695
        %v1182 = vpow.pop %v1181
        %v1183 = vmul.f32 %v1149, 1.442695
        %v1184 = vpow.pop %v1183
        %v1185 = vmul.f32 %v1150, 1.442695
        %v1186 = vpow.pop %v1185
        %v1187 = vmul.f32 %v1151, 1.442695
        %v1188 = vpow.pop %v1187
        %v1189 = vmul.f32 %v1152, 1.442695
        %v1190 = vpow.pop %v1189
        %v1191 = vmul.f32 %v1153, 1.442695
        %v1192 = vpow.pop %v1191
        %v1193 = vmul.f32 %v1154, 1.442695
        %v1194 = vpow.pop %v1193
        %v1195 = vmul.f32 %v1155, 1.442695
        %v1196 = vpow.pop %v1195
        %v1197 = vmul.f32 %v1156, 1.442695
        %v1198 = vpow.pop %v1197
        %v1199 = vmul.f32 %v1157, 1.442695
        %v1200 = vpow.pop %v1199
        %v1201 = vmul.f32 %v1158, 1.442695
        %v1202 = vpow.pop %v1201
        %v1203 = vmul.f32 %v1159, 1.442695
        %v1204 = vpow.pop %v1203
        %v1205 = vmul.f32 %v1160, 1.442695
        %v1206 = vpow.pop %v1205
        %v1207 = vmul.f32 %v1161, 1.442695
        %v1208 = vpow.pop %v1207
        %v1209 = vmul.f32 %v1162, 1.442695
        %v1210 = vpow.pop %v1209
        %v1211 = vmul.f32 %v1163, 1.442695
        %v1212 = vpow.pop %v1211
        %v1213 = vmul.f32 %v1164, 1.442695
        %v1214 = vpow.pop %v1213
        %v1215 = vmul.f32 %v1165, 1.442695
        %v1216 = vpow.pop %v1215
        %v1217 = vmul.f32 %v1166, 1.442695
        %v1218 = vpow.pop %v1217
        %v1219 = vmul.f32 %v1167, 1.442695
        %v1220 = vpow.pop %v1219
        %v1221 = vmul.f32 %v1168, 1.442695
        %v1222 = vpow.pop %v1221
        %v1223 = vmul.f32 %v1169, 1.442695
        %v1224 = vpow.pop %v1223
        %v1225 = vmul.f32 %v1170, 1.442695
        %v1226 = vpow.pop %v1225
        %v1227 = vmul.f32 %v1171, 1.442695
        %v1228 = vpow.pop %v1227
        %v1229 = vmul.f32 %v1172, 1.442695
        %v1230 = vpow.pop %v1229
        %v1231 = vmul.f32 %v1173, 1.442695
        %v1232 = vpow.pop %v1231
        %v1233 = vmul.f32 %v1174, 1.442695
        %v1234 = vpow.pop %v1233
        %v1235 = vmul.f32 %v1175, 1.442695
        %v1236 = vpow.pop %v1235
        %v1237 = vmul.f32 %v1176, 1.442695
        %v1238 = vpow.pop %v1237
        %v1239 = vmul.f32 %v1177, 1.442695
        %v1240 = vpow.pop %v1239
        %v1241 = vmul.f32 %v1178, 1.442695
        %v1242 = vpow.pop %v1241
        %1244 = vset.pattern.permute.xlu0 0
        %1245 = vperm.xlu0 %1244, %v1115
        %v1246 = vpop.permute.xlu0 %1245
        %1249 = vset.pattern.permute.xlu0 0
        %1250 = vperm.xlu0 %1249, %v1116
        %v1251 = vpop.permute.xlu0 %1250
        %1254 = vset.pattern.permute.xlu0 0
        %1255 = vperm.xlu0 %1254, %v1117
        %v1256 = vpop.permute.xlu0 %1255
        %1259 = vset.pattern.permute.xlu0 0
        %1260 = vperm.xlu0 %1259, %v1118
        %v1261 = vpop.permute.xlu0 %1260
        %1264 = vset.pattern.permute.xlu0 0
        %1265 = vperm.xlu0 %1264, %v1119
        %v1266 = vpop.permute.xlu0 %1265
        %1269 = vset.pattern.permute.xlu0 0
        %1270 = vperm.xlu0 %1269, %v1120
        %v1271 = vpop.permute.xlu0 %1270
        %1274 = vset.pattern.permute.xlu0 0
        %1275 = vperm.xlu0 %1274, %v1121
        %v1276 = vpop.permute.xlu0 %1275
        %1279 = vset.pattern.permute.xlu0 0
        %1280 = vperm.xlu0 %1279, %v1122
        %v1281 = vpop.permute.xlu0 %1280
        %1284 = vset.pattern.permute.xlu0 0
        %1285 = vperm.xlu0 %1284, %v1123
        %v1286 = vpop.permute.xlu0 %1285
        %1289 = vset.pattern.permute.xlu0 0
        %1290 = vperm.xlu0 %1289, %v1124
        %v1291 = vpop.permute.xlu0 %1290
        %1294 = vset.pattern.permute.xlu0 0
        %1295 = vperm.xlu0 %1294, %v1125
        %v1296 = vpop.permute.xlu0 %1295
        %1299 = vset.pattern.permute.xlu0 0
        %1300 = vperm.xlu0 %1299, %v1126
        %v1301 = vpop.permute.xlu0 %1300
        %1304 = vset.pattern.permute.xlu0 0
        %1305 = vperm.xlu0 %1304, %v1127
        %v1306 = vpop.permute.xlu0 %1305
        %1309 = vset.pattern.permute.xlu0 0
        %1310 = vperm.xlu0 %1309, %v1128
        %v1311 = vpop.permute.xlu0 %1310
        %1314 = vset.pattern.permute.xlu0 0
        %1315 = vperm.xlu0 %1314, %v1129
        %v1316 = vpop.permute.xlu0 %1315
        %1319 = vset.pattern.permute.xlu0 0
        %1320 = vperm.xlu0 %1319, %v1130
        %v1321 = vpop.permute.xlu0 %1320
        %1324 = vset.pattern.permute.xlu0 0
        %1325 = vperm.xlu0 %1324, %v1131
        %v1326 = vpop.permute.xlu0 %1325
        %1329 = vset.pattern.permute.xlu0 0
        %1330 = vperm.xlu0 %1329, %v1132
        %v1331 = vpop.permute.xlu0 %1330
        %1334 = vset.pattern.permute.xlu0 0
        %1335 = vperm.xlu0 %1334, %v1133
        %v1336 = vpop.permute.xlu0 %1335
        %1339 = vset.pattern.permute.xlu0 0
        %1340 = vperm.xlu0 %1339, %v1134
        %v1341 = vpop.permute.xlu0 %1340
        %1344 = vset.pattern.permute.xlu0 0
        %1345 = vperm.xlu0 %1344, %v1135
        %v1346 = vpop.permute.xlu0 %1345
        %1349 = vset.pattern.permute.xlu0 0
        %1350 = vperm.xlu0 %1349, %v1136
        %v1351 = vpop.permute.xlu0 %1350
        %1354 = vset.pattern.permute.xlu0 0
        %1355 = vperm.xlu0 %1354, %v1137
        %v1356 = vpop.permute.xlu0 %1355
        %1359 = vset.pattern.permute.xlu0 0
        %1360 = vperm.xlu0 %1359, %v1138
        %v1361 = vpop.permute.xlu0 %1360
        %1364 = vset.pattern.permute.xlu0 0
        %1365 = vperm.xlu0 %1364, %v1139
        %v1366 = vpop.permute.xlu0 %1365
        %1369 = vset.pattern.permute.xlu0 0
        %1370 = vperm.xlu0 %1369, %v1140
        %v1371 = vpop.permute.xlu0 %1370
        %1374 = vset.pattern.permute.xlu0 0
        %1375 = vperm.xlu0 %1374, %v1141
        %v1376 = vpop.permute.xlu0 %1375
        %1379 = vset.pattern.permute.xlu0 0
        %1380 = vperm.xlu0 %1379, %v1142
        %v1381 = vpop.permute.xlu0 %1380
        %1384 = vset.pattern.permute.xlu0 0
        %1385 = vperm.xlu0 %1384, %v1143
        %v1386 = vpop.permute.xlu0 %1385
        %1389 = vset.pattern.permute.xlu0 0
        %1390 = vperm.xlu0 %1389, %v1144
        %v1391 = vpop.permute.xlu0 %1390
        %1394 = vset.pattern.permute.xlu0 0
        %1395 = vperm.xlu0 %1394, %v1145
        %v1396 = vpop.permute.xlu0 %1395
        %1399 = vset.pattern.permute.xlu0 0
        %1400 = vperm.xlu0 %1399, %v1146
        %v1401 = vpop.permute.xlu0 %1400
        %v1403 = vsub.f32 %v797, %v1246
        %v1404 = vsub.f32 %v799, %v1246
        %v1405 = vsub.f32 %v803, %v1251
        %v1406 = vsub.f32 %v805, %v1251
        %v1407 = vsub.f32 %v809, %v1256
        %v1408 = vsub.f32 %v811, %v1256
        %v1409 = vsub.f32 %v815, %v1261
        %v1410 = vsub.f32 %v817, %v1261
        %v1411 = vsub.f32 %v821, %v1266
        %v1412 = vsub.f32 %v823, %v1266
        %v1413 = vsub.f32 %v827, %v1271
        %v1414 = vsub.f32 %v829, %v1271
        %v1415 = vsub.f32 %v833, %v1276
        %v1416 = vsub.f32 %v835, %v1276
        %v1417 = vsub.f32 %v839, %v1281
        %v1418 = vsub.f32 %v841, %v1281
        %v1419 = vsub.f32 %v845, %v1286
        %v1420 = vsub.f32 %v847, %v1286
        %v1421 = vsub.f32 %v851, %v1291
        %v1422 = vsub.f32 %v853, %v1291
        %v1423 = vsub.f32 %v857, %v1296
        %v1424 = vsub.f32 %v859, %v1296
        %v1425 = vsub.f32 %v863, %v1301
        %v1426 = vsub.f32 %v865, %v1301
        %v1427 = vsub.f32 %v869, %v1306
        %v1428 = vsub.f32 %v871, %v1306
        %v1429 = vsub.f32 %v875, %v1311
        %v1430 = vsub.f32 %v877, %v1311
        %v1431 = vsub.f32 %v881, %v1316
        %v1432 = vsub.f32 %v883, %v1316
        %v1433 = vsub.f32 %v887, %v1321
        %v1434 = vsub.f32 %v889, %v1321
        %v1435 = vsub.f32 %v893, %v1326
        %v1436 = vsub.f32 %v895, %v1326
        %v1437 = vsub.f32 %v899, %v1331
        %v1438 = vsub.f32 %v901, %v1331
        %v1439 = vsub.f32 %v905, %v1336
        %v1440 = vsub.f32 %v907, %v1336
        %v1441 = vsub.f32 %v911, %v1341
        %v1442 = vsub.f32 %v913, %v1341
        %v1443 = vsub.f32 %v917, %v1346
        %v1444 = vsub.f32 %v919, %v1346
        %v1445 = vsub.f32 %v923, %v1351
        %v1446 = vsub.f32 %v925, %v1351
        %v1447 = vsub.f32 %v929, %v1356
        %v1448 = vsub.f32 %v931, %v1356
        %v1449 = vsub.f32 %v935, %v1361
        %v1450 = vsub.f32 %v937, %v1361
        %v1451 = vsub.f32 %v941, %v1366
        %v1452 = vsub.f32 %v943, %v1366
        %v1453 = vsub.f32 %v947, %v1371
        %v1454 = vsub.f32 %v949, %v1371
        %v1455 = vsub.f32 %v953, %v1376
        %v1456 = vsub.f32 %v955, %v1376
        %v1457 = vsub.f32 %v959, %v1381
        %v1458 = vsub.f32 %v961, %v1381
        %v1459 = vsub.f32 %v965, %v1386
        %v1460 = vsub.f32 %v967, %v1386
        %v1461 = vsub.f32 %v971, %v1391
        %v1462 = vsub.f32 %v973, %v1391
        %v1463 = vsub.f32 %v977, %v1396
        %v1464 = vsub.f32 %v979, %v1396
        %v1465 = vsub.f32 %v983, %v1401
        %v1466 = vsub.f32 %v985, %v1401
        %v1467 = vmul.f32 %v1403, 1.442695
        %v1468 = vpow.pop %v1467
        %v1469 = vmul.f32 %v1404, 1.442695
        %v1470 = vpow.pop %v1469
        %v1471 = vmul.f32 %v1405, 1.442695
        %v1472 = vpow.pop %v1471
        %v1473 = vmul.f32 %v1406, 1.442695
        %v1474 = vpow.pop %v1473
        %v1475 = vmul.f32 %v1407, 1.442695
        %v1476 = vpow.pop %v1475
        %v1477 = vmul.f32 %v1408, 1.442695
        %v1478 = vpow.pop %v1477
        %v1479 = vmul.f32 %v1409, 1.442695
        %v1480 = vpow.pop %v1479
        %v1481 = vmul.f32 %v1410, 1.442695
        %v1482 = vpow.pop %v1481
        %v1483 = vmul.f32 %v1411, 1.442695
        %v1484 = vpow.pop %v1483
        %v1485 = vmul.f32 %v1412, 1.442695
        %v1486 = vpow.pop %v1485
        %v1487 = vmul.f32 %v1413, 1.442695
        %v1488 = vpow.pop %v1487
        %v1489 = vmul.f32 %v1414, 1.442695
        %v1490 = vpow.pop %v1489
        %v1491 = vmul.f32 %v1415, 1.442695
        %v1492 = vpow.pop %v1491
        %v1493 = vmul.f32 %v1416, 1.442695
        %v1494 = vpow.pop %v1493
        %v1495 = vmul.f32 %v1417, 1.442695
        %v1496 = vpow.pop %v1495
        %v1497 = vmul.f32 %v1418, 1.442695
        %v1498 = vpow.pop %v1497
        %v1499 = vmul.f32 %v1419, 1.442695
        %v1500 = vpow.pop %v1499
        %v1501 = vmul.f32 %v1420, 1.442695
        %v1502 = vpow.pop %v1501
        %v1503 = vmul.f32 %v1421, 1.442695
        %v1504 = vpow.pop %v1503
        %v1505 = vmul.f32 %v1422, 1.442695
        %v1506 = vpow.pop %v1505
        %v1507 = vmul.f32 %v1423, 1.442695
        %v1508 = vpow.pop %v1507
        %v1509 = vmul.f32 %v1424, 1.442695
        %v1510 = vpow.pop %v1509
        %v1511 = vmul.f32 %v1425, 1.442695
        %v1512 = vpow.pop %v1511
        %v1513 = vmul.f32 %v1426, 1.442695
        %v1514 = vpow.pop %v1513
        %v1515 = vmul.f32 %v1427, 1.442695
        %v1516 = vpow.pop %v1515
        %v1517 = vmul.f32 %v1428, 1.442695
        %v1518 = vpow.pop %v1517
        %v1519 = vmul.f32 %v1429, 1.442695
        %v1520 = vpow.pop %v1519
        %v1521 = vmul.f32 %v1430, 1.442695
        %v1522 = vpow.pop %v1521
        %v1523 = vmul.f32 %v1431, 1.442695
        %v1524 = vpow.pop %v1523
        %v1525 = vmul.f32 %v1432, 1.442695
        %v1526 = vpow.pop %v1525
        %v1527 = vmul.f32 %v1433, 1.442695
        %v1528 = vpow.pop %v1527
        %v1529 = vmul.f32 %v1434, 1.442695
        %v1530 = vpow.pop %v1529
        %v1531 = vmul.f32 %v1435, 1.442695
        %v1532 = vpow.pop %v1531
        %v1533 = vmul.f32 %v1436, 1.442695
        %v1534 = vpow.pop %v1533
        %v1535 = vmul.f32 %v1437, 1.442695
        %v1536 = vpow.pop %v1535
        %v1537 = vmul.f32 %v1438, 1.442695
        %v1538 = vpow.pop %v1537
        %v1539 = vmul.f32 %v1439, 1.442695
        %v1540 = vpow.pop %v1539
        %v1541 = vmul.f32 %v1440, 1.442695
        %v1542 = vpow.pop %v1541
        %v1543 = vmul.f32 %v1441, 1.442695
        %v1544 = vpow.pop %v1543
        %v1545 = vmul.f32 %v1442, 1.442695
        %v1546 = vpow.pop %v1545
        %v1547 = vmul.f32 %v1443, 1.442695
        %v1548 = vpow.pop %v1547
        %v1549 = vmul.f32 %v1444, 1.442695
        %v1550 = vpow.pop %v1549
        %v1551 = vmul.f32 %v1445, 1.442695
        %v1552 = vpow.pop %v1551
        %v1553 = vmul.f32 %v1446, 1.442695
        %v1554 = vpow.pop %v1553
        %v1555 = vmul.f32 %v1447, 1.442695
        %v1556 = vpow.pop %v1555
        %v1557 = vmul.f32 %v1448, 1.442695
        %v1558 = vpow.pop %v1557
        %v1559 = vmul.f32 %v1449, 1.442695
        %v1560 = vpow.pop %v1559
        %v1561 = vmul.f32 %v1450, 1.442695
        %v1562 = vpow.pop %v1561
        %v1563 = vmul.f32 %v1451, 1.442695
        %v1564 = vpow.pop %v1563
        %v1565 = vmul.f32 %v1452, 1.442695
        %v1566 = vpow.pop %v1565
        %v1567 = vmul.f32 %v1453, 1.442695
        %v1568 = vpow.pop %v1567
        %v1569 = vmul.f32 %v1454, 1.442695
        %v1570 = vpow.pop %v1569
        %v1571 = vmul.f32 %v1455, 1.442695
        %v1572 = vpow.pop %v1571
        %v1573 = vmul.f32 %v1456, 1.442695
        %v1574 = vpow.pop %v1573
        %v1575 = vmul.f32 %v1457, 1.442695
        %v1576 = vpow.pop %v1575
        %v1577 = vmul.f32 %v1458, 1.442695
        %v1578 = vpow.pop %v1577
        %v1579 = vmul.f32 %v1459, 1.442695
        %v1580 = vpow.pop %v1579
        %v1581 = vmul.f32 %v1460, 1.442695
        %v1582 = vpow.pop %v1581
        %v1583 = vmul.f32 %v1461, 1.442695
        %v1584 = vpow.pop %v1583
        %v1585 = vmul.f32 %v1462, 1.442695
        %v1586 = vpow.pop %v1585
        %v1587 = vmul.f32 %v1463, 1.442695
        %v1588 = vpow.pop %v1587
        %v1589 = vmul.f32 %v1464, 1.442695
        %v1590 = vpow.pop %v1589
        %v1591 = vmul.f32 %v1465, 1.442695
        %v1592 = vpow.pop %v1591
        %v1593 = vmul.f32 %v1466, 1.442695
        %v1594 = vpow.pop %v1593
        %v1595 = vld [vmem:[#allocation3] sm:$0xff]
        %v1596 = vld [vmem:[#allocation3 + $0x8] sm:$0xff]
        %v1597 = vld [vmem:[#allocation3 + $0x10] sm:$0xff]
        %v1598 = vld [vmem:[#allocation3 + $0x18] sm:$0xff]
        %v1599 = vld [vmem:[#allocation3 + $0x20] sm:$0xff]
        %v1600 = vld [vmem:[#allocation3 + $0x28] sm:$0xff]
        %v1601 = vld [vmem:[#allocation3 + $0x30] sm:$0xff]
        %v1602 = vld [vmem:[#allocation3 + $0x38] sm:$0xff]
        %v1603 = vld [vmem:[#allocation3 + $0x40] sm:$0xff]
        %v1604 = vld [vmem:[#allocation3 + $0x48] sm:$0xff]
        %v1605 = vld [vmem:[#allocation3 + $0x50] sm:$0xff]
        %v1606 = vld [vmem:[#allocation3 + $0x58] sm:$0xff]
        %v1607 = vld [vmem:[#allocation3 + $0x60] sm:$0xff]
        %v1608 = vld [vmem:[#allocation3 + $0x68] sm:$0xff]
        %v1609 = vld [vmem:[#allocation3 + $0x70] sm:$0xff]
        %v1610 = vld [vmem:[#allocation3 + $0x78] sm:$0xff]
        %v1611 = vld [vmem:[#allocation3 + $0x80] sm:$0xff]
        %v1612 = vld [vmem:[#allocation3 + $0x88] sm:$0xff]
        %v1613 = vld [vmem:[#allocation3 + $0x90] sm:$0xff]
        %v1614 = vld [vmem:[#allocation3 + $0x98] sm:$0xff]
        %v1615 = vld [vmem:[#allocation3 + $0xa0] sm:$0xff]
        %v1616 = vld [vmem:[#allocation3 + $0xa8] sm:$0xff]
        %v1617 = vld [vmem:[#allocation3 + $0xb0] sm:$0xff]
        %v1618 = vld [vmem:[#allocation3 + $0xb8] sm:$0xff]
        %v1619 = vld [vmem:[#allocation3 + $0xc0] sm:$0xff]
        %v1620 = vld [vmem:[#allocation3 + $0xc8] sm:$0xff]
        %v1621 = vld [vmem:[#allocation3 + $0xd0] sm:$0xff]
        %v1622 = vld [vmem:[#allocation3 + $0xd8] sm:$0xff]
        %v1623 = vld [vmem:[#allocation3 + $0xe0] sm:$0xff]
        %v1624 = vld [vmem:[#allocation3 + $0xe8] sm:$0xff]
        %v1625 = vld [vmem:[#allocation3 + $0xf0] sm:$0xff]
        %v1626 = vld [vmem:[#allocation3 + $0xf8] sm:$0xff]
        %v1627 = vmul.f32 %v1180, %v1595
        %v1628 = vmul.f32 %v1182, %v1596
        %v1629 = vmul.f32 %v1184, %v1597
        %v1630 = vmul.f32 %v1186, %v1598
        %v1631 = vmul.f32 %v1188, %v1599
        %v1632 = vmul.f32 %v1190, %v1600
        %v1633 = vmul.f32 %v1192, %v1601
        %v1634 = vmul.f32 %v1194, %v1602
        %v1635 = vmul.f32 %v1196, %v1603
        %v1636 = vmul.f32 %v1198, %v1604
        %v1637 = vmul.f32 %v1200, %v1605
        %v1638 = vmul.f32 %v1202, %v1606
        %v1639 = vmul.f32 %v1204, %v1607
        %v1640 = vmul.f32 %v1206, %v1608
        %v1641 = vmul.f32 %v1208, %v1609
        %v1642 = vmul.f32 %v1210, %v1610
        %v1643 = vmul.f32 %v1212, %v1611
        %v1644 = vmul.f32 %v1214, %v1612
        %v1645 = vmul.f32 %v1216, %v1613
        %v1646 = vmul.f32 %v1218, %v1614
        %v1647 = vmul.f32 %v1220, %v1615
        %v1648 = vmul.f32 %v1222, %v1616
        %v1649 = vmul.f32 %v1224, %v1617
        %v1650 = vmul.f32 %v1226, %v1618
        %v1651 = vmul.f32 %v1228, %v1619
        %v1652 = vmul.f32 %v1230, %v1620
        %v1653 = vmul.f32 %v1232, %v1621
        %v1654 = vmul.f32 %v1234, %v1622
        %v1655 = vmul.f32 %v1236, %v1623
        %v1656 = vmul.f32 %v1238, %v1624
        %v1657 = vmul.f32 %v1240, %v1625
        %v1658 = vmul.f32 %v1242, %v1626
        %v1659 = vadd.f32 %v1468, %v1470
        %1660 = vadd.xlane.f32.xlu0 %v1659
        %v1661 = vpop.xlane.xlu0 %1660
        %v1662 = vadd.f32 %v1472, %v1474
        %1663 = vadd.xlane.f32.xlu0 %v1662
        %v1664 = vpop.xlane.xlu0 %1663
        %v1665 = vadd.f32 %v1476, %v1478
        %1666 = vadd.xlane.f32.xlu0 %v1665
        %v1667 = vpop.xlane.xlu0 %1666
        %v1668 = vadd.f32 %v1480, %v1482
        %1669 = vadd.xlane.f32.xlu0 %v1668
        %v1670 = vpop.xlane.xlu0 %1669
        %v1671 = vadd.f32 %v1484, %v1486
        %1672 = vadd.xlane.f32.xlu0 %v1671
        %v1673 = vpop.xlane.xlu0 %1672
        %v1674 = vadd.f32 %v1488, %v1490
        %1675 = vadd.xlane.f32.xlu0 %v1674
        %v1676 = vpop.xlane.xlu0 %1675
        %v1677 = vadd.f32 %v1492, %v1494
        %1678 = vadd.xlane.f32.xlu0 %v1677
        %v1679 = vpop.xlane.xlu0 %1678
        %v1680 = vadd.f32 %v1496, %v1498
        %1681 = vadd.xlane.f32.xlu0 %v1680
        %v1682 = vpop.xlane.xlu0 %1681
        %v1683 = vadd.f32 %v1500, %v1502
        %1684 = vadd.xlane.f32.xlu0 %v1683
        %v1685 = vpop.xlane.xlu0 %1684
        %v1686 = vadd.f32 %v1504, %v1506
        %1687 = vadd.xlane.f32.xlu0 %v1686
        %v1688 = vpop.xlane.xlu0 %1687
        %v1689 = vadd.f32 %v1508, %v1510
        %1690 = vadd.xlane.f32.xlu0 %v1689
        %v1691 = vpop.xlane.xlu0 %1690
        %v1692 = vadd.f32 %v1512, %v1514
        %1693 = vadd.xlane.f32.xlu0 %v1692
        %v1694 = vpop.xlane.xlu0 %1693
        %v1695 = vadd.f32 %v1516, %v1518
        %1696 = vadd.xlane.f32.xlu0 %v1695
        %v1697 = vpop.xlane.xlu0 %1696
        %v1698 = vadd.f32 %v1520, %v1522
        %1699 = vadd.xlane.f32.xlu0 %v1698
        %v1700 = vpop.xlane.xlu0 %1699
        %v1701 = vadd.f32 %v1524, %v1526
        %1702 = vadd.xlane.f32.xlu0 %v1701
        %v1703 = vpop.xlane.xlu0 %1702
        %v1704 = vadd.f32 %v1528, %v1530
        %1705 = vadd.xlane.f32.xlu0 %v1704
        %v1706 = vpop.xlane.xlu0 %1705
        %v1707 = vadd.f32 %v1532, %v1534
        %1708 = vadd.xlane.f32.xlu0 %v1707
        %v1709 = vpop.xlane.xlu0 %1708
        %v1710 = vadd.f32 %v1536, %v1538
        %1711 = vadd.xlane.f32.xlu0 %v1710
        %v1712 = vpop.xlane.xlu0 %1711
        %v1713 = vadd.f32 %v1540, %v1542
        %1714 = vadd.xlane.f32.xlu0 %v1713
        %v1715 = vpop.xlane.xlu0 %1714
        %v1716 = vadd.f32 %v1544, %v1546
        %1717 = vadd.xlane.f32.xlu0 %v1716
        %v1718 = vpop.xlane.xlu0 %1717
        %v1719 = vadd.f32 %v1548, %v1550
        %1720 = vadd.xlane.f32.xlu0 %v1719
        %v1721 = vpop.xlane.xlu0 %1720
        %v1722 = vadd.f32 %v1552, %v1554
        %1723 = vadd.xlane.f32.xlu0 %v1722
        %v1724 = vpop.xlane.xlu0 %1723
        %v1725 = vadd.f32 %v1556, %v1558
        %1726 = vadd.xlane.f32.xlu0 %v1725
        %v1727 = vpop.xlane.xlu0 %1726
        %v1728 = vadd.f32 %v1560, %v1562
        %1729 = vadd.xlane.f32.xlu0 %v1728
        %v1730 = vpop.xlane.xlu0 %1729
        %v1731 = vadd.f32 %v1564, %v1566
        %1732 = vadd.xlane.f32.xlu0 %v1731
        %v1733 = vpop.xlane.xlu0 %1732
        %v1734 = vadd.f32 %v1568, %v1570
        %1735 = vadd.xlane.f32.xlu0 %v1734
        %v1736 = vpop.xlane.xlu0 %1735
        %v1737 = vadd.f32 %v1572, %v1574
        %1738 = vadd.xlane.f32.xlu0 %v1737
        %v1739 = vpop.xlane.xlu0 %1738
        %v1740 = vadd.f32 %v1576, %v1578
        %1741 = vadd.xlane.f32.xlu0 %v1740
        %v1742 = vpop.xlane.xlu0 %1741
        %v1743 = vadd.f32 %v1580, %v1582
        %1744 = vadd.xlane.f32.xlu0 %v1743
        %v1745 = vpop.xlane.xlu0 %1744
        %v1746 = vadd.f32 %v1584, %v1586
        %1747 = vadd.xlane.f32.xlu0 %v1746
        %v1748 = vpop.xlane.xlu0 %1747
        %v1749 = vadd.f32 %v1588, %v1590
        %1750 = vadd.xlane.f32.xlu0 %v1749
        %v1751 = vpop.xlane.xlu0 %1750
        %v1752 = vadd.f32 %v1592, %v1594
        %1753 = vadd.xlane.f32.xlu0 %v1752
        %v1754 = vpop.xlane.xlu0 %1753
        %v1755 = vadd.f32 %v1627, %v1661
        %v1756 = vadd.f32 %v1628, %v1664
        %v1757 = vadd.f32 %v1629, %v1667
        %v1758 = vadd.f32 %v1630, %v1670
        %v1759 = vadd.f32 %v1631, %v1673
        %v1760 = vadd.f32 %v1632, %v1676
        %v1761 = vadd.f32 %v1633, %v1679
        %v1762 = vadd.f32 %v1634, %v1682
        %v1763 = vadd.f32 %v1635, %v1685
        %v1764 = vadd.f32 %v1636, %v1688
        %v1765 = vadd.f32 %v1637, %v1691
        %v1766 = vadd.f32 %v1638, %v1694
        %v1767 = vadd.f32 %v1639, %v1697
        %v1768 = vadd.f32 %v1640, %v1700
        %v1769 = vadd.f32 %v1641, %v1703
        %v1770 = vadd.f32 %v1642, %v1706
        %v1771 = vadd.f32 %v1643, %v1709
        %v1772 = vadd.f32 %v1644, %v1712
        %v1773 = vadd.f32 %v1645, %v1715
        %v1774 = vadd.f32 %v1646, %v1718
        %v1775 = vadd.f32 %v1647, %v1721
        %v1776 = vadd.f32 %v1648, %v1724
        %v1777 = vadd.f32 %v1649, %v1727
        %v1778 = vadd.f32 %v1650, %v1730
        %v1779 = vadd.f32 %v1651, %v1733
        %v1780 = vadd.f32 %v1652, %v1736
        %v1781 = vadd.f32 %v1653, %v1739
        %v1782 = vadd.f32 %v1654, %v1742
        %v1783 = vadd.f32 %v1655, %v1745
        %v1784 = vadd.f32 %v1656, %v1748
        %v1785 = vadd.f32 %v1657, %v1751
        %v1786 = vadd.f32 %v1658, %v1754
        %vm1787 = vcmask 7168
        %1788 = vst.msk [vmem:[#allocation3] sm:$0xff] %vm1787, %v1755
        %1789 = vst.msk [vmem:[#allocation3 + $0x8] sm:$0xff] %vm1787, %v1756
        %1790 = vst.msk [vmem:[#allocation3 + $0x10] sm:$0xff] %vm1787, %v1757
        %1791 = vst.msk [vmem:[#allocation3 + $0x18] sm:$0xff] %vm1787, %v1758
        %1792 = vst.msk [vmem:[#allocation3 + $0x20] sm:$0xff] %vm1787, %v1759
        %1793 = vst.msk [vmem:[#allocation3 + $0x28] sm:$0xff] %vm1787, %v1760
        %1794 = vst.msk [vmem:[#allocation3 + $0x30] sm:$0xff] %vm1787, %v1761
        %1795 = vst.msk [vmem:[#allocation3 + $0x38] sm:$0xff] %vm1787, %v1762
        %1796 = vst.msk [vmem:[#allocation3 + $0x40] sm:$0xff] %vm1787, %v1763
        %1797 = vst.msk [vmem:[#allocation3 + $0x48] sm:$0xff] %vm1787, %v1764
        %1798 = vst.msk [vmem:[#allocation3 + $0x50] sm:$0xff] %vm1787, %v1765
        %1799 = vst.msk [vmem:[#allocation3 + $0x58] sm:$0xff] %vm1787, %v1766
        %1800 = vst.msk [vmem:[#allocation3 + $0x60] sm:$0xff] %vm1787, %v1767
        %1801 = vst.msk [vmem:[#allocation3 + $0x68] sm:$0xff] %vm1787, %v1768
        %1802 = vst.msk [vmem:[#allocation3 + $0x70] sm:$0xff] %vm1787, %v1769
        %1803 = vst.msk [vmem:[#allocation3 + $0x78] sm:$0xff] %vm1787, %v1770
        %1804 = vst.msk [vmem:[#allocation3 + $0x80] sm:$0xff] %vm1787, %v1771
        %1805 = vst.msk [vmem:[#allocation3 + $0x88] sm:$0xff] %vm1787, %v1772
        %1806 = vst.msk [vmem:[#allocation3 + $0x90] sm:$0xff] %vm1787, %v1773
        %1807 = vst.msk [vmem:[#allocation3 + $0x98] sm:$0xff] %vm1787, %v1774
        %1808 = vst.msk [vmem:[#allocation3 + $0xa0] sm:$0xff] %vm1787, %v1775
        %1809 = vst.msk [vmem:[#allocation3 + $0xa8] sm:$0xff] %vm1787, %v1776
        %1810 = vst.msk [vmem:[#allocation3 + $0xb0] sm:$0xff] %vm1787, %v1777
        %1811 = vst.msk [vmem:[#allocation3 + $0xb8] sm:$0xff] %vm1787, %v1778
        %1812 = vst.msk [vmem:[#allocation3 + $0xc0] sm:$0xff] %vm1787, %v1779
        %1813 = vst.msk [vmem:[#allocation3 + $0xc8] sm:$0xff] %vm1787, %v1780
        %1814 = vst.msk [vmem:[#allocation3 + $0xd0] sm:$0xff] %vm1787, %v1781
        %1815 = vst.msk [vmem:[#allocation3 + $0xd8] sm:$0xff] %vm1787, %v1782
        %1816 = vst.msk [vmem:[#allocation3 + $0xe0] sm:$0xff] %vm1787, %v1783
        %1817 = vst.msk [vmem:[#allocation3 + $0xe8] sm:$0xff] %vm1787, %v1784
        %1818 = vst.msk [vmem:[#allocation3 + $0xf0] sm:$0xff] %vm1787, %v1785
        %1819 = vst.msk [vmem:[#allocation3 + $0xf8] sm:$0xff] %vm1787, %v1786
        %v1820 = vld [vmem:[#allocation4] sm:$0xff]
        %v1821 = vld [vmem:[#allocation4 + $0x8] sm:$0xff]
        %v1822 = vld [vmem:[#allocation4 + $0x10] sm:$0xff]
        %v1823 = vld [vmem:[#allocation4 + $0x18] sm:$0xff]
        %v1824 = vld [vmem:[#allocation4 + $0x20] sm:$0xff]
        %v1825 = vld [vmem:[#allocation4 + $0x28] sm:$0xff]
        %v1826 = vld [vmem:[#allocation4 + $0x30] sm:$0xff]
        %v1827 = vld [vmem:[#allocation4 + $0x38] sm:$0xff]
        %v1828 = vld [vmem:[#allocation4 + $0x40] sm:$0xff]
        %v1829 = vld [vmem:[#allocation4 + $0x48] sm:$0xff]
        %v1830 = vld [vmem:[#allocation4 + $0x50] sm:$0xff]
        %v1831 = vld [vmem:[#allocation4 + $0x58] sm:$0xff]
        %v1832 = vld [vmem:[#allocation4 + $0x60] sm:$0xff]
        %v1833 = vld [vmem:[#allocation4 + $0x68] sm:$0xff]
        %v1834 = vld [vmem:[#allocation4 + $0x70] sm:$0xff]
        %v1835 = vld [vmem:[#allocation4 + $0x78] sm:$0xff]
        %v1836 = vld [vmem:[#allocation4 + $0x80] sm:$0xff]
        %v1837 = vld [vmem:[#allocation4 + $0x88] sm:$0xff]
        %v1838 = vld [vmem:[#allocation4 + $0x90] sm:$0xff]
        %v1839 = vld [vmem:[#allocation4 + $0x98] sm:$0xff]
        %v1840 = vld [vmem:[#allocation4 + $0xa0] sm:$0xff]
        %v1841 = vld [vmem:[#allocation4 + $0xa8] sm:$0xff]
        %v1842 = vld [vmem:[#allocation4 + $0xb0] sm:$0xff]
        %v1843 = vld [vmem:[#allocation4 + $0xb8] sm:$0xff]
        %v1844 = vld [vmem:[#allocation4 + $0xc0] sm:$0xff]
        %v1845 = vld [vmem:[#allocation4 + $0xc8] sm:$0xff]
        %v1846 = vld [vmem:[#allocation4 + $0xd0] sm:$0xff]
        %v1847 = vld [vmem:[#allocation4 + $0xd8] sm:$0xff]
        %v1848 = vld [vmem:[#allocation4 + $0xe0] sm:$0xff]
        %v1849 = vld [vmem:[#allocation4 + $0xe8] sm:$0xff]
        %v1850 = vld [vmem:[#allocation4 + $0xf0] sm:$0xff]
        %v1851 = vld [vmem:[#allocation4 + $0xf8] sm:$0xff]
        %1853 = vset.pattern.permute.xlu0 0
        %1854 = vperm.xlu0 %1853, %v1180
        %v1855 = vpop.permute.xlu0 %1854
        %1858 = vset.pattern.permute.xlu0 0
        %1859 = vperm.xlu0 %1858, %v1182
        %v1860 = vpop.permute.xlu0 %1859
        %1863 = vset.pattern.permute.xlu0 0
        %1864 = vperm.xlu0 %1863, %v1184
        %v1865 = vpop.permute.xlu0 %1864
        %1868 = vset.pattern.permute.xlu0 0
        %1869 = vperm.xlu0 %1868, %v1186
        %v1870 = vpop.permute.xlu0 %1869
        %1873 = vset.pattern.permute.xlu0 0
        %1874 = vperm.xlu0 %1873, %v1188
        %v1875 = vpop.permute.xlu0 %1874
        %1878 = vset.pattern.permute.xlu0 0
        %1879 = vperm.xlu0 %1878, %v1190
        %v1880 = vpop.permute.xlu0 %1879
        %1883 = vset.pattern.permute.xlu0 0
        %1884 = vperm.xlu0 %1883, %v1192
        %v1885 = vpop.permute.xlu0 %1884
        %1888 = vset.pattern.permute.xlu0 0
        %1889 = vperm.xlu0 %1888, %v1194
        %v1890 = vpop.permute.xlu0 %1889
        %1893 = vset.pattern.permute.xlu0 0
        %1894 = vperm.xlu0 %1893, %v1196
        %v1895 = vpop.permute.xlu0 %1894
        %1898 = vset.pattern.permute.xlu0 0
        %1899 = vperm.xlu0 %1898, %v1198
        %v1900 = vpop.permute.xlu0 %1899
        %1903 = vset.pattern.permute.xlu0 0
        %1904 = vperm.xlu0 %1903, %v1200
        %v1905 = vpop.permute.xlu0 %1904
        %1908 = vset.pattern.permute.xlu0 0
        %1909 = vperm.xlu0 %1908, %v1202
        %v1910 = vpop.permute.xlu0 %1909
        %1913 = vset.pattern.permute.xlu0 0
        %1914 = vperm.xlu0 %1913, %v1204
        %v1915 = vpop.permute.xlu0 %1914
        %1918 = vset.pattern.permute.xlu0 0
        %1919 = vperm.xlu0 %1918, %v1206
        %v1920 = vpop.permute.xlu0 %1919
        %1923 = vset.pattern.permute.xlu0 0
        %1924 = vperm.xlu0 %1923, %v1208
        %v1925 = vpop.permute.xlu0 %1924
        %1928 = vset.pattern.permute.xlu0 0
        %1929 = vperm.xlu0 %1928, %v1210
        %v1930 = vpop.permute.xlu0 %1929
        %1933 = vset.pattern.permute.xlu0 0
        %1934 = vperm.xlu0 %1933, %v1212
        %v1935 = vpop.permute.xlu0 %1934
        %1938 = vset.pattern.permute.xlu0 0
        %1939 = vperm.xlu0 %1938, %v1214
        %v1940 = vpop.permute.xlu0 %1939
        %1943 = vset.pattern.permute.xlu0 0
        %1944 = vperm.xlu0 %1943, %v1216
        %v1945 = vpop.permute.xlu0 %1944
        %1948 = vset.pattern.permute.xlu0 0
        %1949 = vperm.xlu0 %1948, %v1218
        %v1950 = vpop.permute.xlu0 %1949
        %1953 = vset.pattern.permute.xlu0 0
        %1954 = vperm.xlu0 %1953, %v1220
        %v1955 = vpop.permute.xlu0 %1954
        %1958 = vset.pattern.permute.xlu0 0
        %1959 = vperm.xlu0 %1958, %v1222
        %v1960 = vpop.permute.xlu0 %1959
        %1963 = vset.pattern.permute.xlu0 0
        %1964 = vperm.xlu0 %1963, %v1224
        %v1965 = vpop.permute.xlu0 %1964
        %1968 = vset.pattern.permute.xlu0 0
        %1969 = vperm.xlu0 %1968, %v1226
        %v1970 = vpop.permute.xlu0 %1969
        %1973 = vset.pattern.permute.xlu0 0
        %1974 = vperm.xlu0 %1973, %v1228
        %v1975 = vpop.permute.xlu0 %1974
        %1978 = vset.pattern.permute.xlu0 0
        %1979 = vperm.xlu0 %1978, %v1230
        %v1980 = vpop.permute.xlu0 %1979
        %1983 = vset.pattern.permute.xlu0 0
        %1984 = vperm.xlu0 %1983, %v1232
        %v1985 = vpop.permute.xlu0 %1984
        %1988 = vset.pattern.permute.xlu0 0
        %1989 = vperm.xlu0 %1988, %v1234
        %v1990 = vpop.permute.xlu0 %1989
        %1993 = vset.pattern.permute.xlu0 0
        %1994 = vperm.xlu0 %1993, %v1236
        %v1995 = vpop.permute.xlu0 %1994
        %1998 = vset.pattern.permute.xlu0 0
        %1999 = vperm.xlu0 %1998, %v1238
        %v2000 = vpop.permute.xlu0 %1999
        %2003 = vset.pattern.permute.xlu0 0
        %2004 = vperm.xlu0 %2003, %v1240
        %v2005 = vpop.permute.xlu0 %2004
        %2008 = vset.pattern.permute.xlu0 0
        %2009 = vperm.xlu0 %2008, %v1242
        %v2010 = vpop.permute.xlu0 %2009
        %v2012 = vmul.f32 %v1855, %v1820
        %v2013 = vmul.f32 %v1860, %v1821
        %v2014 = vmul.f32 %v1865, %v1822
        %v2015 = vmul.f32 %v1870, %v1823
        %v2016 = vmul.f32 %v1875, %v1824
        %v2017 = vmul.f32 %v1880, %v1825
        %v2018 = vmul.f32 %v1885, %v1826
        %v2019 = vmul.f32 %v1890, %v1827
        %v2020 = vmul.f32 %v1895, %v1828
        %v2021 = vmul.f32 %v1900, %v1829
        %v2022 = vmul.f32 %v1905, %v1830
        %v2023 = vmul.f32 %v1910, %v1831
        %v2024 = vmul.f32 %v1915, %v1832
        %v2025 = vmul.f32 %v1920, %v1833
        %v2026 = vmul.f32 %v1925, %v1834
        %v2027 = vmul.f32 %v1930, %v1835
        %v2028 = vmul.f32 %v1935, %v1836
        %v2029 = vmul.f32 %v1940, %v1837
        %v2030 = vmul.f32 %v1945, %v1838
        %v2031 = vmul.f32 %v1950, %v1839
        %v2032 = vmul.f32 %v1955, %v1840
        %v2033 = vmul.f32 %v1960, %v1841
        %v2034 = vmul.f32 %v1965, %v1842
        %v2035 = vmul.f32 %v1970, %v1843
        %v2036 = vmul.f32 %v1975, %v1844
        %v2037 = vmul.f32 %v1980, %v1845
        %v2038 = vmul.f32 %v1985, %v1846
        %v2039 = vmul.f32 %v1990, %v1847
        %v2040 = vmul.f32 %v1995, %v1848
        %v2041 = vmul.f32 %v2000, %v1849
        %v2042 = vmul.f32 %v2005, %v1850
        %v2043 = vmul.f32 %v2010, %v1851
        %v2044 = vld [vmem:[%s358] sm:$0xff]
        %v2045 = vld [vmem:[%s358 + $0x8] sm:$0xff]
        %v2046 = vld [vmem:[%s358 + $0x10] sm:$0xff]
        %v2047 = vld [vmem:[%s358 + $0x18] sm:$0xff]
        %v2048 = vld [vmem:[%s358 + $0x20] sm:$0xff]
        %v2049 = vld [vmem:[%s358 + $0x28] sm:$0xff]
        %v2050 = vld [vmem:[%s358 + $0x30] sm:$0xff]
        %v2051 = vld [vmem:[%s358 + $0x38] sm:$0xff]
        %v2052 = vld [vmem:[%s358 + $0x40] sm:$0xff]
        %v2053 = vld [vmem:[%s358 + $0x48] sm:$0xff]
        %v2054 = vld [vmem:[%s358 + $0x50] sm:$0xff]
        %v2055 = vld [vmem:[%s358 + $0x58] sm:$0xff]
        %v2056 = vld [vmem:[%s358 + $0x60] sm:$0xff]
        %v2057 = vld [vmem:[%s358 + $0x68] sm:$0xff]
        %v2058 = vld [vmem:[%s358 + $0x70] sm:$0xff]
        %v2059 = vld [vmem:[%s358 + $0x78] sm:$0xff]
        %v2060 = vld [vmem:[%s358 + $0x80] sm:$0xff]
        %v2061 = vld [vmem:[%s358 + $0x88] sm:$0xff]
        %v2062 = vld [vmem:[%s358 + $0x90] sm:$0xff]
        %v2063 = vld [vmem:[%s358 + $0x98] sm:$0xff]
        %v2064 = vld [vmem:[%s358 + $0xa0] sm:$0xff]
        %v2065 = vld [vmem:[%s358 + $0xa8] sm:$0xff]
        %v2066 = vld [vmem:[%s358 + $0xb0] sm:$0xff]
        %v2067 = vld [vmem:[%s358 + $0xb8] sm:$0xff]
        %v2068 = vld [vmem:[%s358 + $0xc0] sm:$0xff]
        %v2069 = vld [vmem:[%s358 + $0xc8] sm:$0xff]
        %v2070 = vld [vmem:[%s358 + $0xd0] sm:$0xff]
        %v2071 = vld [vmem:[%s358 + $0xd8] sm:$0xff]
        %v2072 = vld [vmem:[%s358 + $0xe0] sm:$0xff]
        %v2073 = vld [vmem:[%s358 + $0xe8] sm:$0xff]
        %v2074 = vld [vmem:[%s358 + $0xf0] sm:$0xff]
        %v2075 = vld [vmem:[%s358 + $0xf8] sm:$0xff]
        %2076 = vmatprep.subr.mxu0 0.0
        %2077 = vmatpush1.msra.mxu0 %v2044
        %2078 = vmatprep.subr.mxu0 0.0
        %2079 = vmatpush1.msra.mxu0 %v2045
        %2080 = vmatprep.subr.mxu0 0.0
        %2081 = vmatpush1.msra.mxu0 %v2046
        %2082 = vmatprep.subr.mxu0 0.0
        %2083 = vmatpush1.msra.mxu0 %v2047
        %2084 = vmatprep.subr.mxu0 0.0
        %2085 = vmatpush1.msra.mxu0 %v2048
        %2086 = vmatprep.subr.mxu0 0.0
        %2087 = vmatpush1.msra.mxu0 %v2049
        %2088 = vmatprep.subr.mxu0 0.0
        %2089 = vmatpush1.msra.mxu0 %v2050
        %2090 = vmatprep.subr.mxu0 0.0
        %2091 = vmatpush1.msra.mxu0 %v2051
        %2092 = vmatprep.subr.mxu0 0.0
        %2093 = vmatpush1.msra.mxu0 %v2052
        %2094 = vmatprep.subr.mxu0 0.0
        %2095 = vmatpush1.msra.mxu0 %v2053
        %2096 = vmatprep.subr.mxu0 0.0
        %2097 = vmatpush1.msra.mxu0 %v2054
        %2098 = vmatprep.subr.mxu0 0.0
        %2099 = vmatpush1.msra.mxu0 %v2055
        %2100 = vmatprep.subr.mxu0 0.0
        %2101 = vmatpush1.msra.mxu0 %v2056
        %2102 = vmatprep.subr.mxu0 0.0
        %2103 = vmatpush1.msra.mxu0 %v2057
        %2104 = vmatprep.subr.mxu0 0.0
        %2105 = vmatpush1.msra.mxu0 %v2058
        %2106 = vmatprep.subr.mxu0 0.0
        %2107 = vmatpush1.msra.mxu0 %v2059
        %2108 = vmatprep.subr.mxu0 0.0
        %2109 = vmatpush1.msra.mxu0 %v2060
        %2110 = vmatprep.subr.mxu0 0.0
        %2111 = vmatpush1.msra.mxu0 %v2061
        %2112 = vmatprep.subr.mxu0 0.0
        %2113 = vmatpush1.msra.mxu0 %v2062
        %2114 = vmatprep.subr.mxu0 0.0
        %2115 = vmatpush1.msra.mxu0 %v2063
        %2116 = vmatprep.subr.mxu0 0.0
        %2117 = vmatpush1.msra.mxu0 %v2064
        %2118 = vmatprep.subr.mxu0 0.0
        %2119 = vmatpush1.msra.mxu0 %v2065
        %2120 = vmatprep.subr.mxu0 0.0
        %2121 = vmatpush1.msra.mxu0 %v2066
        %2122 = vmatprep.subr.mxu0 0.0
        %2123 = vmatpush1.msra.mxu0 %v2067
        %2124 = vmatprep.subr.mxu0 0.0
        %2125 = vmatpush1.msra.mxu0 %v2068
        %2126 = vmatprep.subr.mxu0 0.0
        %2127 = vmatpush1.msra.mxu0 %v2069
        %2128 = vmatprep.subr.mxu0 0.0
        %2129 = vmatpush1.msra.mxu0 %v2070
        %2130 = vmatprep.subr.mxu0 0.0
        %2131 = vmatpush1.msra.mxu0 %v2071
        %2132 = vmatprep.subr.mxu0 0.0
        %2133 = vmatpush1.msra.mxu0 %v2072
        %2134 = vmatprep.subr.mxu0 0.0
        %2135 = vmatpush1.msra.mxu0 %v2073
        %2136 = vmatprep.subr.mxu0 0.0
        %2137 = vmatpush1.msra.mxu0 %v2074
        %2138 = vmatprep.subr.mxu0 0.0
        %2139 = vmatpush1.msra.mxu0 %v2075
        %2140 = vmatprep.mubr.f32.mxu0 %v1470
        %2141 = vmatmul.mubr.f32.gmra.mrb[0].mxu0 %v1468
        %v2142 = vpop.f32.mrb[0].mxu0
        %v2143 = vadd.f32 0.0, %v2142
        %v2144 = vpop.f32.mrb[0].mxu0
        %2145 = vmatprep.mubr.f32.mxu0 %v1474
        %2146 = vmatmul.mubr.f32.gmra.mrb[0].mxu0 %v1472
        %v2147 = vpop.f32.mrb[0].mxu0
        %v2148 = vadd.f32 0.0, %v2147
        %v2149 = vpop.f32.mrb[0].mxu0
        %2150 = vmatprep.mubr.f32.mxu0 %v1478
        %2151 = vmatmul.mubr.f32.gmra.mrb[0].mxu0 %v1476
        %v2152 = vpop.f32.mrb[0].mxu0
        %v2153 = vadd.f32 0.0, %v2152
        %v2154 = vpop.f32.mrb[0].mxu0
        %2155 = vmatprep.mubr.f32.mxu0 %v1482
        %2156 = vmatmul.mubr.f32.gmra.mrb[0].mxu0 %v1480
        %v2157 = vpop.f32.mrb[0].mxu0
        %v2158 = vadd.f32 0.0, %v2157
        %v2159 = vpop.f32.mrb[0].mxu0
        %2160 = vmatprep.mubr.f32.mxu0 %v1486
        %2161 = vmatmul.mubr.f32.gmra.mrb[0].mxu0 %v1484
        %v2162 = vpop.f32.mrb[0].mxu0
        %v2163 = vadd.f32 0.0, %v2162
        %v2164 = vpop.f32.mrb[0].mxu0
        %2165 = vmatprep.mubr.f32.mxu0 %v1490
        %2166 = vmatmul.mubr.f32.gmra.mrb[0].mxu0 %v1488
        %v2167 = vpop.f32.mrb[0].mxu0
        %v2168 = vadd.f32 0.0, %v2167
        %v2169 = vpop.f32.mrb[0].mxu0
        %2170 = vmatprep.mubr.f32.mxu0 %v1494
        %2171 = vmatmul.mubr.f32.gmra.mrb[0].mxu0 %v1492
        %v2172 = vpop.f32.mrb[0].mxu0
        %v2173 = vadd.f32 0.0, %v2172
        %v2174 = vpop.f32.mrb[0].mxu0
        %2175 = vmatprep.mubr.f32.mxu0 %v1498
        %2176 = vmatmul.mubr.f32.gmra.mrb[0].mxu0 %v1496
        %v2177 = vpop.f32.mrb[0].mxu0
        %v2178 = vadd.f32 0.0, %v2177
        %v2179 = vpop.f32.mrb[0].mxu0
        %2180 = vmatprep.mubr.f32.mxu0 %v1502
        %2181 = vmatmul.mubr.f32.gmra.mrb[0].mxu0 %v1500
        %v2182 = vpop.f32.mrb[0].mxu0
        %v2183 = vadd.f32 0.0, %v2182
        %v2184 = vpop.f32.mrb[0].mxu0
        %2185 = vmatprep.mubr.f32.mxu0 %v1506
        %2186 = vmatmul.mubr.f32.gmra.mrb[0].mxu0 %v1504
        %v2187 = vpop.f32.mrb[0].mxu0
        %v2188 = vadd.f32 0.0, %v2187
        %v2189 = vpop.f32.mrb[0].mxu0
        %2190 = vmatprep.mubr.f32.mxu0 %v1510
        %2191 = vmatmul.mubr.f32.gmra.mrb[0].mxu0 %v1508
        %v2192 = vpop.f32.mrb[0].mxu0
        %v2193 = vadd.f32 0.0, %v2192
        %v2194 = vpop.f32.mrb[0].mxu0
        %2195 = vmatprep.mubr.f32.mxu0 %v1514
        %2196 = vmatmul.mubr.f32.gmra.mrb[0].mxu0 %v1512
        %v2197 = vpop.f32.mrb[0].mxu0
        %v2198 = vadd.f32 0.0, %v2197
        %v2199 = vpop.f32.mrb[0].mxu0
        %2200 = vmatprep.mubr.f32.mxu0 %v1518
        %2201 = vmatmul.mubr.f32.gmra.mrb[0].mxu0 %v1516
        %v2202 = vpop.f32.mrb[0].mxu0
        %v2203 = vadd.f32 0.0, %v2202
        %v2204 = vpop.f32.mrb[0].mxu0
        %2205 = vmatprep.mubr.f32.mxu0 %v1522
        %2206 = vmatmul.mubr.f32.gmra.mrb[0].mxu0 %v1520
        %v2207 = vpop.f32.mrb[0].mxu0
        %v2208 = vadd.f32 0.0, %v2207
        %v2209 = vpop.f32.mrb[0].mxu0
        %2210 = vmatprep.mubr.f32.mxu0 %v1526
        %2211 = vmatmul.mubr.f32.gmra.mrb[0].mxu0 %v1524
        %v2212 = vpop.f32.mrb[0].mxu0
        %v2213 = vadd.f32 0.0, %v2212
        %v2214 = vpop.f32.mrb[0].mxu0
        %2215 = vmatprep.mubr.f32.mxu0 %v1530
        %2216 = vmatmul.mubr.f32.gmra.mrb[0].mxu0 %v1528
        %v2217 = vpop.f32.mrb[0].mxu0
        %v2218 = vadd.f32 0.0, %v2217
        %v2219 = vpop.f32.mrb[0].mxu0
        %2220 = vmatprep.mubr.f32.mxu0 %v1534
        %2221 = vmatmul.mubr.f32.gmra.mrb[0].mxu0 %v1532
        %v2222 = vpop.f32.mrb[0].mxu0
        %v2223 = vadd.f32 0.0, %v2222
        %v2224 = vpop.f32.mrb[0].mxu0
        %2225 = vmatprep.mubr.f32.mxu0 %v1538
        %2226 = vmatmul.mubr.f32.gmra.mrb[0].mxu0 %v1536
        %v2227 = vpop.f32.mrb[0].mxu0
        %v2228 = vadd.f32 0.0, %v2227
        %v2229 = vpop.f32.mrb[0].mxu0
        %2230 = vmatprep.mubr.f32.mxu0 %v1542
        %2231 = vmatmul.mubr.f32.gmra.mrb[0].mxu0 %v1540
        %v2232 = vpop.f32.mrb[0].mxu0
        %v2233 = vadd.f32 0.0, %v2232
        %v2234 = vpop.f32.mrb[0].mxu0
        %2235 = vmatprep.mubr.f32.mxu0 %v1546
        %2236 = vmatmul.mubr.f32.gmra.mrb[0].mxu0 %v1544
        %v2237 = vpop.f32.mrb[0].mxu0
        %v2238 = vadd.f32 0.0, %v2237
        %v2239 = vpop.f32.mrb[0].mxu0
        %2240 = vmatprep.mubr.f32.mxu0 %v1550
        %2241 = vmatmul.mubr.f32.gmra.mrb[0].mxu0 %v1548
        %v2242 = vpop.f32.mrb[0].mxu0
        %v2243 = vadd.f32 0.0, %v2242
        %v2244 = vpop.f32.mrb[0].mxu0
        %2245 = vmatprep.mubr.f32.mxu0 %v1554
        %2246 = vmatmul.mubr.f32.gmra.mrb[0].mxu0 %v1552
        %v2247 = vpop.f32.mrb[0].mxu0
        %v2248 = vadd.f32 0.0, %v2247
        %v2249 = vpop.f32.mrb[0].mxu0
        %2250 = vmatprep.mubr.f32.mxu0 %v1558
        %2251 = vmatmul.mubr.f32.gmra.mrb[0].mxu0 %v1556
        %v2252 = vpop.f32.mrb[0].mxu0
        %v2253 = vadd.f32 0.0, %v2252
        %v2254 = vpop.f32.mrb[0].mxu0
        %2255 = vmatprep.mubr.f32.mxu0 %v1562
        %2256 = vmatmul.mubr.f32.gmra.mrb[0].mxu0 %v1560
        %v2257 = vpop.f32.mrb[0].mxu0
        %v2258 = vadd.f32 0.0, %v2257
        %v2259 = vpop.f32.mrb[0].mxu0
        %2260 = vmatprep.mubr.f32.mxu0 %v1566
        %2261 = vmatmul.mubr.f32.gmra.mrb[0].mxu0 %v1564
        %v2262 = vpop.f32.mrb[0].mxu0
        %v2263 = vadd.f32 0.0, %v2262
        %v2264 = vpop.f32.mrb[0].mxu0
        %2265 = vmatprep.mubr.f32.mxu0 %v1570
        %2266 = vmatmul.mubr.f32.gmra.mrb[0].mxu0 %v1568
        %v2267 = vpop.f32.mrb[0].mxu0
        %v2268 = vadd.f32 0.0, %v2267
        %v2269 = vpop.f32.mrb[0].mxu0
        %2270 = vmatprep.mubr.f32.mxu0 %v1574
        %2271 = vmatmul.mubr.f32.gmra.mrb[0].mxu0 %v1572
        %v2272 = vpop.f32.mrb[0].mxu0
        %v2273 = vadd.f32 0.0, %v2272
        %v2274 = vpop.f32.mrb[0].mxu0
        %2275 = vmatprep.mubr.f32.mxu0 %v1578
        %2276 = vmatmul.mubr.f32.gmra.mrb[0].mxu0 %v1576
        %v2277 = vpop.f32.mrb[0].mxu0
        %v2278 = vadd.f32 0.0, %v2277
        %v2279 = vpop.f32.mrb[0].mxu0
        %2280 = vmatprep.mubr.f32.mxu0 %v1582
        %2281 = vmatmul.mubr.f32.gmra.mrb[0].mxu0 %v1580
        %v2282 = vpop.f32.mrb[0].mxu0
        %v2283 = vadd.f32 0.0, %v2282
        %v2284 = vpop.f32.mrb[0].mxu0
        %2285 = vmatprep.mubr.f32.mxu0 %v1586
        %2286 = vmatmul.mubr.f32.gmra.mrb[0].mxu0 %v1584
        %v2287 = vpop.f32.mrb[0].mxu0
        %v2288 = vadd.f32 0.0, %v2287
        %v2289 = vpop.f32.mrb[0].mxu0
        %2290 = vmatprep.mubr.f32.mxu0 %v1590
        %2291 = vmatmul.mubr.f32.gmra.mrb[0].mxu0 %v1588
        %v2292 = vpop.f32.mrb[0].mxu0
        %v2293 = vadd.f32 0.0, %v2292
        %v2294 = vpop.f32.mrb[0].mxu0
        %2295 = vmatprep.mubr.f32.mxu0 %v1594
        %2296 = vmatmul.mubr.f32.gmra.mrb[0].mxu0 %v1592
        %v2297 = vpop.f32.mrb[0].mxu0
        %v2298 = vadd.f32 0.0, %v2297
        %v2299 = vpop.f32.mrb[0].mxu0
        %2300 = vdwg.mxu0
        %v2301 = vadd.f32 %v2012, %v2143
        %v2302 = vadd.f32 %v2013, %v2148
        %v2303 = vadd.f32 %v2014, %v2153
        %v2304 = vadd.f32 %v2015, %v2158
        %v2305 = vadd.f32 %v2016, %v2163
        %v2306 = vadd.f32 %v2017, %v2168
        %v2307 = vadd.f32 %v2018, %v2173
        %v2308 = vadd.f32 %v2019, %v2178
        %v2309 = vadd.f32 %v2020, %v2183
        %v2310 = vadd.f32 %v2021, %v2188
        %v2311 = vadd.f32 %v2022, %v2193
        %v2312 = vadd.f32 %v2023, %v2198
        %v2313 = vadd.f32 %v2024, %v2203
        %v2314 = vadd.f32 %v2025, %v2208
        %v2315 = vadd.f32 %v2026, %v2213
        %v2316 = vadd.f32 %v2027, %v2218
        %v2317 = vadd.f32 %v2028, %v2223
        %v2318 = vadd.f32 %v2029, %v2228
        %v2319 = vadd.f32 %v2030, %v2233
        %v2320 = vadd.f32 %v2031, %v2238
        %v2321 = vadd.f32 %v2032, %v2243
        %v2322 = vadd.f32 %v2033, %v2248
        %v2323 = vadd.f32 %v2034, %v2253
        %v2324 = vadd.f32 %v2035, %v2258
        %v2325 = vadd.f32 %v2036, %v2263
        %v2326 = vadd.f32 %v2037, %v2268
        %v2327 = vadd.f32 %v2038, %v2273
        %v2328 = vadd.f32 %v2039, %v2278
        %v2329 = vadd.f32 %v2040, %v2283
        %v2330 = vadd.f32 %v2041, %v2288
        %v2331 = vadd.f32 %v2042, %v2293
        %v2332 = vadd.f32 %v2043, %v2298
        %vm2333 = vcmask 261120
        %2334 = vst.msk [vmem:[#allocation4] sm:$0xff] %vm2333, %v2301
        %2335 = vst.msk [vmem:[#allocation4 + $0x8] sm:$0xff] %vm2333, %v2302
        %2336 = vst.msk [vmem:[#allocation4 + $0x10] sm:$0xff] %vm2333, %v2303
        %2337 = vst.msk [vmem:[#allocation4 + $0x18] sm:$0xff] %vm2333, %v2304
        %2338 = vst.msk [vmem:[#allocation4 + $0x20] sm:$0xff] %vm2333, %v2305
        %2339 = vst.msk [vmem:[#allocation4 + $0x28] sm:$0xff] %vm2333, %v2306
        %2340 = vst.msk [vmem:[#allocation4 + $0x30] sm:$0xff] %vm2333, %v2307
        %2341 = vst.msk [vmem:[#allocation4 + $0x38] sm:$0xff] %vm2333, %v2308
        %2342 = vst.msk [vmem:[#allocation4 + $0x40] sm:$0xff] %vm2333, %v2309
        %2343 = vst.msk [vmem:[#allocation4 + $0x48] sm:$0xff] %vm2333, %v2310
        %2344 = vst.msk [vmem:[#allocation4 + $0x50] sm:$0xff] %vm2333, %v2311
        %2345 = vst.msk [vmem:[#allocation4 + $0x58] sm:$0xff] %vm2333, %v2312
        %2346 = vst.msk [vmem:[#allocation4 + $0x60] sm:$0xff] %vm2333, %v2313
        %2347 = vst.msk [vmem:[#allocation4 + $0x68] sm:$0xff] %vm2333, %v2314
        %2348 = vst.msk [vmem:[#allocation4 + $0x70] sm:$0xff] %vm2333, %v2315
        %2349 = vst.msk [vmem:[#allocation4 + $0x78] sm:$0xff] %vm2333, %v2316
        %2350 = vst.msk [vmem:[#allocation4 + $0x80] sm:$0xff] %vm2333, %v2317
        %2351 = vst.msk [vmem:[#allocation4 + $0x88] sm:$0xff] %vm2333, %v2318
        %2352 = vst.msk [vmem:[#allocation4 + $0x90] sm:$0xff] %vm2333, %v2319
        %2353 = vst.msk [vmem:[#allocation4 + $0x98] sm:$0xff] %vm2333, %v2320
        %2354 = vst.msk [vmem:[#allocation4 + $0xa0] sm:$0xff] %vm2333, %v2321
        %2355 = vst.msk [vmem:[#allocation4 + $0xa8] sm:$0xff] %vm2333, %v2322
        %2356 = vst.msk [vmem:[#allocation4 + $0xb0] sm:$0xff] %vm2333, %v2323
        %2357 = vst.msk [vmem:[#allocation4 + $0xb8] sm:$0xff] %vm2333, %v2324
        %2358 = vst.msk [vmem:[#allocation4 + $0xc0] sm:$0xff] %vm2333, %v2325
        %2359 = vst.msk [vmem:[#allocation4 + $0xc8] sm:$0xff] %vm2333, %v2326
        %2360 = vst.msk [vmem:[#allocation4 + $0xd0] sm:$0xff] %vm2333, %v2327
        %2361 = vst.msk [vmem:[#allocation4 + $0xd8] sm:$0xff] %vm2333, %v2328
        %2362 = vst.msk [vmem:[#allocation4 + $0xe0] sm:$0xff] %vm2333, %v2329
        %2363 = vst.msk [vmem:[#allocation4 + $0xe8] sm:$0xff] %vm2333, %v2330
        %2364 = vst.msk [vmem:[#allocation4 + $0xf0] sm:$0xff] %vm2333, %v2331
        %2365 = vst.msk [vmem:[#allocation4 + $0xf8] sm:$0xff] %vm2333, %v2332
        %2366 = vst.msk [vmem:[#allocation2] sm:$0xff] %vm1787, %v1115
        %2367 = vst.msk [vmem:[#allocation2 + $0x8] sm:$0xff] %vm1787, %v1116
        %2368 = vst.msk [vmem:[#allocation2 + $0x10] sm:$0xff] %vm1787, %v1117
        %2369 = vst.msk [vmem:[#allocation2 + $0x18] sm:$0xff] %vm1787, %v1118
        %2370 = vst.msk [vmem:[#allocation2 + $0x20] sm:$0xff] %vm1787, %v1119
        %2371 = vst.msk [vmem:[#allocation2 + $0x28] sm:$0xff] %vm1787, %v1120
        %2372 = vst.msk [vmem:[#allocation2 + $0x30] sm:$0xff] %vm1787, %v1121
        %2373 = vst.msk [vmem:[#allocation2 + $0x38] sm:$0xff] %vm1787, %v1122
        %2374 = vst.msk [vmem:[#allocation2 + $0x40] sm:$0xff] %vm1787, %v1123
        %2375 = vst.msk [vmem:[#allocation2 + $0x48] sm:$0xff] %vm1787, %v1124
        %2376 = vst.msk [vmem:[#allocation2 + $0x50] sm:$0xff] %vm1787, %v1125
        %2377 = vst.msk [vmem:[#allocation2 + $0x58] sm:$0xff] %vm1787, %v1126
        %2378 = vst.msk [vmem:[#allocation2 + $0x60] sm:$0xff] %vm1787, %v1127
        %2379 = vst.msk [vmem:[#allocation2 + $0x68] sm:$0xff] %vm1787, %v1128
        %2380 = vst.msk [vmem:[#allocation2 + $0x70] sm:$0xff] %vm1787, %v1129
        %2381 = vst.msk [vmem:[#allocation2 + $0x78] sm:$0xff] %vm1787, %v1130
        %2382 = vst.msk [vmem:[#allocation2 + $0x80] sm:$0xff] %vm1787, %v1131
        %2383 = vst.msk [vmem:[#allocation2 + $0x88] sm:$0xff] %vm1787, %v1132
        %2384 = vst.msk [vmem:[#allocation2 + $0x90] sm:$0xff] %vm1787, %v1133
        %2385 = vst.msk [vmem:[#allocation2 + $0x98] sm:$0xff] %vm1787, %v1134
        %2386 = vst.msk [vmem:[#allocation2 + $0xa0] sm:$0xff] %vm1787, %v1135
        %2387 = vst.msk [vmem:[#allocation2 + $0xa8] sm:$0xff] %vm1787, %v1136
        %2388 = vst.msk [vmem:[#allocation2 + $0xb0] sm:$0xff] %vm1787, %v1137
        %2389 = vst.msk [vmem:[#allocation2 + $0xb8] sm:$0xff] %vm1787, %v1138
        %2390 = vst.msk [vmem:[#allocation2 + $0xc0] sm:$0xff] %vm1787, %v1139
        %2391 = vst.msk [vmem:[#allocation2 + $0xc8] sm:$0xff] %vm1787, %v1140
        %2392 = vst.msk [vmem:[#allocation2 + $0xd0] sm:$0xff] %vm1787, %v1141
        %2393 = vst.msk [vmem:[#allocation2 + $0xd8] sm:$0xff] %vm1787, %v1142
        %2394 = vst.msk [vmem:[#allocation2 + $0xe0] sm:$0xff] %vm1787, %v1143
        %2395 = vst.msk [vmem:[#allocation2 + $0xe8] sm:$0xff] %vm1787, %v1144
        %2396 = vst.msk [vmem:[#allocation2 + $0xf0] sm:$0xff] %vm1787, %v1145
        %2397 = vst.msk [vmem:[#allocation2 + $0xf8] sm:$0xff] %vm1787, %v1146
        // Predicated region
        $region45: #{sba_block_forward.3} parent=39 // pred_check
          %p2398 = pneg %p371
        $region46: #{sba_block_forward.3} parent=39 // pred_check_branch
          %2400 = sbr.rel (%p2398) target = $region48
        $region47: #{sba_block_forward.3} parent=39 // pred_region
          %v2401 = vld [vmem:[#allocation4] sm:$0xff]
          %v2402 = vld [vmem:[#allocation4 + $0x8] sm:$0xff]
          %v2403 = vld [vmem:[#allocation4 + $0x10] sm:$0xff]
          %v2404 = vld [vmem:[#allocation4 + $0x18] sm:$0xff]
          %v2405 = vld [vmem:[#allocation4 + $0x20] sm:$0xff]
          %v2406 = vld [vmem:[#allocation4 + $0x28] sm:$0xff]
          %v2407 = vld [vmem:[#allocation4 + $0x30] sm:$0xff]
          %v2408 = vld [vmem:[#allocation4 + $0x38] sm:$0xff]
          %v2409 = vld [vmem:[#allocation4 + $0x40] sm:$0xff]
          %v2410 = vld [vmem:[#allocation4 + $0x48] sm:$0xff]
          %v2411 = vld [vmem:[#allocation4 + $0x50] sm:$0xff]
          %v2412 = vld [vmem:[#allocation4 + $0x58] sm:$0xff]
          %v2413 = vld [vmem:[#allocation4 + $0x60] sm:$0xff]
          %v2414 = vld [vmem:[#allocation4 + $0x68] sm:$0xff]
          %v2415 = vld [vmem:[#allocation4 + $0x70] sm:$0xff]
          %v2416 = vld [vmem:[#allocation4 + $0x78] sm:$0xff]
          %v2417 = vld [vmem:[#allocation4 + $0x80] sm:$0xff]
          %v2418 = vld [vmem:[#allocation4 + $0x88] sm:$0xff]
          %v2419 = vld [vmem:[#allocation4 + $0x90] sm:$0xff]
          %v2420 = vld [vmem:[#allocation4 + $0x98] sm:$0xff]
          %v2421 = vld [vmem:[#allocation4 + $0xa0] sm:$0xff]
          %v2422 = vld [vmem:[#allocation4 + $0xa8] sm:$0xff]
          %v2423 = vld [vmem:[#allocation4 + $0xb0] sm:$0xff]
          %v2424 = vld [vmem:[#allocation4 + $0xb8] sm:$0xff]
          %v2425 = vld [vmem:[#allocation4 + $0xc0] sm:$0xff]
          %v2426 = vld [vmem:[#allocation4 + $0xc8] sm:$0xff]
          %v2427 = vld [vmem:[#allocation4 + $0xd0] sm:$0xff]
          %v2428 = vld [vmem:[#allocation4 + $0xd8] sm:$0xff]
          %v2429 = vld [vmem:[#allocation4 + $0xe0] sm:$0xff]
          %v2430 = vld [vmem:[#allocation4 + $0xe8] sm:$0xff]
          %v2431 = vld [vmem:[#allocation4 + $0xf0] sm:$0xff]
          %v2432 = vld [vmem:[#allocation4 + $0xf8] sm:$0xff]
          %v2433 = vld [vmem:[#allocation3] sm:$0xff]
          %v2434 = vld [vmem:[#allocation3 + $0x8] sm:$0xff]
          %v2435 = vld [vmem:[#allocation3 + $0x10] sm:$0xff]
          %v2436 = vld [vmem:[#allocation3 + $0x18] sm:$0xff]
          %v2437 = vld [vmem:[#allocation3 + $0x20] sm:$0xff]
          %v2438 = vld [vmem:[#allocation3 + $0x28] sm:$0xff]
          %v2439 = vld [vmem:[#allocation3 + $0x30] sm:$0xff]
          %v2440 = vld [vmem:[#allocation3 + $0x38] sm:$0xff]
          %v2441 = vld [vmem:[#allocation3 + $0x40] sm:$0xff]
          %v2442 = vld [vmem:[#allocation3 + $0x48] sm:$0xff]
          %v2443 = vld [vmem:[#allocation3 + $0x50] sm:$0xff]
          %v2444 = vld [vmem:[#allocation3 + $0x58] sm:$0xff]
          %v2445 = vld [vmem:[#allocation3 + $0x60] sm:$0xff]
          %v2446 = vld [vmem:[#allocation3 + $0x68] sm:$0xff]
          %v2447 = vld [vmem:[#allocation3 + $0x70] sm:$0xff]
          %v2448 = vld [vmem:[#allocation3 + $0x78] sm:$0xff]
          %v2449 = vld [vmem:[#allocation3 + $0x80] sm:$0xff]
          %v2450 = vld [vmem:[#allocation3 + $0x88] sm:$0xff]
          %v2451 = vld [vmem:[#allocation3 + $0x90] sm:$0xff]
          %v2452 = vld [vmem:[#allocation3 + $0x98] sm:$0xff]
          %v2453 = vld [vmem:[#allocation3 + $0xa0] sm:$0xff]
          %v2454 = vld [vmem:[#allocation3 + $0xa8] sm:$0xff]
          %v2455 = vld [vmem:[#allocation3 + $0xb0] sm:$0xff]
          %v2456 = vld [vmem:[#allocation3 + $0xb8] sm:$0xff]
          %v2457 = vld [vmem:[#allocation3 + $0xc0] sm:$0xff]
          %v2458 = vld [vmem:[#allocation3 + $0xc8] sm:$0xff]
          %v2459 = vld [vmem:[#allocation3 + $0xd0] sm:$0xff]
          %v2460 = vld [vmem:[#allocation3 + $0xd8] sm:$0xff]
          %v2461 = vld [vmem:[#allocation3 + $0xe0] sm:$0xff]
          %v2462 = vld [vmem:[#allocation3 + $0xe8] sm:$0xff]
          %v2463 = vld [vmem:[#allocation3 + $0xf0] sm:$0xff]
          %v2464 = vld [vmem:[#allocation3 + $0xf8] sm:$0xff]
          %2466 = vset.pattern.permute.xlu0 0
          %2467 = vperm.xlu0 %2466, %v2433
          %v2468 = vpop.permute.xlu0 %2467
          %2471 = vset.pattern.permute.xlu0 0
          %2472 = vperm.xlu0 %2471, %v2434
          %v2473 = vpop.permute.xlu0 %2472
          %2476 = vset.pattern.permute.xlu0 0
          %2477 = vperm.xlu0 %2476, %v2435
          %v2478 = vpop.permute.xlu0 %2477
          %2481 = vset.pattern.permute.xlu0 0
          %2482 = vperm.xlu0 %2481, %v2436
          %v2483 = vpop.permute.xlu0 %2482
          %2486 = vset.pattern.permute.xlu0 0
          %2487 = vperm.xlu0 %2486, %v2437
          %v2488 = vpop.permute.xlu0 %2487
          %2491 = vset.pattern.permute.xlu0 0
          %2492 = vperm.xlu0 %2491, %v2438
          %v2493 = vpop.permute.xlu0 %2492
          %2496 = vset.pattern.permute.xlu0 0
          %2497 = vperm.xlu0 %2496, %v2439
          %v2498 = vpop.permute.xlu0 %2497
          %2501 = vset.pattern.permute.xlu0 0
          %2502 = vperm.xlu0 %2501, %v2440
          %v2503 = vpop.permute.xlu0 %2502
          %2506 = vset.pattern.permute.xlu0 0
          %2507 = vperm.xlu0 %2506, %v2441
          %v2508 = vpop.permute.xlu0 %2507
          %2511 = vset.pattern.permute.xlu0 0
          %2512 = vperm.xlu0 %2511, %v2442
          %v2513 = vpop.permute.xlu0 %2512
          %2516 = vset.pattern.permute.xlu0 0
          %2517 = vperm.xlu0 %2516, %v2443
          %v2518 = vpop.permute.xlu0 %2517
          %2521 = vset.pattern.permute.xlu0 0
          %2522 = vperm.xlu0 %2521, %v2444
          %v2523 = vpop.permute.xlu0 %2522
          %2526 = vset.pattern.permute.xlu0 0
          %2527 = vperm.xlu0 %2526, %v2445
          %v2528 = vpop.permute.xlu0 %2527
          %2531 = vset.pattern.permute.xlu0 0
          %2532 = vperm.xlu0 %2531, %v2446
          %v2533 = vpop.permute.xlu0 %2532
          %2536 = vset.pattern.permute.xlu0 0
          %2537 = vperm.xlu0 %2536, %v2447
          %v2538 = vpop.permute.xlu0 %2537
          %2541 = vset.pattern.permute.xlu0 0
          %2542 = vperm.xlu0 %2541, %v2448
          %v2543 = vpop.permute.xlu0 %2542
          %2546 = vset.pattern.permute.xlu0 0
          %2547 = vperm.xlu0 %2546, %v2449
          %v2548 = vpop.permute.xlu0 %2547
          %2551 = vset.pattern.permute.xlu0 0
          %2552 = vperm.xlu0 %2551, %v2450
          %v2553 = vpop.permute.xlu0 %2552
          %2556 = vset.pattern.permute.xlu0 0
          %2557 = vperm.xlu0 %2556, %v2451
          %v2558 = vpop.permute.xlu0 %2557
          %2561 = vset.pattern.permute.xlu0 0
          %2562 = vperm.xlu0 %2561, %v2452
          %v2563 = vpop.permute.xlu0 %2562
          %2566 = vset.pattern.permute.xlu0 0
          %2567 = vperm.xlu0 %2566, %v2453
          %v2568 = vpop.permute.xlu0 %2567
          %2571 = vset.pattern.permute.xlu0 0
          %2572 = vperm.xlu0 %2571, %v2454
          %v2573 = vpop.permute.xlu0 %2572
          %2576 = vset.pattern.permute.xlu0 0
          %2577 = vperm.xlu0 %2576, %v2455
          %v2578 = vpop.permute.xlu0 %2577
          %2581 = vset.pattern.permute.xlu0 0
          %2582 = vperm.xlu0 %2581, %v2456
          %v2583 = vpop.permute.xlu0 %2582
          %2586 = vset.pattern.permute.xlu0 0
          %2587 = vperm.xlu0 %2586, %v2457
          %v2588 = vpop.permute.xlu0 %2587
          %2591 = vset.pattern.permute.xlu0 0
          %2592 = vperm.xlu0 %2591, %v2458
          %v2593 = vpop.permute.xlu0 %2592
          %2596 = vset.pattern.permute.xlu0 0
          %2597 = vperm.xlu0 %2596, %v2459
          %v2598 = vpop.permute.xlu0 %2597
          %2601 = vset.pattern.permute.xlu0 0
          %2602 = vperm.xlu0 %2601, %v2460
          %v2603 = vpop.permute.xlu0 %2602
          %2606 = vset.pattern.permute.xlu0 0
          %2607 = vperm.xlu0 %2606, %v2461
          %v2608 = vpop.permute.xlu0 %2607
          %2611 = vset.pattern.permute.xlu0 0
          %2612 = vperm.xlu0 %2611, %v2462
          %v2613 = vpop.permute.xlu0 %2612
          %2616 = vset.pattern.permute.xlu0 0
          %2617 = vperm.xlu0 %2616, %v2463
          %v2618 = vpop.permute.xlu0 %2617
          %2621 = vset.pattern.permute.xlu0 0
          %2622 = vperm.xlu0 %2621, %v2464
          %v2623 = vpop.permute.xlu0 %2622
          %v2625 = vrcp.pop %v2468
          %v2626 = vmul.f32 %v2401, %v2625
          %v2627 = vrcp.pop %v2473
          %v2628 = vmul.f32 %v2402, %v2627
          %v2629 = vrcp.pop %v2478
          %v2630 = vmul.f32 %v2403, %v2629
          %v2631 = vrcp.pop %v2483
          %v2632 = vmul.f32 %v2404, %v2631
          %v2633 = vrcp.pop %v2488
          %v2634 = vmul.f32 %v2405, %v2633
          %v2635 = vrcp.pop %v2493
          %v2636 = vmul.f32 %v2406, %v2635
          %v2637 = vrcp.pop %v2498
          %v2638 = vmul.f32 %v2407, %v2637
          %v2639 = vrcp.pop %v2503
          %v2640 = vmul.f32 %v2408, %v2639
          %v2641 = vrcp.pop %v2508
          %v2642 = vmul.f32 %v2409, %v2641
          %v2643 = vrcp.pop %v2513
          %v2644 = vmul.f32 %v2410, %v2643
          %v2645 = vrcp.pop %v2518
          %v2646 = vmul.f32 %v2411, %v2645
          %v2647 = vrcp.pop %v2523
          %v2648 = vmul.f32 %v2412, %v2647
          %v2649 = vrcp.pop %v2528
          %v2650 = vmul.f32 %v2413, %v2649
          %v2651 = vrcp.pop %v2533
          %v2652 = vmul.f32 %v2414, %v2651
          %v2653 = vrcp.pop %v2538
          %v2654 = vmul.f32 %v2415, %v2653
          %v2655 = vrcp.pop %v2543
          %v2656 = vmul.f32 %v2416, %v2655
          %v2657 = vrcp.pop %v2548
          %v2658 = vmul.f32 %v2417, %v2657
          %v2659 = vrcp.pop %v2553
          %v2660 = vmul.f32 %v2418, %v2659
          %v2661 = vrcp.pop %v2558
          %v2662 = vmul.f32 %v2419, %v2661
          %v2663 = vrcp.pop %v2563
          %v2664 = vmul.f32 %v2420, %v2663
          %v2665 = vrcp.pop %v2568
          %v2666 = vmul.f32 %v2421, %v2665
          %v2667 = vrcp.pop %v2573
          %v2668 = vmul.f32 %v2422, %v2667
          %v2669 = vrcp.pop %v2578
          %v2670 = vmul.f32 %v2423, %v2669
          %v2671 = vrcp.pop %v2583
          %v2672 = vmul.f32 %v2424, %v2671
          %v2673 = vrcp.pop %v2588
          %v2674 = vmul.f32 %v2425, %v2673
          %v2675 = vrcp.pop %v2593
          %v2676 = vmul.f32 %v2426, %v2675
          %v2677 = vrcp.pop %v2598
          %v2678 = vmul.f32 %v2427, %v2677
          %v2679 = vrcp.pop %v2603
          %v2680 = vmul.f32 %v2428, %v2679
          %v2681 = vrcp.pop %v2608
          %v2682 = vmul.f32 %v2429, %v2681
          %v2683 = vrcp.pop %v2613
          %v2684 = vmul.f32 %v2430, %v2683
          %v2685 = vrcp.pop %v2618
          %v2686 = vmul.f32 %v2431, %v2685
          %v2687 = vrcp.pop %v2623
          %v2688 = vmul.f32 %v2432, %v2687
          %v2689 = vld [vmem:[#allocation5] sm:$0x1]
          %v2691 = vlaneseq
          %v2692 = vshrl.u32 %v2691, 7
          %v2693 = vsub.s32 0, %v2692
          %v2694 = vrot.slane %v2689, %v2693
          %2695 = vset.pattern.permute.xlu0 0
          %2696 = vperm.xlu0 %2695, %v2694
          %v2697 = vpop.permute.xlu0 %2696
          %v2699 = vmul.f32 %v2697, %v2626
          %v2700 = vmul.f32 %v2697, %v2628
          %v2701 = vmul.f32 %v2697, %v2630
          %v2702 = vmul.f32 %v2697, %v2632
          %v2703 = vmul.f32 %v2697, %v2634
          %v2704 = vmul.f32 %v2697, %v2636
          %v2705 = vmul.f32 %v2697, %v2638
          %v2706 = vmul.f32 %v2697, %v2640
          %v2707 = vmul.f32 %v2697, %v2642
          %v2708 = vmul.f32 %v2697, %v2644
          %v2709 = vmul.f32 %v2697, %v2646
          %v2710 = vmul.f32 %v2697, %v2648
          %v2711 = vmul.f32 %v2697, %v2650
          %v2712 = vmul.f32 %v2697, %v2652
          %v2713 = vmul.f32 %v2697, %v2654
          %v2714 = vmul.f32 %v2697, %v2656
          %v2715 = vmul.f32 %v2697, %v2658
          %v2716 = vmul.f32 %v2697, %v2660
          %v2717 = vmul.f32 %v2697, %v2662
          %v2718 = vmul.f32 %v2697, %v2664
          %v2719 = vmul.f32 %v2697, %v2666
          %v2720 = vmul.f32 %v2697, %v2668
          %v2721 = vmul.f32 %v2697, %v2670
          %v2722 = vmul.f32 %v2697, %v2672
          %v2723 = vmul.f32 %v2697, %v2674
          %v2724 = vmul.f32 %v2697, %v2676
          %v2725 = vmul.f32 %v2697, %v2678
          %v2726 = vmul.f32 %v2697, %v2680
          %v2727 = vmul.f32 %v2697, %v2682
          %v2728 = vmul.f32 %v2697, %v2684
          %v2729 = vmul.f32 %v2697, %v2686
          %v2730 = vmul.f32 %v2697, %v2688
          %v2731 = vld [vmem:[%s368] sm:$0xff]
          %v2732 = vld [vmem:[%s368 + $0x8] sm:$0xff]
          %v2733 = vld [vmem:[%s368 + $0x10] sm:$0xff]
          %v2734 = vld [vmem:[%s368 + $0x18] sm:$0xff]
          %v2735 = vld [vmem:[%s368 + $0x20] sm:$0xff]
          %v2736 = vld [vmem:[%s368 + $0x28] sm:$0xff]
          %v2737 = vld [vmem:[%s368 + $0x30] sm:$0xff]
          %v2738 = vld [vmem:[%s368 + $0x38] sm:$0xff]
          %v2739 = vld [vmem:[%s368 + $0x40] sm:$0xff]
          %v2740 = vld [vmem:[%s368 + $0x48] sm:$0xff]
          %v2741 = vld [vmem:[%s368 + $0x50] sm:$0xff]
          %v2742 = vld [vmem:[%s368 + $0x58] sm:$0xff]
          %v2743 = vld [vmem:[%s368 + $0x60] sm:$0xff]
          %v2744 = vld [vmem:[%s368 + $0x68] sm:$0xff]
          %v2745 = vld [vmem:[%s368 + $0x70] sm:$0xff]
          %v2746 = vld [vmem:[%s368 + $0x78] sm:$0xff]
          %v2747 = vld [vmem:[%s368 + $0x80] sm:$0xff]
          %v2748 = vld [vmem:[%s368 + $0x88] sm:$0xff]
          %v2749 = vld [vmem:[%s368 + $0x90] sm:$0xff]
          %v2750 = vld [vmem:[%s368 + $0x98] sm:$0xff]
          %v2751 = vld [vmem:[%s368 + $0xa0] sm:$0xff]
          %v2752 = vld [vmem:[%s368 + $0xa8] sm:$0xff]
          %v2753 = vld [vmem:[%s368 + $0xb0] sm:$0xff]
          %v2754 = vld [vmem:[%s368 + $0xb8] sm:$0xff]
          %v2755 = vld [vmem:[%s368 + $0xc0] sm:$0xff]
          %v2756 = vld [vmem:[%s368 + $0xc8] sm:$0xff]
          %v2757 = vld [vmem:[%s368 + $0xd0] sm:$0xff]
          %v2758 = vld [vmem:[%s368 + $0xd8] sm:$0xff]
          %v2759 = vld [vmem:[%s368 + $0xe0] sm:$0xff]
          %v2760 = vld [vmem:[%s368 + $0xe8] sm:$0xff]
          %v2761 = vld [vmem:[%s368 + $0xf0] sm:$0xff]
          %v2762 = vld [vmem:[%s368 + $0xf8] sm:$0xff]
          %v2763 = vadd.f32 %v2699, %v2731
          %v2764 = vadd.f32 %v2700, %v2732
          %v2765 = vadd.f32 %v2701, %v2733
          %v2766 = vadd.f32 %v2702, %v2734
          %v2767 = vadd.f32 %v2703, %v2735
          %v2768 = vadd.f32 %v2704, %v2736
          %v2769 = vadd.f32 %v2705, %v2737
          %v2770 = vadd.f32 %v2706, %v2738
          %v2771 = vadd.f32 %v2707, %v2739
          %v2772 = vadd.f32 %v2708, %v2740
          %v2773 = vadd.f32 %v2709, %v2741
          %v2774 = vadd.f32 %v2710, %v2742
          %v2775 = vadd.f32 %v2711, %v2743
          %v2776 = vadd.f32 %v2712, %v2744
          %v2777 = vadd.f32 %v2713, %v2745
          %v2778 = vadd.f32 %v2714, %v2746
          %v2779 = vadd.f32 %v2715, %v2747
          %v2780 = vadd.f32 %v2716, %v2748
          %v2781 = vadd.f32 %v2717, %v2749
          %v2782 = vadd.f32 %v2718, %v2750
          %v2783 = vadd.f32 %v2719, %v2751
          %v2784 = vadd.f32 %v2720, %v2752
          %v2785 = vadd.f32 %v2721, %v2753
          %v2786 = vadd.f32 %v2722, %v2754
          %v2787 = vadd.f32 %v2723, %v2755
          %v2788 = vadd.f32 %v2724, %v2756
          %v2789 = vadd.f32 %v2725, %v2757
          %v2790 = vadd.f32 %v2726, %v2758
          %v2791 = vadd.f32 %v2727, %v2759
          %v2792 = vadd.f32 %v2728, %v2760
          %v2793 = vadd.f32 %v2729, %v2761
          %v2794 = vadd.f32 %v2730, %v2762
          %2795 = vst.msk [vmem:[%s329] sm:$0xff] %vm2333, %v2763
          %2796 = vst.msk [vmem:[%s329 + $0x8] sm:$0xff] %vm2333, %v2764
          %2797 = vst.msk [vmem:[%s329 + $0x10] sm:$0xff] %vm2333, %v2765
          %2798 = vst.msk [vmem:[%s329 + $0x18] sm:$0xff] %vm2333, %v2766
          %2799 = vst.msk [vmem:[%s329 + $0x20] sm:$0xff] %vm2333, %v2767
          %2800 = vst.msk [vmem:[%s329 + $0x28] sm:$0xff] %vm2333, %v2768
          %2801 = vst.msk [vmem:[%s329 + $0x30] sm:$0xff] %vm2333, %v2769
          %2802 = vst.msk [vmem:[%s329 + $0x38] sm:$0xff] %vm2333, %v2770
          %2803 = vst.msk [vmem:[%s329 + $0x40] sm:$0xff] %vm2333, %v2771
          %2804 = vst.msk [vmem:[%s329 + $0x48] sm:$0xff] %vm2333, %v2772
          %2805 = vst.msk [vmem:[%s329 + $0x50] sm:$0xff] %vm2333, %v2773
          %2806 = vst.msk [vmem:[%s329 + $0x58] sm:$0xff] %vm2333, %v2774
          %2807 = vst.msk [vmem:[%s329 + $0x60] sm:$0xff] %vm2333, %v2775
          %2808 = vst.msk [vmem:[%s329 + $0x68] sm:$0xff] %vm2333, %v2776
          %2809 = vst.msk [vmem:[%s329 + $0x70] sm:$0xff] %vm2333, %v2777
          %2810 = vst.msk [vmem:[%s329 + $0x78] sm:$0xff] %vm2333, %v2778
          %2811 = vst.msk [vmem:[%s329 + $0x80] sm:$0xff] %vm2333, %v2779
          %2812 = vst.msk [vmem:[%s329 + $0x88] sm:$0xff] %vm2333, %v2780
          %2813 = vst.msk [vmem:[%s329 + $0x90] sm:$0xff] %vm2333, %v2781
          %2814 = vst.msk [vmem:[%s329 + $0x98] sm:$0xff] %vm2333, %v2782
          %2815 = vst.msk [vmem:[%s329 + $0xa0] sm:$0xff] %vm2333, %v2783
          %2816 = vst.msk [vmem:[%s329 + $0xa8] sm:$0xff] %vm2333, %v2784
          %2817 = vst.msk [vmem:[%s329 + $0xb0] sm:$0xff] %vm2333, %v2785
          %2818 = vst.msk [vmem:[%s329 + $0xb8] sm:$0xff] %vm2333, %v2786
          %2819 = vst.msk [vmem:[%s329 + $0xc0] sm:$0xff] %vm2333, %v2787
          %2820 = vst.msk [vmem:[%s329 + $0xc8] sm:$0xff] %vm2333, %v2788
          %2821 = vst.msk [vmem:[%s329 + $0xd0] sm:$0xff] %vm2333, %v2789
          %2822 = vst.msk [vmem:[%s329 + $0xd8] sm:$0xff] %vm2333, %v2790
          %2823 = vst.msk [vmem:[%s329 + $0xe0] sm:$0xff] %vm2333, %v2791
          %2824 = vst.msk [vmem:[%s329 + $0xe8] sm:$0xff] %vm2333, %v2792
          %2825 = vst.msk [vmem:[%s329 + $0xf0] sm:$0xff] %vm2333, %v2793
          %2826 = vst.msk [vmem:[%s329 + $0xf8] sm:$0xff] %vm2333, %v2794
        $region48: #{sba_block_forward.3} parent=39 // pred_fallthru
          _
        %s2827 = sand.u32 %s183, 1
        %s2828 = scalar_lea.sflag [#allocation7], %s2827
        %s2829 = sand.u32 %s183, 1
        %s2830 = smul.addr %s2829, 256
        %s2831 = scalar_lea.vmem [#allocation6], %s2830
        // Predicated region
        $region49: #{sba_block_forward.3} parent=39 // pred_check
          %p2832 = pneg %p193
        $region50: #{sba_block_forward.3} parent=39 // pred_check_branch
          %2834 = sbr.rel (%p2832) target = $region52
        $region51: #{sba_block_forward.3} parent=39 // pred_region
          %s2835 = smul.u32 32, %s27
          %s2837 = ssub.s32 4096, 4096
          %2838 = vsyncadd %s2828, %s2837
          %s2839 = smul.addr %s26, 32
          %s2840 = sadd.s32 %s2835, %s2839
          %s2841 = smul.addr %s2840, 128
          %s2842 = scalar_lea.hbm %s5, %s2841
          %s2843 = sshll.u32 %s2831, 4
          %s2844 = int_to_ptr.vmem [resolvable:$true] %s2843
          %2849 = dma.vmem_to_hbm [thread:$0]  %s2844, 4096, %s2842, %s2828, 128, 128, 8
        $region52: #{sba_block_forward.3} parent=39 // pred_fallthru
          _
      $region40: #{sba_block_forward.3} parent=5 // pred_fallthru
        _
      %p2850 = scmp.le.s32.totalorder 2, %s16
      // Predicated region
      $region53: #{sba_block_forward.3} parent=5 // pred_check
        %p2851 = pneg %p2850
      $region54: #{sba_block_forward.3} parent=5 // pred_check_branch
        %2853 = sbr.rel (%p2851) target = $region56
      $region55: #{sba_block_forward.3} parent=5 // pred_region
        %s2854 = ssub.s32 %s16, 2
        // Predicated region
        $region57: #{sba_block_forward.3} parent=55 // pred_check
          %p2855 = pneg %p199
        $region58: #{sba_block_forward.3} parent=55 // pred_check_branch
          %2857 = sbr.rel (%p2855) target = $region60
        $region59: #{sba_block_forward.3} parent=55 // pred_region
          %s2858 = sand.u32 %s184, 1
          %s2859 = scalar_lea.sflag [#allocation7], %s2858
          %s2860 = sand.u32 %s184, 1
          %s2861 = smul.addr %s2860, 256
          %s2862 = scalar_lea.vmem [#allocation6], %s2861
          %2863 = dma.done %s2859, 4096
        $region60: #{sba_block_forward.3} parent=55 // pred_fallthru
          _
      $region56: #{sba_block_forward.3} parent=5 // pred_fallthru
        _
    $region6: #{sba_block_forward.3} parent=1 // loop_footer
      %s20 = sadd.s32 1, %s16
    $region7: #{sba_block_forward.3} parent=1 // loop_footer_branch
      %15 = sbr.rel target = $region3
    $region8: #{sba_block_forward.3} parent=1 // loop_exit
      _
    %2864 = vsyncpa [#allocation7], 1
    %s2865 = scalar_lea.sflag [#allocation7], 1
    %2866 = vsyncpa %s2865, 1

</llo_original>
